<compile_context>
chip_gen: v5e
topology: v5e:2x2
jax: 0.10.0
libtpu: 0.0.40
codegen_flags: <defaults>
</compile_context>

<pallas_src>
import math

import jax
import jax.numpy as jnp
from jax import lax
from jax.experimental import pallas as pl
from jax.experimental.pallas import tpu as pltpu

# --- small demo hyper-parameters (same structure as the PyTorch module,
#     scaled down: d_model 512 -> 128, heads 8 -> 4, blocks 12 -> 2) --------
D_MODEL = 128
NUM_HEADS = 4
HEAD = D_MODEL // NUM_HEADS
NUM_BLOCKS = 2
CONTEXT = 32
VOCAB = 64
VOCAB_PAD = 128            # lane-dense logits; padding sliced off in wrapper
EPS = 1e-5                 # nn.LayerNorm default
NEG = -1e9                 # additive mask constant
APPROX_RECIP = True        # approx softmax denom on the EUP (~1e-3 rel); set
                           # False for exact 1/x if bit-closer parity is needed


# ---------------------------------------------------------------------------
# Fused kernel
# ---------------------------------------------------------------------------
def _layer_norm(x, g, b):
    mu = jnp.mean(x, axis=-1, keepdims=True)
    var = jnp.mean((x - mu) ** 2, axis=-1, keepdims=True)
    return (x - mu) * lax.rsqrt(var + EPS) * g + b


def _fused_forward_kernel(x_ref, pe_ref, mask_ref,
                          ln1g_ref, ln1b_ref, wqkv_ref, wp_ref, bp_ref,
                          ln2g_ref, ln2b_ref, w1_ref, b1_ref, w2_ref, b2_ref,
                          wout_ref, bout_ref, o_ref):
    """Whole forward pass with activations resident in VMEM."""
    B, T, D = x_ref.shape
    BT = B * T
    H = NUM_HEADS

    # token embedding + sinusoidal PE (dropout = identity in eval mode)
    x = (x_ref[...] + pe_ref[...]).reshape(BT, D)          # (BT, D) f32
    mask = mask_ref[...]                                   # (H*BT, H*BT) additive

    # NUM_BLOCKS=2: static unroll is fine at this scale (see TODO for 12 blocks)
    for blk in range(NUM_BLOCKS):
        # ---- multi-head causal self-attention ---------------------------
        h = _layer_norm(x, ln1g_ref[blk], ln1b_ref[blk])
        # fused QKV: one (BT, D) @ (D, 3D) matmul (scale folded into wq cols)
        qkv = jnp.dot(h.astype(jnp.bfloat16), wqkv_ref[blk],
                      preferred_element_type=jnp.float32).astype(jnp.bfloat16)

        # pack to (H*BT, HEAD): row index = h*B*T + b*T + t (matches mask)
        q_p = jnp.concatenate(
            [qkv[:, hh * HEAD:(hh + 1) * HEAD] for hh in range(H)], axis=0)
        k_p = jnp.concatenate(
            [qkv[:, D + hh * HEAD:D + (hh + 1) * HEAD] for hh in range(H)], axis=0)
        v_p = jnp.concatenate(
            [qkv[:, 2 * D + hh * HEAD:2 * D + (hh + 1) * HEAD] for hh in range(H)],
            axis=0)

        # one lane-dense (H*BT, H*BT) score matmul + block-diag causal mask
        s = jnp.einsum("md,nd->mn", q_p, k_p,
                       preferred_element_type=jnp.float32) + mask
        s = s - jnp.max(s, axis=-1, keepdims=True)
        e = jnp.exp(s)
        denom = jnp.sum(e, axis=-1, keepdims=True)
        if APPROX_RECIP:
            p = e * pl.reciprocal(denom, approx=True)
        else:
            p = e / denom

        # one (H*BT, H*BT) @ (H*BT, HEAD) PV matmul
        out_p = jnp.dot(p.astype(jnp.bfloat16), v_p,
                        preferred_element_type=jnp.float32)

        # unpack heads back to (BT, D) and do ONE K=128 output projection
        attn_in = jnp.concatenate(
            [out_p[hh * BT:(hh + 1) * BT, :] for hh in range(H)], axis=1)
        proj = jnp.dot(attn_in.astype(jnp.bfloat16), wp_ref[blk],
                       preferred_element_type=jnp.float32) + bp_ref[blk]
        x = x + proj

        # ---- feed-forward -----------------------------------------------
        h2 = _layer_norm(x, ln2g_ref[blk], ln2b_ref[blk])
        f = jnp.dot(h2.astype(jnp.bfloat16), w1_ref[blk],
                    preferred_element_type=jnp.float32) + b1_ref[blk]
        f = jnp.maximum(f, 0.0)
        f = jnp.dot(f.astype(jnp.bfloat16), w2_ref[blk],
                    preferred_element_type=jnp.float32) + b2_ref[blk]
        x = x + f

    # ---- vocab projection (lane-dense: VOCAB padded to 128) --------------
    logits = jnp.dot(x.astype(jnp.bfloat16), wout_ref[...],
                     preferred_element_type=jnp.float32) + bout_ref[...]
    o_ref[...] = logits.reshape(B, T, VOCAB_PAD)


# ---------------------------------------------------------------------------
# Wrapper
# ---------------------------------------------------------------------------
def _packed_mask(B, T):
    """Additive mask for the (head, batch, time)-packed score matrix."""
    r = jnp.arange(NUM_HEADS * B * T, dtype=jnp.int32)
    h_id = r // (B * T)
    b_id = (r // T) % B
    t_id = r % T
    same = ((h_id[:, None] == h_id[None, :]) &
            (b_id[:, None] == b_id[None, :]) &
            (t_id[None, :] <= t_id[:, None]))
    return jnp.where(same, 0.0, NEG).astype(jnp.float32)


def fused_forward(params, x_emb):
    B, T, D = x_emb.shape
    BT = B * T
    HBT = NUM_HEADS * BT

    mask = _packed_mask(B, T)
    pe = params["pos_enc"][:, :T, :]

    args = (x_emb, pe, mask,
            params["ln1_g"], params["ln1_b"],
            params["wqkv"], params["wp"], params["bp"],
            params["ln2_g"], params["ln2_b"],
            params["w1"], params["b1"], params["w2"], params["b2"],
            params["w_out"], params["b_out"])

    flops_block = (2 * BT * D * 3 * D                   # fused qkv
                   + 2 * HBT * HBT * HEAD               # packed scores
                   + 2 * HBT * HBT * HEAD               # packed PV
                   + 2 * BT * D * D                     # out projection
                   + 2 * BT * D * (4 * D) * 2)          # FFN
    flops = NUM_BLOCKS * flops_block + 2 * BT * D * VOCAB_PAD
    transcendentals = NUM_BLOCKS * HBT * HBT            # exp
    bytes_accessed = sum(int(a.size) * a.dtype.itemsize for a in args) \
        + BT * VOCAB_PAD * 4
    cost = pl.CostEstimate(flops=flops, transcendentals=transcendentals,
                           bytes_accessed=bytes_accessed)

    vmem = pl.BlockSpec(memory_space=pltpu.MemorySpace.VMEM)
    logits_pad = pl.pallas_call(
        _fused_forward_kernel,
        out_shape=jax.ShapeDtypeStruct((B, T, VOCAB_PAD), jnp.float32),
        in_specs=[vmem] * len(args),
        out_specs=vmem,
        cost_estimate=cost,
    )(*args)
    return logits_pad[:, :, :VOCAB]


# ---------------------------------------------------------------------------
# Parameters / glue
# ---------------------------------------------------------------------------
def make_positional_encoding(max_len, d):
    pos = jnp.arange(max_len, dtype=jnp.float32)[:, None]
    div = jnp.power(10000.0, jnp.arange(0, d, 2, dtype=jnp.float32) / d)
    ang = pos / div
    pe = jnp.zeros((max_len, d), jnp.float32)
    pe = pe.at[:, 0::2].set(jnp.sin(ang))
    pe = pe.at[:, 1::2].set(jnp.cos(ang))
    return pe[None]                                     # (1, max_len, d)


def init_params(key):
    scale = 0.02

    def dense(k, n_in, n_out):
        # Linear weight stored pre-transposed as (in, out): y = x @ W
        return scale * jax.random.normal(k, (n_in, n_out), jnp.float32)

    keys = jax.random.split(key, 2 + NUM_BLOCKS)
    params = {
        "tok_emb": scale * jax.random.normal(keys[0], (VOCAB, D_MODEL), jnp.float32),
        "pos_enc": make_positional_encoding(CONTEXT, D_MODEL),
    }

    attn_scale = 1.0 / math.sqrt(HEAD)
    wqkv, wp = [], []
    ln1g, ln1b, bp, ln2g, ln2b = [], [], [], [], []
    w1, b1, w2, b2 = [], [], [], []
    for i in range(NUM_BLOCKS):
        bks = jax.random.split(keys[1 + i], 6)
        wq_full = dense(bks[0], D_MODEL, D_MODEL) * attn_scale  # fold 1/sqrt(HEAD)
        wk_full = dense(bks[1], D_MODEL, D_MODEL)
        wv_full = dense(bks[2], D_MODEL, D_MODEL)
        wp_full = dense(bks[3], D_MODEL, D_MODEL)
        # fused QKV weight (D, 3D); column order [q | k | v], head-major inside
        wqkv.append(jnp.concatenate([wq_full, wk_full, wv_full], axis=1))
        wp.append(wp_full)                                      # (D, D)
        ln1g.append(jnp.ones((1, D_MODEL), jnp.float32))
        ln1b.append(jnp.zeros((1, D_MODEL), jnp.float32))
        bp.append(jnp.zeros((1, D_MODEL), jnp.float32))
        ln2g.append(jnp.ones((1, D_MODEL), jnp.float32))
        ln2b.append(jnp.zeros((1, D_MODEL), jnp.float32))
        w1.append(dense(bks[4], D_MODEL, 4 * D_MODEL))
        b1.append(jnp.zeros((1, 4 * D_MODEL), jnp.float32))
        w2.append(dense(bks[5], 4 * D_MODEL, D_MODEL))
        b2.append(jnp.zeros((1, D_MODEL), jnp.float32))

    # stacked over blocks; MXU operands stored bf16, bias/LN kept f32
    params["wqkv"] = jnp.stack(wqkv).astype(jnp.bfloat16)   # (NB, D, 3D)
    params["wp"] = jnp.stack(wp).astype(jnp.bfloat16)       # (NB, D, D)
    params["ln1_g"] = jnp.stack(ln1g)                       # (NB, 1, D)
    params["ln1_b"] = jnp.stack(ln1b)
    params["bp"] = jnp.stack(bp)
    params["ln2_g"] = jnp.stack(ln2g)
    params["ln2_b"] = jnp.stack(ln2b)
    params["w1"] = jnp.stack(w1).astype(jnp.bfloat16)       # (NB, D, 4D)
    params["b1"] = jnp.stack(b1)                            # (NB, 1, 4D)
    params["w2"] = jnp.stack(w2).astype(jnp.bfloat16)       # (NB, 4D, D)
    params["b2"] = jnp.stack(b2)

    wkey, _ = jax.random.split(keys[-1])
    w_out = dense(wkey, D_MODEL, VOCAB)
    w_out_pad = jnp.zeros((D_MODEL, VOCAB_PAD), jnp.float32).at[:, :VOCAB].set(w_out)
    params["w_out"] = w_out_pad.astype(jnp.bfloat16)        # (D, VOCAB_PAD)
    params["b_out"] = jnp.zeros((1, VOCAB_PAD), jnp.float32)
    return params


@jax.jit
def model_forward(params, tokens, targets=None):
    x = params["tok_emb"][tokens]                           # embedding gather (XLA)
    logits = fused_forward(params, x)
    loss = None
    if targets is not None:
        logp = jax.nn.log_softmax(logits, axis=-1)
        loss = -jnp.mean(jnp.take_along_axis(logp, targets[..., None], axis=-1))
    return logits, loss


# ---------------------------------------------------------------------------
if __name__ == "__main__":
    key = jax.random.PRNGKey(0)
    pkey, tkey, ykey = jax.random.split(key, 3)
    params = init_params(pkey)

    B, T = 2, 16
    tokens = jax.random.randint(tkey, (B, T), 0, VOCAB, dtype=jnp.int32)
    targets = jax.random.randint(ykey, (B, T), 0, VOCAB, dtype=jnp.int32)

    logits, loss = model_forward(params, tokens, targets)
    jax.block_until_ready(logits)
    jax.block_until_ready(loss)

    assert logits.shape == (B, T, VOCAB)
    assert logits.dtype == jnp.float32
    assert jnp.isfinite(logits).all()
    assert jnp.isfinite(loss)
    print("KERNEL_OK")
</pallas_src>

<mosaic_0001>
module attributes {stable_mosaic.version = 11 : i64} {
  func.func @_fused_forward_kernel(%arg0: memref<2x16x128xf32, #tpu.memory_space<vmem>>, %arg1: memref<1x16x128xf32, #tpu.memory_space<vmem>>, %arg2: memref<128x128xf32, #tpu.memory_space<vmem>>, %arg3: memref<2x1x128xf32, #tpu.memory_space<vmem>>, %arg4: memref<2x1x128xf32, #tpu.memory_space<vmem>>, %arg5: memref<2x128x384xbf16, #tpu.memory_space<vmem>>, %arg6: memref<2x128x128xbf16, #tpu.memory_space<vmem>>, %arg7: memref<2x1x128xf32, #tpu.memory_space<vmem>>, %arg8: memref<2x1x128xf32, #tpu.memory_space<vmem>>, %arg9: memref<2x1x128xf32, #tpu.memory_space<vmem>>, %arg10: memref<2x128x512xbf16, #tpu.memory_space<vmem>>, %arg11: memref<2x1x512xf32, #tpu.memory_space<vmem>>, %arg12: memref<2x512x128xbf16, #tpu.memory_space<vmem>>, %arg13: memref<2x1x128xf32, #tpu.memory_space<vmem>>, %arg14: memref<128x128xbf16, #tpu.memory_space<vmem>>, %arg15: memref<1x128xf32, #tpu.memory_space<vmem>>, %arg16: memref<2x16x128xf32, #tpu.memory_space<vmem>>) attributes {dimension_semantics = [], scalar_prefetch = 0 : i64, scratch_operands = 0 : i64, tpu.core_type = #tpu.core_type<tc>} {
    %c0 = arith.constant 0 : index
    %c0_0 = arith.constant 0 : index
    %c0_1 = arith.constant 0 : index
    %0 = vector.load %arg0[%c0, %c0_0, %c0_1] : memref<2x16x128xf32, #tpu.memory_space<vmem>>, vector<2x16x128xf32>
    %c0_2 = arith.constant 0 : index
    %c0_3 = arith.constant 0 : index
    %c0_4 = arith.constant 0 : index
    %1 = vector.load %arg1[%c0_2, %c0_3, %c0_4] : memref<1x16x128xf32, #tpu.memory_space<vmem>>, vector<1x16x128xf32>
    %2 = vector.broadcast %1 : vector<1x16x128xf32> to vector<2x16x128xf32>
    %3 = arith.addf %0, %2 : vector<2x16x128xf32>
    %4 = vector.shape_cast %3 : vector<2x16x128xf32> to vector<32x128xf32>
    %c0_5 = arith.constant 0 : index
    %c0_6 = arith.constant 0 : index
    %5 = vector.load %arg2[%c0_5, %c0_6] : memref<128x128xf32, #tpu.memory_space<vmem>>, vector<128x128xf32>
    %c0_7 = arith.constant 0 : index
    %c0_8 = arith.constant 0 : index
    %c0_9 = arith.constant 0 : index
    %6 = vector.load %arg3[%c0_7, %c0_8, %c0_9] : memref<2x1x128xf32, #tpu.memory_space<vmem>>, vector<1x1x128xf32>
    %7 = vector.shape_cast %6 : vector<1x1x128xf32> to vector<1x128xf32>
    %c0_10 = arith.constant 0 : index
    %c0_11 = arith.constant 0 : index
    %c0_12 = arith.constant 0 : index
    %8 = vector.load %arg4[%c0_10, %c0_11, %c0_12] : memref<2x1x128xf32, #tpu.memory_space<vmem>>, vector<1x1x128xf32>
    %9 = vector.shape_cast %8 : vector<1x1x128xf32> to vector<1x128xf32>
    %cst = arith.constant dense<0.000000e+00> : vector<32xf32>
    %10 = vector.multi_reduction <add>, %4, %cst [1] : vector<32x128xf32> to vector<32xf32>
    %11 = vector.shape_cast %10 : vector<32xf32> to vector<32x1xf32>
    %cst_13 = arith.constant 1.280000e+02 : f32
    %12 = vector.broadcast %cst_13 : f32 to vector<32x1xf32>
    %13 = arith.divf %11, %12 : vector<32x1xf32>
    %14 = vector.broadcast %13 : vector<32x1xf32> to vector<32x128xf32>
    %15 = arith.subf %4, %14 : vector<32x128xf32>
    %16 = arith.mulf %15, %15 : vector<32x128xf32>
    %cst_14 = arith.constant dense<0.000000e+00> : vector<32xf32>
    %17 = vector.multi_reduction <add>, %16, %cst_14 [1] : vector<32x128xf32> to vector<32xf32>
    %18 = vector.shape_cast %17 : vector<32xf32> to vector<32x1xf32>
    %cst_15 = arith.constant 1.280000e+02 : f32
    %19 = vector.broadcast %cst_15 : f32 to vector<32x1xf32>
    %20 = arith.divf %18, %19 : vector<32x1xf32>
    %21 = vector.broadcast %13 : vector<32x1xf32> to vector<32x128xf32>
    %22 = arith.subf %4, %21 : vector<32x128xf32>
    %cst_16 = arith.constant 9.99999974E-6 : f32
    %23 = vector.broadcast %cst_16 : f32 to vector<32x1xf32>
    %24 = arith.addf %20, %23 : vector<32x1xf32>
    %25 = math.rsqrt %24 : vector<32x1xf32>
    %26 = vector.broadcast %25 : vector<32x1xf32> to vector<32x128xf32>
    %27 = arith.mulf %22, %26 : vector<32x128xf32>
    %28 = vector.broadcast %7 : vector<1x128xf32> to vector<32x128xf32>
    %29 = arith.mulf %27, %28 : vector<32x128xf32>
    %30 = vector.broadcast %9 : vector<1x128xf32> to vector<32x128xf32>
    %31 = arith.addf %29, %30 : vector<32x128xf32>
    %32 = arith.truncf %31 : vector<32x128xf32> to vector<32x128xbf16>
    %c0_17 = arith.constant 0 : index
    %c0_18 = arith.constant 0 : index
    %c0_19 = arith.constant 0 : index
    %33 = vector.load %arg5[%c0_17, %c0_18, %c0_19] : memref<2x128x384xbf16, #tpu.memory_space<vmem>>, vector<1x128x384xbf16>
    %34 = vector.shape_cast %33 : vector<1x128x384xbf16> to vector<128x384xbf16>
    %cst_20 = arith.constant dense<0.000000e+00> : vector<32x384xf32>
    %35 = tpu.matmul %32, %34, %cst_20 {dimension_numbers = #tpu.dot_dimension_numbers<[1], [0], [0], [1], [0, 0, 1, 1], [], []>} : vector<32x128xbf16>, vector<128x384xbf16>, vector<32x384xf32> -> vector<32x384xf32>
    %36 = arith.truncf %35 : vector<32x384xf32> to vector<32x384xbf16>
    %37 = vector.extract_strided_slice %36 {offsets = [0, 0], sizes = [32, 32], strides = [1, 1]} : vector<32x384xbf16> to vector<32x32xbf16>
    %38 = vector.extract_strided_slice %36 {offsets = [0, 32], sizes = [32, 32], strides = [1, 1]} : vector<32x384xbf16> to vector<32x32xbf16>
    %39 = vector.extract_strided_slice %36 {offsets = [0, 64], sizes = [32, 32], strides = [1, 1]} : vector<32x384xbf16> to vector<32x32xbf16>
    %40 = vector.extract_strided_slice %36 {offsets = [0, 96], sizes = [32, 32], strides = [1, 1]} : vector<32x384xbf16> to vector<32x32xbf16>
    %41 = tpu.concatenate %37, %38, %39, %40 in 0 : vector<32x32xbf16>, vector<32x32xbf16>, vector<32x32xbf16>, vector<32x32xbf16> -> vector<128x32xbf16>
    %42 = vector.extract_strided_slice %36 {offsets = [0, 128], sizes = [32, 32], strides = [1, 1]} : vector<32x384xbf16> to vector<32x32xbf16>
    %43 = vector.extract_strided_slice %36 {offsets = [0, 160], sizes = [32, 32], strides = [1, 1]} : vector<32x384xbf16> to vector<32x32xbf16>
    %44 = vector.extract_strided_slice %36 {offsets = [0, 192], sizes = [32, 32], strides = [1, 1]} : vector<32x384xbf16> to vector<32x32xbf16>
    %45 = vector.extract_strided_slice %36 {offsets = [0, 224], sizes = [32, 32], strides = [1, 1]} : vector<32x384xbf16> to vector<32x32xbf16>
    %46 = tpu.concatenate %42, %43, %44, %45 in 0 : vector<32x32xbf16>, vector<32x32xbf16>, vector<32x32xbf16>, vector<32x32xbf16> -> vector<128x32xbf16>
    %47 = vector.extract_strided_slice %36 {offsets = [0, 256], sizes = [32, 32], strides = [1, 1]} : vector<32x384xbf16> to vector<32x32xbf16>
    %48 = vector.extract_strided_slice %36 {offsets = [0, 288], sizes = [32, 32], strides = [1, 1]} : vector<32x384xbf16> to vector<32x32xbf16>
    %49 = vector.extract_strided_slice %36 {offsets = [0, 320], sizes = [32, 32], strides = [1, 1]} : vector<32x384xbf16> to vector<32x32xbf16>
    %50 = vector.extract_strided_slice %36 {offsets = [0, 352], sizes = [32, 32], strides = [1, 1]} : vector<32x384xbf16> to vector<32x32xbf16>
    %51 = tpu.concatenate %47, %48, %49, %50 in 0 : vector<32x32xbf16>, vector<32x32xbf16>, vector<32x32xbf16>, vector<32x32xbf16> -> vector<128x32xbf16>
    "tpu.trace_start"() <{level = 10 : i32, message = "md,nd->mn"}> : () -> ()
    %cst_21 = arith.constant dense<0.000000e+00> : vector<128x128xf32>
    %52 = tpu.matmul %41, %46, %cst_21 {dimension_numbers = #tpu.dot_dimension_numbers<[1], [1], [0], [0], [0, 0, 1, 0], [], []>} : vector<128x32xbf16>, vector<128x32xbf16>, vector<128x128xf32> -> vector<128x128xf32>
    "tpu.trace_stop"() : () -> ()
    %53 = arith.addf %52, %5 : vector<128x128xf32>
    %cst_22 = arith.constant dense<0xFF800000> : vector<128xf32>
    %54 = vector.multi_reduction <maximumf>, %53, %cst_22 [1] : vector<128x128xf32> to vector<128xf32>
    %55 = vector.shape_cast %54 : vector<128xf32> to vector<128x1xf32>
    %56 = vector.broadcast %55 : vector<128x1xf32> to vector<128x128xf32>
    %57 = arith.subf %53, %56 : vector<128x128xf32>
    %58 = math.exp %57 : vector<128x128xf32>
    %cst_23 = arith.constant dense<0.000000e+00> : vector<128xf32>
    %59 = vector.multi_reduction <add>, %58, %cst_23 [1] : vector<128x128xf32> to vector<128xf32>
    %60 = vector.shape_cast %59 : vector<128xf32> to vector<128x1xf32>
    %61 = tpu.reciprocal %60 {approx = true} : vector<128x1xf32> -> vector<128x1xf32>
    %62 = vector.broadcast %61 : vector<128x1xf32> to vector<128x128xf32>
    %63 = arith.mulf %58, %62 : vector<128x128xf32>
    %64 = arith.truncf %63 : vector<128x128xf32> to vector<128x128xbf16>
    %cst_24 = arith.constant dense<0.000000e+00> : vector<128x32xf32>
    %65 = tpu.matmul %64, %51, %cst_24 {dimension_numbers = #tpu.dot_dimension_numbers<[1], [0], [0], [1], [0, 0, 1, 1], [], []>} : vector<128x128xbf16>, vector<128x32xbf16>, vector<128x32xf32> -> vector<128x32xf32>
    %66 = vector.extract_strided_slice %65 {offsets = [0, 0], sizes = [32, 32], strides = [1, 1]} : vector<128x32xf32> to vector<32x32xf32>
    %67 = vector.extract_strided_slice %65 {offsets = [32, 0], sizes = [32, 32], strides = [1, 1]} : vector<128x32xf32> to vector<32x32xf32>
    %68 = vector.extract_strided_slice %65 {offsets = [64, 0], sizes = [32, 32], strides = [1, 1]} : vector<128x32xf32> to vector<32x32xf32>
    %69 = vector.extract_strided_slice %65 {offsets = [96, 0], sizes = [32, 32], strides = [1, 1]} : vector<128x32xf32> to vector<32x32xf32>
    %70 = tpu.concatenate %66, %67, %68, %69 in 1 : vector<32x32xf32>, vector<32x32xf32>, vector<32x32xf32>, vector<32x32xf32> -> vector<32x128xf32>
    %71 = arith.truncf %70 : vector<32x128xf32> to vector<32x128xbf16>
    %c0_25 = arith.constant 0 : index
    %c0_26 = arith.constant 0 : index
    %c0_27 = arith.constant 0 : index
    %72 = vector.load %arg6[%c0_25, %c0_26, %c0_27] : memref<2x128x128xbf16, #tpu.memory_space<vmem>>, vector<1x128x128xbf16>
    %73 = vector.shape_cast %72 : vector<1x128x128xbf16> to vector<128x128xbf16>
    %cst_28 = arith.constant dense<0.000000e+00> : vector<32x128xf32>
    %74 = tpu.matmul %71, %73, %cst_28 {dimension_numbers = #tpu.dot_dimension_numbers<[1], [0], [0], [1], [0, 0, 1, 1], [], []>} : vector<32x128xbf16>, vector<128x128xbf16>, vector<32x128xf32> -> vector<32x128xf32>
    %c0_29 = arith.constant 0 : index
    %c0_30 = arith.constant 0 : index
    %c0_31 = arith.constant 0 : index
    %75 = vector.load %arg7[%c0_29, %c0_30, %c0_31] : memref<2x1x128xf32, #tpu.memory_space<vmem>>, vector<1x1x128xf32>
    %76 = vector.shape_cast %75 : vector<1x1x128xf32> to vector<1x128xf32>
    %77 = vector.broadcast %76 : vector<1x128xf32> to vector<32x128xf32>
    %78 = arith.addf %74, %77 : vector<32x128xf32>
    %79 = arith.addf %4, %78 : vector<32x128xf32>
    %c0_32 = arith.constant 0 : index
    %c0_33 = arith.constant 0 : index
    %c0_34 = arith.constant 0 : index
    %80 = vector.load %arg8[%c0_32, %c0_33, %c0_34] : memref<2x1x128xf32, #tpu.memory_space<vmem>>, vector<1x1x128xf32>
    %81 = vector.shape_cast %80 : vector<1x1x128xf32> to vector<1x128xf32>
    %c0_35 = arith.constant 0 : index
    %c0_36 = arith.constant 0 : index
    %c0_37 = arith.constant 0 : index
    %82 = vector.load %arg9[%c0_35, %c0_36, %c0_37] : memref<2x1x128xf32, #tpu.memory_space<vmem>>, vector<1x1x128xf32>
    %83 = vector.shape_cast %82 : vector<1x1x128xf32> to vector<1x128xf32>
    %cst_38 = arith.constant dense<0.000000e+00> : vector<32xf32>
    %84 = vector.multi_reduction <add>, %79, %cst_38 [1] : vector<32x128xf32> to vector<32xf32>
    %85 = vector.shape_cast %84 : vector<32xf32> to vector<32x1xf32>
    %cst_39 = arith.constant 1.280000e+02 : f32
    %86 = vector.broadcast %cst_39 : f32 to vector<32x1xf32>
    %87 = arith.divf %85, %86 : vector<32x1xf32>
    %88 = vector.broadcast %87 : vector<32x1xf32> to vector<32x128xf32>
    %89 = arith.subf %79, %88 : vector<32x128xf32>
    %90 = arith.mulf %89, %89 : vector<32x128xf32>
    %cst_40 = arith.constant dense<0.000000e+00> : vector<32xf32>
    %91 = vector.multi_reduction <add>, %90, %cst_40 [1] : vector<32x128xf32> to vector<32xf32>
    %92 = vector.shape_cast %91 : vector<32xf32> to vector<32x1xf32>
    %cst_41 = arith.constant 1.280000e+02 : f32
    %93 = vector.broadcast %cst_41 : f32 to vector<32x1xf32>
    %94 = arith.divf %92, %93 : vector<32x1xf32>
    %95 = vector.broadcast %87 : vector<32x1xf32> to vector<32x128xf32>
    %96 = arith.subf %79, %95 : vector<32x128xf32>
    %cst_42 = arith.constant 9.99999974E-6 : f32
    %97 = vector.broadcast %cst_42 : f32 to vector<32x1xf32>
    %98 = arith.addf %94, %97 : vector<32x1xf32>
    %99 = math.rsqrt %98 : vector<32x1xf32>
    %100 = vector.broadcast %99 : vector<32x1xf32> to vector<32x128xf32>
    %101 = arith.mulf %96, %100 : vector<32x128xf32>
    %102 = vector.broadcast %81 : vector<1x128xf32> to vector<32x128xf32>
    %103 = arith.mulf %101, %102 : vector<32x128xf32>
    %104 = vector.broadcast %83 : vector<1x128xf32> to vector<32x128xf32>
    %105 = arith.addf %103, %104 : vector<32x128xf32>
    %106 = arith.truncf %105 : vector<32x128xf32> to vector<32x128xbf16>
    %c0_43 = arith.constant 0 : index
    %c0_44 = arith.constant 0 : index
    %c0_45 = arith.constant 0 : index
    %107 = vector.load %arg10[%c0_43, %c0_44, %c0_45] : memref<2x128x512xbf16, #tpu.memory_space<vmem>>, vector<1x128x512xbf16>
    %108 = vector.shape_cast %107 : vector<1x128x512xbf16> to vector<128x512xbf16>
    %cst_46 = arith.constant dense<0.000000e+00> : vector<32x512xf32>
    %109 = tpu.matmul %106, %108, %cst_46 {dimension_numbers = #tpu.dot_dimension_numbers<[1], [0], [0], [1], [0, 0, 1, 1], [], []>} : vector<32x128xbf16>, vector<128x512xbf16>, vector<32x512xf32> -> vector<32x512xf32>
    %c0_47 = arith.constant 0 : index
    %c0_48 = arith.constant 0 : index
    %c0_49 = arith.constant 0 : index
    %110 = vector.load %arg11[%c0_47, %c0_48, %c0_49] : memref<2x1x512xf32, #tpu.memory_space<vmem>>, vector<1x1x512xf32>
    %111 = vector.shape_cast %110 : vector<1x1x512xf32> to vector<1x512xf32>
    %112 = vector.broadcast %111 : vector<1x512xf32> to vector<32x512xf32>
    %113 = arith.addf %109, %112 : vector<32x512xf32>
    %cst_50 = arith.constant 0.000000e+00 : f32
    %114 = vector.broadcast %cst_50 : f32 to vector<32x512xf32>
    %115 = arith.maximumf %113, %114 : vector<32x512xf32>
    %116 = arith.truncf %115 : vector<32x512xf32> to vector<32x512xbf16>
    %c0_51 = arith.constant 0 : index
    %c0_52 = arith.constant 0 : index
    %c0_53 = arith.constant 0 : index
    %117 = vector.load %arg12[%c0_51, %c0_52, %c0_53] : memref<2x512x128xbf16, #tpu.memory_space<vmem>>, vector<1x512x128xbf16>
    %118 = vector.shape_cast %117 : vector<1x512x128xbf16> to vector<512x128xbf16>
    %cst_54 = arith.constant dense<0.000000e+00> : vector<32x128xf32>
    %119 = tpu.matmul %116, %118, %cst_54 {dimension_numbers = #tpu.dot_dimension_numbers<[1], [0], [0], [1], [0, 0, 1, 1], [], []>} : vector<32x512xbf16>, vector<512x128xbf16>, vector<32x128xf32> -> vector<32x128xf32>
    %c0_55 = arith.constant 0 : index
    %c0_56 = arith.constant 0 : index
    %c0_57 = arith.constant 0 : index
    %120 = vector.load %arg13[%c0_55, %c0_56, %c0_57] : memref<2x1x128xf32, #tpu.memory_space<vmem>>, vector<1x1x128xf32>
    %121 = vector.shape_cast %120 : vector<1x1x128xf32> to vector<1x128xf32>
    %122 = vector.broadcast %121 : vector<1x128xf32> to vector<32x128xf32>
    %123 = arith.addf %119, %122 : vector<32x128xf32>
    %124 = arith.addf %79, %123 : vector<32x128xf32>
    %c1 = arith.constant 1 : index
    %c0_58 = arith.constant 0 : index
    %c0_59 = arith.constant 0 : index
    %125 = vector.load %arg3[%c1, %c0_58, %c0_59] : memref<2x1x128xf32, #tpu.memory_space<vmem>>, vector<1x1x128xf32>
    %126 = vector.shape_cast %125 : vector<1x1x128xf32> to vector<1x128xf32>
    %c1_60 = arith.constant 1 : index
    %c0_61 = arith.constant 0 : index
    %c0_62 = arith.constant 0 : index
    %127 = vector.load %arg4[%c1_60, %c0_61, %c0_62] : memref<2x1x128xf32, #tpu.memory_space<vmem>>, vector<1x1x128xf32>
    %128 = vector.shape_cast %127 : vector<1x1x128xf32> to vector<1x128xf32>
    %cst_63 = arith.constant dense<0.000000e+00> : vector<32xf32>
    %129 = vector.multi_reduction <add>, %124, %cst_63 [1] : vector<32x128xf32> to vector<32xf32>
    %130 = vector.shape_cast %129 : vector<32xf32> to vector<32x1xf32>
    %cst_64 = arith.constant 1.280000e+02 : f32
    %131 = vector.broadcast %cst_64 : f32 to vector<32x1xf32>
    %132 = arith.divf %130, %131 : vector<32x1xf32>
    %133 = vector.broadcast %132 : vector<32x1xf32> to vector<32x128xf32>
    %134 = arith.subf %124, %133 : vector<32x128xf32>
    %135 = arith.mulf %134, %134 : vector<32x128xf32>
    %cst_65 = arith.constant dense<0.000000e+00> : vector<32xf32>
    %136 = vector.multi_reduction <add>, %135, %cst_65 [1] : vector<32x128xf32> to vector<32xf32>
    %137 = vector.shape_cast %136 : vector<32xf32> to vector<32x1xf32>
    %cst_66 = arith.constant 1.280000e+02 : f32
    %138 = vector.broadcast %cst_66 : f32 to vector<32x1xf32>
    %139 = arith.divf %137, %138 : vector<32x1xf32>
    %140 = vector.broadcast %132 : vector<32x1xf32> to vector<32x128xf32>
    %141 = arith.subf %124, %140 : vector<32x128xf32>
    %cst_67 = arith.constant 9.99999974E-6 : f32
    %142 = vector.broadcast %cst_67 : f32 to vector<32x1xf32>
    %143 = arith.addf %139, %142 : vector<32x1xf32>
    %144 = math.rsqrt %143 : vector<32x1xf32>
    %145 = vector.broadcast %144 : vector<32x1xf32> to vector<32x128xf32>
    %146 = arith.mulf %141, %145 : vector<32x128xf32>
    %147 = vector.broadcast %126 : vector<1x128xf32> to vector<32x128xf32>
    %148 = arith.mulf %146, %147 : vector<32x128xf32>
    %149 = vector.broadcast %128 : vector<1x128xf32> to vector<32x128xf32>
    %150 = arith.addf %148, %149 : vector<32x128xf32>
    %151 = arith.truncf %150 : vector<32x128xf32> to vector<32x128xbf16>
    %c1_68 = arith.constant 1 : index
    %c0_69 = arith.constant 0 : index
    %c0_70 = arith.constant 0 : index
    %152 = vector.load %arg5[%c1_68, %c0_69, %c0_70] : memref<2x128x384xbf16, #tpu.memory_space<vmem>>, vector<1x128x384xbf16>
    %153 = vector.shape_cast %152 : vector<1x128x384xbf16> to vector<128x384xbf16>
    %cst_71 = arith.constant dense<0.000000e+00> : vector<32x384xf32>
    %154 = tpu.matmul %151, %153, %cst_71 {dimension_numbers = #tpu.dot_dimension_numbers<[1], [0], [0], [1], [0, 0, 1, 1], [], []>} : vector<32x128xbf16>, vector<128x384xbf16>, vector<32x384xf32> -> vector<32x384xf32>
    %155 = arith.truncf %154 : vector<32x384xf32> to vector<32x384xbf16>
    %156 = vector.extract_strided_slice %155 {offsets = [0, 0], sizes = [32, 32], strides = [1, 1]} : vector<32x384xbf16> to vector<32x32xbf16>
    %157 = vector.extract_strided_slice %155 {offsets = [0, 32], sizes = [32, 32], strides = [1, 1]} : vector<32x384xbf16> to vector<32x32xbf16>
    %158 = vector.extract_strided_slice %155 {offsets = [0, 64], sizes = [32, 32], strides = [1, 1]} : vector<32x384xbf16> to vector<32x32xbf16>
    %159 = vector.extract_strided_slice %155 {offsets = [0, 96], sizes = [32, 32], strides = [1, 1]} : vector<32x384xbf16> to vector<32x32xbf16>
    %160 = tpu.concatenate %156, %157, %158, %159 in 0 : vector<32x32xbf16>, vector<32x32xbf16>, vector<32x32xbf16>, vector<32x32xbf16> -> vector<128x32xbf16>
    %161 = vector.extract_strided_slice %155 {offsets = [0, 128], sizes = [32, 32], strides = [1, 1]} : vector<32x384xbf16> to vector<32x32xbf16>
    %162 = vector.extract_strided_slice %155 {offsets = [0, 160], sizes = [32, 32], strides = [1, 1]} : vector<32x384xbf16> to vector<32x32xbf16>
    %163 = vector.extract_strided_slice %155 {offsets = [0, 192], sizes = [32, 32], strides = [1, 1]} : vector<32x384xbf16> to vector<32x32xbf16>
    %164 = vector.extract_strided_slice %155 {offsets = [0, 224], sizes = [32, 32], strides = [1, 1]} : vector<32x384xbf16> to vector<32x32xbf16>
    %165 = tpu.concatenate %161, %162, %163, %164 in 0 : vector<32x32xbf16>, vector<32x32xbf16>, vector<32x32xbf16>, vector<32x32xbf16> -> vector<128x32xbf16>
    %166 = vector.extract_strided_slice %155 {offsets = [0, 256], sizes = [32, 32], strides = [1, 1]} : vector<32x384xbf16> to vector<32x32xbf16>
    %167 = vector.extract_strided_slice %155 {offsets = [0, 288], sizes = [32, 32], strides = [1, 1]} : vector<32x384xbf16> to vector<32x32xbf16>
    %168 = vector.extract_strided_slice %155 {offsets = [0, 320], sizes = [32, 32], strides = [1, 1]} : vector<32x384xbf16> to vector<32x32xbf16>
    %169 = vector.extract_strided_slice %155 {offsets = [0, 352], sizes = [32, 32], strides = [1, 1]} : vector<32x384xbf16> to vector<32x32xbf16>
    %170 = tpu.concatenate %166, %167, %168, %169 in 0 : vector<32x32xbf16>, vector<32x32xbf16>, vector<32x32xbf16>, vector<32x32xbf16> -> vector<128x32xbf16>
    "tpu.trace_start"() <{level = 10 : i32, message = "md,nd->mn"}> : () -> ()
    %cst_72 = arith.constant dense<0.000000e+00> : vector<128x128xf32>
    %171 = tpu.matmul %160, %165, %cst_72 {dimension_numbers = #tpu.dot_dimension_numbers<[1], [1], [0], [0], [0, 0, 1, 0], [], []>} : vector<128x32xbf16>, vector<128x32xbf16>, vector<128x128xf32> -> vector<128x128xf32>
    "tpu.trace_stop"() : () -> ()
    %172 = arith.addf %171, %5 : vector<128x128xf32>
    %cst_73 = arith.constant dense<0xFF800000> : vector<128xf32>
    %173 = vector.multi_reduction <maximumf>, %172, %cst_73 [1] : vector<128x128xf32> to vector<128xf32>
    %174 = vector.shape_cast %173 : vector<128xf32> to vector<128x1xf32>
    %175 = vector.broadcast %174 : vector<128x1xf32> to vector<128x128xf32>
    %176 = arith.subf %172, %175 : vector<128x128xf32>
    %177 = math.exp %176 : vector<128x128xf32>
    %cst_74 = arith.constant dense<0.000000e+00> : vector<128xf32>
    %178 = vector.multi_reduction <add>, %177, %cst_74 [1] : vector<128x128xf32> to vector<128xf32>
    %179 = vector.shape_cast %178 : vector<128xf32> to vector<128x1xf32>
    %180 = tpu.reciprocal %179 {approx = true} : vector<128x1xf32> -> vector<128x1xf32>
    %181 = vector.broadcast %180 : vector<128x1xf32> to vector<128x128xf32>
    %182 = arith.mulf %177, %181 : vector<128x128xf32>
    %183 = arith.truncf %182 : vector<128x128xf32> to vector<128x128xbf16>
    %cst_75 = arith.constant dense<0.000000e+00> : vector<128x32xf32>
    %184 = tpu.matmul %183, %170, %cst_75 {dimension_numbers = #tpu.dot_dimension_numbers<[1], [0], [0], [1], [0, 0, 1, 1], [], []>} : vector<128x128xbf16>, vector<128x32xbf16>, vector<128x32xf32> -> vector<128x32xf32>
    %185 = vector.extract_strided_slice %184 {offsets = [0, 0], sizes = [32, 32], strides = [1, 1]} : vector<128x32xf32> to vector<32x32xf32>
    %186 = vector.extract_strided_slice %184 {offsets = [32, 0], sizes = [32, 32], strides = [1, 1]} : vector<128x32xf32> to vector<32x32xf32>
    %187 = vector.extract_strided_slice %184 {offsets = [64, 0], sizes = [32, 32], strides = [1, 1]} : vector<128x32xf32> to vector<32x32xf32>
    %188 = vector.extract_strided_slice %184 {offsets = [96, 0], sizes = [32, 32], strides = [1, 1]} : vector<128x32xf32> to vector<32x32xf32>
    %189 = tpu.concatenate %185, %186, %187, %188 in 1 : vector<32x32xf32>, vector<32x32xf32>, vector<32x32xf32>, vector<32x32xf32> -> vector<32x128xf32>
    %190 = arith.truncf %189 : vector<32x128xf32> to vector<32x128xbf16>
    %c1_76 = arith.constant 1 : index
    %c0_77 = arith.constant 0 : index
    %c0_78 = arith.constant 0 : index
    %191 = vector.load %arg6[%c1_76, %c0_77, %c0_78] : memref<2x128x128xbf16, #tpu.memory_space<vmem>>, vector<1x128x128xbf16>
    %192 = vector.shape_cast %191 : vector<1x128x128xbf16> to vector<128x128xbf16>
    %cst_79 = arith.constant dense<0.000000e+00> : vector<32x128xf32>
    %193 = tpu.matmul %190, %192, %cst_79 {dimension_numbers = #tpu.dot_dimension_numbers<[1], [0], [0], [1], [0, 0, 1, 1], [], []>} : vector<32x128xbf16>, vector<128x128xbf16>, vector<32x128xf32> -> vector<32x128xf32>
    %c1_80 = arith.constant 1 : index
    %c0_81 = arith.constant 0 : index
    %c0_82 = arith.constant 0 : index
    %194 = vector.load %arg7[%c1_80, %c0_81, %c0_82] : memref<2x1x128xf32, #tpu.memory_space<vmem>>, vector<1x1x128xf32>
    %195 = vector.shape_cast %194 : vector<1x1x128xf32> to vector<1x128xf32>
    %196 = vector.broadcast %195 : vector<1x128xf32> to vector<32x128xf32>
    %197 = arith.addf %193, %196 : vector<32x128xf32>
    %198 = arith.addf %124, %197 : vector<32x128xf32>
    %c1_83 = arith.constant 1 : index
    %c0_84 = arith.constant 0 : index
    %c0_85 = arith.constant 0 : index
    %199 = vector.load %arg8[%c1_83, %c0_84, %c0_85] : memref<2x1x128xf32, #tpu.memory_space<vmem>>, vector<1x1x128xf32>
    %200 = vector.shape_cast %199 : vector<1x1x128xf32> to vector<1x128xf32>
    %c1_86 = arith.constant 1 : index
    %c0_87 = arith.constant 0 : index
    %c0_88 = arith.constant 0 : index
    %201 = vector.load %arg9[%c1_86, %c0_87, %c0_88] : memref<2x1x128xf32, #tpu.memory_space<vmem>>, vector<1x1x128xf32>
    %202 = vector.shape_cast %201 : vector<1x1x128xf32> to vector<1x128xf32>
    %cst_89 = arith.constant dense<0.000000e+00> : vector<32xf32>
    %203 = vector.multi_reduction <add>, %198, %cst_89 [1] : vector<32x128xf32> to vector<32xf32>
    %204 = vector.shape_cast %203 : vector<32xf32> to vector<32x1xf32>
    %cst_90 = arith.constant 1.280000e+02 : f32
    %205 = vector.broadcast %cst_90 : f32 to vector<32x1xf32>
    %206 = arith.divf %204, %205 : vector<32x1xf32>
    %207 = vector.broadcast %206 : vector<32x1xf32> to vector<32x128xf32>
    %208 = arith.subf %198, %207 : vector<32x128xf32>
    %209 = arith.mulf %208, %208 : vector<32x128xf32>
    %cst_91 = arith.constant dense<0.000000e+00> : vector<32xf32>
    %210 = vector.multi_reduction <add>, %209, %cst_91 [1] : vector<32x128xf32> to vector<32xf32>
    %211 = vector.shape_cast %210 : vector<32xf32> to vector<32x1xf32>
    %cst_92 = arith.constant 1.280000e+02 : f32
    %212 = vector.broadcast %cst_92 : f32 to vector<32x1xf32>
    %213 = arith.divf %211, %212 : vector<32x1xf32>
    %214 = vector.broadcast %206 : vector<32x1xf32> to vector<32x128xf32>
    %215 = arith.subf %198, %214 : vector<32x128xf32>
    %cst_93 = arith.constant 9.99999974E-6 : f32
    %216 = vector.broadcast %cst_93 : f32 to vector<32x1xf32>
    %217 = arith.addf %213, %216 : vector<32x1xf32>
    %218 = math.rsqrt %217 : vector<32x1xf32>
    %219 = vector.broadcast %218 : vector<32x1xf32> to vector<32x128xf32>
    %220 = arith.mulf %215, %219 : vector<32x128xf32>
    %221 = vector.broadcast %200 : vector<1x128xf32> to vector<32x128xf32>
    %222 = arith.mulf %220, %221 : vector<32x128xf32>
    %223 = vector.broadcast %202 : vector<1x128xf32> to vector<32x128xf32>
    %224 = arith.addf %222, %223 : vector<32x128xf32>
    %225 = arith.truncf %224 : vector<32x128xf32> to vector<32x128xbf16>
    %c1_94 = arith.constant 1 : index
    %c0_95 = arith.constant 0 : index
    %c0_96 = arith.constant 0 : index
    %226 = vector.load %arg10[%c1_94, %c0_95, %c0_96] : memref<2x128x512xbf16, #tpu.memory_space<vmem>>, vector<1x128x512xbf16>
    %227 = vector.shape_cast %226 : vector<1x128x512xbf16> to vector<128x512xbf16>
    %cst_97 = arith.constant dense<0.000000e+00> : vector<32x512xf32>
    %228 = tpu.matmul %225, %227, %cst_97 {dimension_numbers = #tpu.dot_dimension_numbers<[1], [0], [0], [1], [0, 0, 1, 1], [], []>} : vector<32x128xbf16>, vector<128x512xbf16>, vector<32x512xf32> -> vector<32x512xf32>
    %c1_98 = arith.constant 1 : index
    %c0_99 = arith.constant 0 : index
    %c0_100 = arith.constant 0 : index
    %229 = vector.load %arg11[%c1_98, %c0_99, %c0_100] : memref<2x1x512xf32, #tpu.memory_space<vmem>>, vector<1x1x512xf32>
    %230 = vector.shape_cast %229 : vector<1x1x512xf32> to vector<1x512xf32>
    %231 = vector.broadcast %230 : vector<1x512xf32> to vector<32x512xf32>
    %232 = arith.addf %228, %231 : vector<32x512xf32>
    %cst_101 = arith.constant 0.000000e+00 : f32
    %233 = vector.broadcast %cst_101 : f32 to vector<32x512xf32>
    %234 = arith.maximumf %232, %233 : vector<32x512xf32>
    %235 = arith.truncf %234 : vector<32x512xf32> to vector<32x512xbf16>
    %c1_102 = arith.constant 1 : index
    %c0_103 = arith.constant 0 : index
    %c0_104 = arith.constant 0 : index
    %236 = vector.load %arg12[%c1_102, %c0_103, %c0_104] : memref<2x512x128xbf16, #tpu.memory_space<vmem>>, vector<1x512x128xbf16>
    %237 = vector.shape_cast %236 : vector<1x512x128xbf16> to vector<512x128xbf16>
    %cst_105 = arith.constant dense<0.000000e+00> : vector<32x128xf32>
    %238 = tpu.matmul %235, %237, %cst_105 {dimension_numbers = #tpu.dot_dimension_numbers<[1], [0], [0], [1], [0, 0, 1, 1], [], []>} : vector<32x512xbf16>, vector<512x128xbf16>, vector<32x128xf32> -> vector<32x128xf32>
    %c1_106 = arith.constant 1 : index
    %c0_107 = arith.constant 0 : index
    %c0_108 = arith.constant 0 : index
    %239 = vector.load %arg13[%c1_106, %c0_107, %c0_108] : memref<2x1x128xf32, #tpu.memory_space<vmem>>, vector<1x1x128xf32>
    %240 = vector.shape_cast %239 : vector<1x1x128xf32> to vector<1x128xf32>
    %241 = vector.broadcast %240 : vector<1x128xf32> to vector<32x128xf32>
    %242 = arith.addf %238, %241 : vector<32x128xf32>
    %243 = arith.addf %198, %242 : vector<32x128xf32>
    %244 = arith.truncf %243 : vector<32x128xf32> to vector<32x128xbf16>
    %c0_109 = arith.constant 0 : index
    %c0_110 = arith.constant 0 : index
    %245 = vector.load %arg14[%c0_109, %c0_110] : memref<128x128xbf16, #tpu.memory_space<vmem>>, vector<128x128xbf16>
    %cst_111 = arith.constant dense<0.000000e+00> : vector<32x128xf32>
    %246 = tpu.matmul %244, %245, %cst_111 {dimension_numbers = #tpu.dot_dimension_numbers<[1], [0], [0], [1], [0, 0, 1, 1], [], []>} : vector<32x128xbf16>, vector<128x128xbf16>, vector<32x128xf32> -> vector<32x128xf32>
    %c0_112 = arith.constant 0 : index
    %c0_113 = arith.constant 0 : index
    %247 = vector.load %arg15[%c0_112, %c0_113] : memref<1x128xf32, #tpu.memory_space<vmem>>, vector<1x128xf32>
    %248 = vector.broadcast %247 : vector<1x128xf32> to vector<32x128xf32>
    %249 = arith.addf %246, %248 : vector<32x128xf32>
    %250 = vector.shape_cast %249 : vector<32x128xf32> to vector<2x16x128xf32>
    %c0_114 = arith.constant 0 : index
    %c0_115 = arith.constant 0 : index
    %c0_116 = arith.constant 0 : index
    %251 = vector.load %arg16[%c0_114, %c0_115, %c0_116] : memref<2x16x128xf32, #tpu.memory_space<vmem>>, vector<2x16x128xf32>
    tpu.vector_store %arg16[%c0_114, %c0_115, %c0_116], %250 {strides = array<i32>} : memref<2x16x128xf32, #tpu.memory_space<vmem>>, vector<2x16x128xf32>,
    return
  }
}

</mosaic_0001>

<llo_original>
// kernel: model_forward.1
$region0: #{model_forward.1}
  #allocation0 [shape = 'u32[]', space=smem, size = 0x4, offset = 0x4, fixed_abs, tag = 'smem constant byte address 0x4 - core index']
  #allocation1 [shape = 'u32[72,128]{1,0:T(1,128)}', space=vmem, size = 0x9000, scoped, tag = 'internal scratch']
  %s0 = inlined_call_operand.vmem [shape: f32[2,16,128], index: 0, kind: input, shape index: {}]
  %s1 = inlined_call_operand.vmem [shape: f32[1,16,128], index: 1, kind: input, shape index: {}]
  %s2 = inlined_call_operand.vmem [shape: f32[128,128], index: 2, kind: input, shape index: {}]
  %s3 = inlined_call_operand.vmem [shape: f32[2,1,128], index: 3, kind: input, shape index: {}]
  %s4 = inlined_call_operand.vmem [shape: f32[2,1,128], index: 4, kind: input, shape index: {}]
  %s5 = inlined_call_operand.vmem [shape: bf16[2,128,384], index: 5, kind: input, shape index: {}]
  %s6 = inlined_call_operand.hbm [shape: bf16[2,128,128], index: 6, kind: input, shape index: {}]
  %s7 = inlined_call_operand.vmem [shape: f32[2,1,128], index: 7, kind: input, shape index: {}]
  %s8 = inlined_call_operand.hbm [shape: f32[2,1,128], index: 8, kind: input, shape index: {}]
  %s9 = inlined_call_operand.hbm [shape: f32[2,1,128], index: 9, kind: input, shape index: {}]
  %s10 = inlined_call_operand.hbm [shape: bf16[2,128,512], index: 10, kind: input, shape index: {}]
  %s11 = inlined_call_operand.vmem [shape: f32[2,1,512], index: 11, kind: input, shape index: {}]
  %s12 = inlined_call_operand.hbm [shape: bf16[2,512,128], index: 12, kind: input, shape index: {}]
  %s13 = inlined_call_operand.vmem [shape: f32[2,1,128], index: 13, kind: input, shape index: {}]
  %s14 = inlined_call_operand.vmem [shape: bf16[128,128], index: 14, kind: input, shape index: {}]
  %s15 = inlined_call_operand.vmem [shape: f32[1,128], index: 15, kind: input, shape index: {}]
  %s16 = inlined_call_operand.vmem [shape: f32[2,16,128], index: 16, kind: output, shape index: {}]
  %s17 = sld [smem:[#allocation0]]
  $region94: #{model_forward.1} parent=0
    _
  %s19 = ssub.s32 1, %s17
  %s20 = scalar_select 0, %s19, %s17
  $region1: #{model_forward.1} parent=0
    #allocation2 [shape = 'u8[65536]{0}', space=vmem, size = 0x10000, scoped, tag = 'input window, operand 6, single buffered']
    #allocation3 [shape = 's32[1]{0}', space=sflag, size = 0x4, scoped, tag = 'scoped memory for model_forward.1']
    #allocation4 [shape = 'u8[1024]{0}', space=vmem, size = 0x400, scoped, tag = 'input window, operand 8, single buffered']
    #allocation5 [shape = 's32[1]{0}', space=sflag, size = 0x4, scoped, tag = 'scoped memory for model_forward.1']
    #allocation6 [shape = 'u8[1024]{0}', space=vmem, size = 0x400, scoped, tag = 'input window, operand 9, single buffered']
    #allocation7 [shape = 'u8[262144]{0}', space=vmem, size = 0x40000, scoped, tag = 'input window, operand 10, single buffered']
    #allocation8 [shape = 's32[1]{0}', space=sflag, size = 0x4, scoped, tag = 'scoped memory for model_forward.1']
    #allocation9 [shape = 'u8[262144]{0}', space=vmem, size = 0x40000, scoped, tag = 'input window, operand 12, single buffered']
    %21 = vsyncpa [#allocation3], 0
    %22 = vsyncpa [#allocation5], 0
    %23 = vsyncpa [#allocation8], 0
    // Predicated region
    $region2: #{model_forward.1} parent=1 // pred_check
      _
    $region3: #{model_forward.1} parent=1 // pred_check_branch
      %25 = sbr.rel (0) target = $region5
    $region4: #{model_forward.1} parent=1 // pred_region
      _
    $region5: #{model_forward.1} parent=1 // pred_fallthru
      _
    // Predicated region
    $region6: #{model_forward.1} parent=1 // pred_check
      _
    $region7: #{model_forward.1} parent=1 // pred_check_branch
      %27 = sbr.rel (0) target = $region9
    $region8: #{model_forward.1} parent=1 // pred_region
      _
    $region9: #{model_forward.1} parent=1 // pred_fallthru
      _
    // Predicated region
    $region10: #{model_forward.1} parent=1 // pred_check
      _
    $region11: #{model_forward.1} parent=1 // pred_check_branch
      %29 = sbr.rel (0) target = $region13
    $region12: #{model_forward.1} parent=1 // pred_region
      _
    $region13: #{model_forward.1} parent=1 // pred_fallthru
      _
    // Predicated region
    $region14: #{model_forward.1} parent=1 // pred_check
      _
    $region15: #{model_forward.1} parent=1 // pred_check_branch
      %31 = sbr.rel (0) target = $region17
    $region16: #{model_forward.1} parent=1 // pred_region
      _
    $region17: #{model_forward.1} parent=1 // pred_fallthru
      _
    // Predicated region
    $region18: #{model_forward.1} parent=1 // pred_check
      _
    $region19: #{model_forward.1} parent=1 // pred_check_branch
      %33 = sbr.rel (0) target = $region21
    $region20: #{model_forward.1} parent=1 // pred_region
      _
    $region21: #{model_forward.1} parent=1 // pred_fallthru
      _
    // Predicated region
    $region22: #{model_forward.1} parent=1 // pred_check
      _
    $region23: #{model_forward.1} parent=1 // pred_check_branch
      %35 = sbr.rel (0) target = $region25
    $region24: #{model_forward.1} parent=1 // pred_region
      _
    $region25: #{model_forward.1} parent=1 // pred_fallthru
      _
    // Predicated region
    $region26: #{model_forward.1} parent=1 // pred_check
      _
    $region27: #{model_forward.1} parent=1 // pred_check_branch
      %37 = sbr.rel (0) target = $region29
    $region28: #{model_forward.1} parent=1 // pred_region
      %39 = vsyncadd [#allocation3], 0
      %s40 = sshll.u32 %s6, 4
      %s41 = int_to_ptr.hbm [resolvable:$true] %s40
      %s42 = sshll.u32 [#allocation2], 4
      %s43 = int_to_ptr.vmem [resolvable:$true] %s42
      %48 = dma.hbm_to_vmem [thread:$0]  %s41, 2048, %s43, [#allocation3], 64, 64, 4
    $region29: #{model_forward.1} parent=1 // pred_fallthru
      _
    // Predicated region
    $region30: #{model_forward.1} parent=1 // pred_check
      _
    $region31: #{model_forward.1} parent=1 // pred_check_branch
      %50 = sbr.rel (0) target = $region33
    $region32: #{model_forward.1} parent=1 // pred_region
      _
    $region33: #{model_forward.1} parent=1 // pred_fallthru
      _
    // Predicated region
    $region34: #{model_forward.1} parent=1 // pred_check
      _
    $region35: #{model_forward.1} parent=1 // pred_check_branch
      %52 = sbr.rel (0) target = $region37
    $region36: #{model_forward.1} parent=1 // pred_region
      %54 = vsyncadd [#allocation5], 0
      %s55 = sshll.u32 %s8, 4
      %s56 = int_to_ptr.hbm [resolvable:$true] %s55
      %s57 = sshll.u32 [#allocation4], 4
      %s58 = int_to_ptr.vmem [resolvable:$true] %s57
      %63 = dma.hbm_to_vmem [thread:$0]  %s56, 32, %s58, [#allocation5], 16, 16, 1
    $region37: #{model_forward.1} parent=1 // pred_fallthru
      _
    // Predicated region
    $region38: #{model_forward.1} parent=1 // pred_check
      _
    $region39: #{model_forward.1} parent=1 // pred_check_branch
      %65 = sbr.rel (0) target = $region41
    $region40: #{model_forward.1} parent=1 // pred_region
      %67 = vsyncadd [#allocation5], 0
      %s68 = sshll.u32 %s9, 4
      %s69 = int_to_ptr.hbm [resolvable:$true] %s68
      %s70 = sshll.u32 [#allocation6], 4
      %s71 = int_to_ptr.vmem [resolvable:$true] %s70
      %76 = dma.hbm_to_vmem [thread:$0]  %s69, 32, %s71, [#allocation5], 16, 16, 1
    $region41: #{model_forward.1} parent=1 // pred_fallthru
      _
    // Predicated region
    $region42: #{model_forward.1} parent=1 // pred_check
      _
    $region43: #{model_forward.1} parent=1 // pred_check_branch
      %78 = sbr.rel (0) target = $region45
    $region44: #{model_forward.1} parent=1 // pred_region
      %80 = vsyncadd [#allocation8], 0
      %s81 = sshll.u32 %s10, 4
      %s82 = int_to_ptr.hbm [resolvable:$true] %s81
      %s83 = sshll.u32 [#allocation7], 4
      %s84 = int_to_ptr.vmem [resolvable:$true] %s83
      %89 = dma.hbm_to_vmem [thread:$0]  %s82, 8192, %s84, [#allocation8], 256, 256, 16
    $region45: #{model_forward.1} parent=1 // pred_fallthru
      _
    // Predicated region
    $region46: #{model_forward.1} parent=1 // pred_check
      _
    $region47: #{model_forward.1} parent=1 // pred_check_branch
      %91 = sbr.rel (0) target = $region49
    $region48: #{model_forward.1} parent=1 // pred_region
      _
    $region49: #{model_forward.1} parent=1 // pred_fallthru
      _
    // Predicated region
    $region50: #{model_forward.1} parent=1 // pred_check
      _
    $region51: #{model_forward.1} parent=1 // pred_check_branch
      %93 = sbr.rel (0) target = $region53
    $region52: #{model_forward.1} parent=1 // pred_region
      %95 = vsyncadd [#allocation8], 0
      %s96 = sshll.u32 %s12, 4
      %s97 = int_to_ptr.hbm [resolvable:$true] %s96
      %s98 = sshll.u32 [#allocation9], 4
      %s99 = int_to_ptr.vmem [resolvable:$true] %s98
      %104 = dma.hbm_to_vmem [thread:$0]  %s97, 8192, %s99, [#allocation8], 64, 64, 4
    $region53: #{model_forward.1} parent=1 // pred_fallthru
      _
    // Predicated region
    $region54: #{model_forward.1} parent=1 // pred_check
      _
    $region55: #{model_forward.1} parent=1 // pred_check_branch
      %106 = sbr.rel (0) target = $region57
    $region56: #{model_forward.1} parent=1 // pred_region
      _
    $region57: #{model_forward.1} parent=1 // pred_fallthru
      _
    // Predicated region
    $region58: #{model_forward.1} parent=1 // pred_check
      _
    $region59: #{model_forward.1} parent=1 // pred_check_branch
      %108 = sbr.rel (0) target = $region61
    $region60: #{model_forward.1} parent=1 // pred_region
      _
    $region61: #{model_forward.1} parent=1 // pred_fallthru
      _
    // Predicated region
    $region62: #{model_forward.1} parent=1 // pred_check
      _
    $region63: #{model_forward.1} parent=1 // pred_check_branch
      %110 = sbr.rel (0) target = $region65
    $region64: #{model_forward.1} parent=1 // pred_region
      _
    $region65: #{model_forward.1} parent=1 // pred_fallthru
      _
    // Predicated region
    $region66: #{model_forward.1} parent=1 // pred_check
      _
    $region67: #{model_forward.1} parent=1 // pred_check_branch
      %112 = sbr.rel (0) target = $region69
    $region68: #{model_forward.1} parent=1 // pred_region
      %114 = dma.done [#allocation3], 2048
    $region69: #{model_forward.1} parent=1 // pred_fallthru
      _
    // Predicated region
    $region70: #{model_forward.1} parent=1 // pred_check
      _
    $region71: #{model_forward.1} parent=1 // pred_check_branch
      %116 = sbr.rel (0) target = $region73
    $region72: #{model_forward.1} parent=1 // pred_region
      %118 = dma.done [#allocation5], 32
    $region73: #{model_forward.1} parent=1 // pred_fallthru
      _
    // Predicated region
    $region74: #{model_forward.1} parent=1 // pred_check
      _
    $region75: #{model_forward.1} parent=1 // pred_check_branch
      %120 = sbr.rel (0) target = $region77
    $region76: #{model_forward.1} parent=1 // pred_region
      %122 = dma.done [#allocation5], 32
    $region77: #{model_forward.1} parent=1 // pred_fallthru
      _
    // Predicated region
    $region78: #{model_forward.1} parent=1 // pred_check
      _
    $region79: #{model_forward.1} parent=1 // pred_check_branch
      %124 = sbr.rel (0) target = $region81
    $region80: #{model_forward.1} parent=1 // pred_region
      %126 = dma.done [#allocation8], 8192
    $region81: #{model_forward.1} parent=1 // pred_fallthru
      _
    // Predicated region
    $region82: #{model_forward.1} parent=1 // pred_check
      _
    $region83: #{model_forward.1} parent=1 // pred_check_branch
      %128 = sbr.rel (0) target = $region85
    $region84: #{model_forward.1} parent=1 // pred_region
      %130 = dma.done [#allocation8], 8192
    $region85: #{model_forward.1} parent=1 // pred_fallthru
      _
    %v131 = vld [vmem:[%s0] sm:$0xff]
    %v132 = vld [vmem:[%s0 + $0x8] sm:$0xff]
    %v133 = vld [vmem:[%s0 + $0x10] sm:$0xff]
    %v134 = vld [vmem:[%s0 + $0x18] sm:$0xff]
    %v135 = vld [vmem:[%s1] sm:$0xff]
    %v136 = vld [vmem:[%s1 + $0x8] sm:$0xff]
    %v137 = vadd.f32 %v131, %v135
    %v138 = vadd.f32 %v132, %v136
    %v139 = vadd.f32 %v133, %v135
    %v140 = vadd.f32 %v134, %v136
    %v141 = vld [vmem:[%s2] sm:$0xff]
    %v142 = vld [vmem:[%s2 + $0x8] sm:$0xff]
    %v143 = vld [vmem:[%s2 + $0x10] sm:$0xff]
    %v144 = vld [vmem:[%s2 + $0x18] sm:$0xff]
    %v145 = vld [vmem:[%s2 + $0x20] sm:$0xff]
    %v146 = vld [vmem:[%s2 + $0x28] sm:$0xff]
    %v147 = vld [vmem:[%s2 + $0x30] sm:$0xff]
    %v148 = vld [vmem:[%s2 + $0x38] sm:$0xff]
    %v149 = vld [vmem:[%s2 + $0x40] sm:$0xff]
    %v150 = vld [vmem:[%s2 + $0x48] sm:$0xff]
    %v151 = vld [vmem:[%s2 + $0x50] sm:$0xff]
    %v152 = vld [vmem:[%s2 + $0x58] sm:$0xff]
    %v153 = vld [vmem:[%s2 + $0x60] sm:$0xff]
    %v154 = vld [vmem:[%s2 + $0x68] sm:$0xff]
    %v155 = vld [vmem:[%s2 + $0x70] sm:$0xff]
    %v156 = vld [vmem:[%s2 + $0x78] sm:$0xff]
    %v157 = vld [vmem:[%s3] sm:$0x1]
    %v158 = vld [vmem:[%s4] sm:$0x1]
    %159 = vadd.xlane.f32.xlu0 %v137
    %v160 = vpop.xlane.xlu0 %159
    %161 = vadd.xlane.f32.xlu0 %v138
    %v162 = vpop.xlane.xlu0 %161
    %163 = vadd.xlane.f32.xlu0 %v139
    %v164 = vpop.xlane.xlu0 %163
    %165 = vadd.xlane.f32.xlu0 %v140
    %v166 = vpop.xlane.xlu0 %165
    %v167 = vrcp.pop 128.0
    %v168 = vmul.f32 128.0, %v167
    %v169 = vsub.f32 1.0, %v168
    %v170 = vmul.f32 %v167, %v169
    %v171 = vadd.f32 %v167, %v170
    %vm172 = vweird.f32 %v167
    %v173 = vsel %vm172, %v167, %v171
    %v174 = vmul.f32 %v160, %v173
    %v175 = vmul.f32 %v162, %v173
    %v176 = vmul.f32 %v164, %v173
    %v177 = vmul.f32 %v166, %v173
    %v178 = vsub.f32 %v137, %v174
    %v179 = vsub.f32 %v138, %v175
    %v180 = vsub.f32 %v139, %v176
    %v181 = vsub.f32 %v140, %v177
    %v182 = vmul.f32 %v178, %v178
    %v183 = vmul.f32 %v179, %v179
    %v184 = vmul.f32 %v180, %v180
    %v185 = vmul.f32 %v181, %v181
    %186 = vadd.xlane.f32.xlu0 %v182
    %v187 = vpop.xlane.xlu0 %186
    %188 = vadd.xlane.f32.xlu0 %v183
    %v189 = vpop.xlane.xlu0 %188
    %190 = vadd.xlane.f32.xlu0 %v184
    %v191 = vpop.xlane.xlu0 %190
    %192 = vadd.xlane.f32.xlu0 %v185
    %v193 = vpop.xlane.xlu0 %192
    %v194 = vmul.f32 %v187, %v173
    %v195 = vmul.f32 %v189, %v173
    %v196 = vmul.f32 %v191, %v173
    %v197 = vmul.f32 %v193, %v173
    %v198 = vadd.f32 %v194, 1e-05
    %v199 = vadd.f32 %v195, 1e-05
    %v200 = vadd.f32 %v196, 1e-05
    %v201 = vadd.f32 %v197, 1e-05
    %v202 = vrsqrt.pop %v198
    %v203 = vmul.f32 %v202, %v198
    %v204 = vmul.f32 %v203, %v202
    %v205 = vmul.f32 0.5, %v204
    %v206 = vsub.f32 1.5, %v205
    %v207 = vmul.f32 %v202, %v206
    %vm208 = vweird.f32 %v198
    %vm209 = vweird.f32 %v202
    %vm210 = vmor %vm208, %vm209
    %v211 = vsel %vm210, %v202, %v207
    %v212 = vrsqrt.pop %v199
    %v213 = vmul.f32 %v212, %v199
    %v214 = vmul.f32 %v213, %v212
    %v215 = vmul.f32 0.5, %v214
    %v216 = vsub.f32 1.5, %v215
    %v217 = vmul.f32 %v212, %v216
    %vm218 = vweird.f32 %v199
    %vm219 = vweird.f32 %v212
    %vm220 = vmor %vm218, %vm219
    %v221 = vsel %vm220, %v212, %v217
    %v222 = vrsqrt.pop %v200
    %v223 = vmul.f32 %v222, %v200
    %v224 = vmul.f32 %v223, %v222
    %v225 = vmul.f32 0.5, %v224
    %v226 = vsub.f32 1.5, %v225
    %v227 = vmul.f32 %v222, %v226
    %vm228 = vweird.f32 %v200
    %vm229 = vweird.f32 %v222
    %vm230 = vmor %vm228, %vm229
    %v231 = vsel %vm230, %v222, %v227
    %v232 = vrsqrt.pop %v201
    %v233 = vmul.f32 %v232, %v201
    %v234 = vmul.f32 %v233, %v232
    %v235 = vmul.f32 0.5, %v234
    %v236 = vsub.f32 1.5, %v235
    %v237 = vmul.f32 %v232, %v236
    %vm238 = vweird.f32 %v201
    %vm239 = vweird.f32 %v232
    %vm240 = vmor %vm238, %vm239
    %v241 = vsel %vm240, %v232, %v237
    %v242 = vmul.f32 %v178, %v211
    %v243 = vmul.f32 %v179, %v221
    %v244 = vmul.f32 %v180, %v231
    %v245 = vmul.f32 %v181, %v241
    %v247 = vperm.slane %v157, 0
    %v249 = vmul.f32 %v242, %v247
    %v250 = vmul.f32 %v243, %v247
    %v251 = vmul.f32 %v244, %v247
    %v252 = vmul.f32 %v245, %v247
    %v254 = vperm.slane %v158, 0
    %v256 = vadd.f32 %v249, %v254
    %v257 = vadd.f32 %v250, %v254
    %v258 = vadd.f32 %v251, %v254
    %v259 = vadd.f32 %v252, %v254
    %v260 = vpack.c.bf16 %v257, %v256
    %v261 = vpack.c.bf16 %v259, %v258
    %v262 = vld [vmem:[%s5] sm:$0xff]
    %v263 = vld [vmem:[%s5 + $0x8] sm:$0xf]
    %v264 = vld [vmem:[%s5 + $0xc] sm:$0xff]
    %v265 = vld [vmem:[%s5 + $0x14] sm:$0xf]
    %v266 = vld [vmem:[%s5 + $0x18] sm:$0xff]
    %v267 = vld [vmem:[%s5 + $0x20] sm:$0xf]
    %v268 = vld [vmem:[%s5 + $0x24] sm:$0xff]
    %v269 = vld [vmem:[%s5 + $0x2c] sm:$0xf]
    %v270 = vld [vmem:[%s5 + $0x30] sm:$0xff]
    %v271 = vld [vmem:[%s5 + $0x38] sm:$0xf]
    %v272 = vld [vmem:[%s5 + $0x3c] sm:$0xff]
    %v273 = vld [vmem:[%s5 + $0x44] sm:$0xf]
    %v274 = vld [vmem:[%s5 + $0x48] sm:$0xff]
    %v275 = vld [vmem:[%s5 + $0x50] sm:$0xf]
    %v276 = vld [vmem:[%s5 + $0x54] sm:$0xff]
    %v277 = vld [vmem:[%s5 + $0x5c] sm:$0xf]
    %v278 = vld [vmem:[%s5 + $0x60] sm:$0xff]
    %v279 = vld [vmem:[%s5 + $0x68] sm:$0xf]
    %v280 = vld [vmem:[%s5 + $0x6c] sm:$0xff]
    %v281 = vld [vmem:[%s5 + $0x74] sm:$0xf]
    %v282 = vld [vmem:[%s5 + $0x78] sm:$0xff]
    %v283 = vld [vmem:[%s5 + $0x80] sm:$0xf]
    %v284 = vld [vmem:[%s5 + $0x84] sm:$0xff]
    %v285 = vld [vmem:[%s5 + $0x8c] sm:$0xf]
    %v286 = vld [vmem:[%s5 + $0x90] sm:$0xff]
    %v287 = vld [vmem:[%s5 + $0x98] sm:$0xf]
    %v288 = vld [vmem:[%s5 + $0x9c] sm:$0xff]
    %v289 = vld [vmem:[%s5 + $0xa4] sm:$0xf]
    %v290 = vld [vmem:[%s5 + $0xa8] sm:$0xff]
    %v291 = vld [vmem:[%s5 + $0xb0] sm:$0xf]
    %v292 = vld [vmem:[%s5 + $0xb4] sm:$0xff]
    %v293 = vld [vmem:[%s5 + $0xbc] sm:$0xf]
    %v326 = vunpack.c.l.b16 %v262
    %v327 = vunpack.c.h.b16 %v262
    %v328 = vunpack.c.l.b16 %v263
    %v329 = vunpack.c.l.b16 %v264
    %v330 = vunpack.c.h.b16 %v264
    %v331 = vunpack.c.l.b16 %v265
    %v332 = vunpack.c.l.b16 %v266
    %v333 = vunpack.c.h.b16 %v266
    %v334 = vunpack.c.l.b16 %v267
    %v335 = vunpack.c.l.b16 %v268
    %v336 = vunpack.c.h.b16 %v268
    %v337 = vunpack.c.l.b16 %v269
    %v338 = vunpack.c.l.b16 %v270
    %v339 = vunpack.c.h.b16 %v270
    %v340 = vunpack.c.l.b16 %v271
    %v341 = vunpack.c.l.b16 %v272
    %v342 = vunpack.c.h.b16 %v272
    %v343 = vunpack.c.l.b16 %v273
    %v344 = vunpack.c.l.b16 %v274
    %v345 = vunpack.c.h.b16 %v274
    %v346 = vunpack.c.l.b16 %v275
    %v347 = vunpack.c.l.b16 %v276
    %v348 = vunpack.c.h.b16 %v276
    %v349 = vunpack.c.l.b16 %v277
    %v350 = vunpack.c.l.b16 %v278
    %v351 = vunpack.c.h.b16 %v278
    %v352 = vunpack.c.l.b16 %v279
    %v353 = vunpack.c.l.b16 %v280
    %v354 = vunpack.c.h.b16 %v280
    %v355 = vunpack.c.l.b16 %v281
    %v356 = vunpack.c.l.b16 %v282
    %v357 = vunpack.c.h.b16 %v282
    %v358 = vunpack.c.l.b16 %v283
    %v359 = vunpack.c.l.b16 %v284
    %v360 = vunpack.c.h.b16 %v284
    %v361 = vunpack.c.l.b16 %v285
    %v362 = vunpack.c.l.b16 %v286
    %v363 = vunpack.c.h.b16 %v286
    %v364 = vunpack.c.l.b16 %v287
    %v365 = vunpack.c.l.b16 %v288
    %v366 = vunpack.c.h.b16 %v288
    %v367 = vunpack.c.l.b16 %v289
    %v368 = vunpack.c.l.b16 %v290
    %v369 = vunpack.c.h.b16 %v290
    %v370 = vunpack.c.l.b16 %v291
    %v371 = vunpack.c.l.b16 %v292
    %v372 = vunpack.c.h.b16 %v292
    %v373 = vunpack.c.l.b16 %v293
    %v374 = vpack.c.b16 %v329, %v326
    %v375 = vpack.c.b16 %v330, %v327
    %v376 = vpack.c.b16 %v331, %v328
    %v377 = vpack.c.b16 %v335, %v332
    %v378 = vpack.c.b16 %v336, %v333
    %v379 = vpack.c.b16 %v337, %v334
    %v380 = vpack.c.b16 %v341, %v338
    %v381 = vpack.c.b16 %v342, %v339
    %v382 = vpack.c.b16 %v343, %v340
    %v383 = vpack.c.b16 %v347, %v344
    %v384 = vpack.c.b16 %v348, %v345
    %v385 = vpack.c.b16 %v349, %v346
    %v386 = vpack.c.b16 %v353, %v350
    %v387 = vpack.c.b16 %v354, %v351
    %v388 = vpack.c.b16 %v355, %v352
    %v389 = vpack.c.b16 %v359, %v356
    %v390 = vpack.c.b16 %v360, %v357
    %v391 = vpack.c.b16 %v361, %v358
    %v392 = vpack.c.b16 %v365, %v362
    %v393 = vpack.c.b16 %v366, %v363
    %v394 = vpack.c.b16 %v367, %v364
    %v395 = vpack.c.b16 %v371, %v368
    %v396 = vpack.c.b16 %v372, %v369
    %v397 = vpack.c.b16 %v373, %v370
    %422 = vmatpush.bf16.msra.mxu0 %v395
    %423 = vmatpush.bf16.msra.mxu0 %v392
    %424 = vmatpush.bf16.msra.mxu0 %v389
    %425 = vmatpush.bf16.msra.mxu0 %v386
    %426 = vmatpush.bf16.msra.mxu0 %v383
    %427 = vmatpush.bf16.msra.mxu0 %v380
    %428 = vmatpush.bf16.msra.mxu0 %v377
    %429 = vmatpush.bf16.msra.mxu0 %v374
    %430 = vmatmul.bf16.gmra.mxu0 %v260
    %v431 = vpop.f32.mrf.mxu0
    %v432 = vadd.f32 0.0, %v431
    %v433 = vpop.f32.mrf.mxu0
    %v434 = vadd.f32 0.0, %v433
    %435 = vmatmul.bf16.gmra.mxu0 %v261
    %v436 = vpop.f32.mrf.mxu0
    %v437 = vadd.f32 0.0, %v436
    %v438 = vpop.f32.mrf.mxu0
    %v439 = vadd.f32 0.0, %v438
    %440 = vdwg.mxu0
    %441 = vmatpush.bf16.msra.mxu0 %v396
    %442 = vmatpush.bf16.msra.mxu0 %v393
    %443 = vmatpush.bf16.msra.mxu0 %v390
    %444 = vmatpush.bf16.msra.mxu0 %v387
    %445 = vmatpush.bf16.msra.mxu0 %v384
    %446 = vmatpush.bf16.msra.mxu0 %v381
    %447 = vmatpush.bf16.msra.mxu0 %v378
    %448 = vmatpush.bf16.msra.mxu0 %v375
    %449 = vmatmul.bf16.gmra.mxu0 %v260
    %v450 = vpop.f32.mrf.mxu0
    %v451 = vadd.f32 0.0, %v450
    %v452 = vpop.f32.mrf.mxu0
    %v453 = vadd.f32 0.0, %v452
    %454 = vmatmul.bf16.gmra.mxu0 %v261
    %v455 = vpop.f32.mrf.mxu0
    %v456 = vadd.f32 0.0, %v455
    %v457 = vpop.f32.mrf.mxu0
    %v458 = vadd.f32 0.0, %v457
    %459 = vdwg.mxu0
    %460 = vmatpush.bf16.msra.mxu0 %v397
    %461 = vmatpush.bf16.msra.mxu0 %v394
    %462 = vmatpush.bf16.msra.mxu0 %v391
    %463 = vmatpush.bf16.msra.mxu0 %v388
    %464 = vmatpush.bf16.msra.mxu0 %v385
    %465 = vmatpush.bf16.msra.mxu0 %v382
    %466 = vmatpush.bf16.msra.mxu0 %v379
    %467 = vmatpush.bf16.msra.mxu0 %v376
    %468 = vmatmul.bf16.gmra.mxu0 %v260
    %v469 = vpop.f32.mrf.mxu0
    %v470 = vadd.f32 0.0, %v469
    %v471 = vpop.f32.mrf.mxu0
    %v472 = vadd.f32 0.0, %v471
    %473 = vmatmul.bf16.gmra.mxu0 %v261
    %v474 = vpop.f32.mrf.mxu0
    %v475 = vadd.f32 0.0, %v474
    %v476 = vpop.f32.mrf.mxu0
    %v477 = vadd.f32 0.0, %v476
    %478 = vdwg.mxu0
    %v479 = vpack.c.bf16 %v451, %v432
    %v480 = vpack.c.bf16 %v470, %v470
    %v481 = vpack.c.bf16 %v453, %v434
    %v482 = vpack.c.bf16 %v472, %v472
    %v483 = vpack.c.bf16 %v456, %v437
    %v484 = vpack.c.bf16 %v475, %v475
    %v485 = vpack.c.bf16 %v458, %v439
    %v486 = vpack.c.bf16 %v477, %v477
    %v491 = vunpack.c.l.b16 %v479
    %v492 = vunpack.c.l.b16 %v481
    %v493 = vunpack.c.l.b16 %v483
    %v494 = vunpack.c.l.b16 %v485
    %v495 = vpack.c.b16 %v492, %v491
    %v496 = vpack.c.b16 %v494, %v493
    %497 = vrot.lane.b32.xlu0 %v495, 96
    %v498 = vpop.permute.xlu0 %497
    %499 = vrot.lane.b32.xlu0 %v496, 96
    %v500 = vpop.permute.xlu0 %499
    %501 = vrot.lane.b32.xlu0 %v495, 64
    %v502 = vpop.permute.xlu0 %501
    %503 = vrot.lane.b32.xlu0 %v496, 64
    %v504 = vpop.permute.xlu0 %503
    %505 = vrot.lane.b32.xlu0 %v495, 32
    %v506 = vpop.permute.xlu0 %505
    %507 = vrot.lane.b32.xlu0 %v496, 32
    %v508 = vpop.permute.xlu0 %507
    %v509 = vunpack.c.h.b16 %v479
    %v510 = vunpack.c.h.b16 %v481
    %v511 = vunpack.c.h.b16 %v483
    %v512 = vunpack.c.h.b16 %v485
    %v513 = vpack.c.b16 %v510, %v509
    %v514 = vpack.c.b16 %v512, %v511
    %515 = vrot.lane.b32.xlu0 %v513, 96
    %v516 = vpop.permute.xlu0 %515
    %517 = vrot.lane.b32.xlu0 %v514, 96
    %v518 = vpop.permute.xlu0 %517
    %519 = vrot.lane.b32.xlu0 %v513, 64
    %v520 = vpop.permute.xlu0 %519
    %521 = vrot.lane.b32.xlu0 %v514, 64
    %v522 = vpop.permute.xlu0 %521
    %523 = vrot.lane.b32.xlu0 %v513, 32
    %v524 = vpop.permute.xlu0 %523
    %525 = vrot.lane.b32.xlu0 %v514, 32
    %v526 = vpop.permute.xlu0 %525
    %v531 = vunpack.c.l.b16 %v480
    %v532 = vunpack.c.l.b16 %v482
    %v533 = vunpack.c.l.b16 %v484
    %v534 = vunpack.c.l.b16 %v486
    %v535 = vpack.c.b16 %v532, %v531
    %v536 = vpack.c.b16 %v534, %v533
    %539 = vrot.lane.b32.xlu0 %v535, 96
    %v540 = vpop.permute.xlu0 %539
    %541 = vrot.lane.b32.xlu0 %v536, 96
    %v542 = vpop.permute.xlu0 %541
    %545 = vrot.lane.b32.xlu0 %v535, 64
    %v546 = vpop.permute.xlu0 %545
    %547 = vrot.lane.b32.xlu0 %v536, 64
    %v548 = vpop.permute.xlu0 %547
    %551 = vrot.lane.b32.xlu0 %v535, 32
    %v552 = vpop.permute.xlu0 %551
    %553 = vrot.lane.b32.xlu0 %v536, 32
    %v554 = vpop.permute.xlu0 %553
    %vm557 = vcmask 261120
    %v559 = vsel %vm557, %v495, 0
    %v562 = vsel %vm557, %v496, 0
    %v565 = vsel %vm557, %v498, 0
    %v568 = vsel %vm557, %v500, 0
    %v571 = vsel %vm557, %v502, 0
    %v574 = vsel %vm557, %v504, 0
    %v577 = vsel %vm557, %v506, 0
    %v580 = vsel %vm557, %v508, 0
    %v583 = vsel %vm557, %v513, 0
    %v586 = vsel %vm557, %v514, 0
    %v589 = vsel %vm557, %v516, 0
    %v592 = vsel %vm557, %v518, 0
    %v595 = vsel %vm557, %v520, 0
    %v598 = vsel %vm557, %v522, 0
    %v601 = vsel %vm557, %v524, 0
    %v604 = vsel %vm557, %v526, 0
    %606 = vmatpush.bf16.xpose.msra.mxu0 %v604
    %607 = vmatpush.bf16.xpose.msra.mxu0 %v601
    %608 = vmatpush.bf16.xpose.msra.mxu0 %v598
    %609 = vmatpush.bf16.xpose.msra.mxu0 %v595
    %610 = vmatpush.bf16.xpose.msra.mxu0 %v592
    %611 = vmatpush.bf16.xpose.msra.mxu0 %v589
    %612 = vmatpush.bf16.xpose.msra.mxu0 %v586
    %613 = vmatpush.bf16.xpose.msra.mxu0 %v583
    %614 = vmatmul.bf16.gmra.mxu0 %v559
    %v615 = vpop.f32.mrf.mxu0
    %v616 = vadd.f32 %v141, %v615
    %v617 = vpop.f32.mrf.mxu0
    %v618 = vadd.f32 %v142, %v617
    %619 = vmatmul.bf16.gmra.mxu0 %v562
    %v620 = vpop.f32.mrf.mxu0
    %v621 = vadd.f32 %v143, %v620
    %v622 = vpop.f32.mrf.mxu0
    %v623 = vadd.f32 %v144, %v622
    %624 = vmatmul.bf16.gmra.mxu0 %v565
    %v625 = vpop.f32.mrf.mxu0
    %v626 = vadd.f32 %v145, %v625
    %v627 = vpop.f32.mrf.mxu0
    %v628 = vadd.f32 %v146, %v627
    %629 = vmatmul.bf16.gmra.mxu0 %v568
    %v630 = vpop.f32.mrf.mxu0
    %v631 = vadd.f32 %v147, %v630
    %v632 = vpop.f32.mrf.mxu0
    %v633 = vadd.f32 %v148, %v632
    %634 = vmatmul.bf16.gmra.mxu0 %v571
    %v635 = vpop.f32.mrf.mxu0
    %v636 = vadd.f32 %v149, %v635
    %v637 = vpop.f32.mrf.mxu0
    %v638 = vadd.f32 %v150, %v637
    %639 = vmatmul.bf16.gmra.mxu0 %v574
    %v640 = vpop.f32.mrf.mxu0
    %v641 = vadd.f32 %v151, %v640
    %v642 = vpop.f32.mrf.mxu0
    %v643 = vadd.f32 %v152, %v642
    %644 = vmatmul.bf16.gmra.mxu0 %v577
    %v645 = vpop.f32.mrf.mxu0
    %v646 = vadd.f32 %v153, %v645
    %v647 = vpop.f32.mrf.mxu0
    %v648 = vadd.f32 %v154, %v647
    %649 = vmatmul.bf16.gmra.mxu0 %v580
    %v650 = vpop.f32.mrf.mxu0
    %v651 = vadd.f32 %v155, %v650
    %v652 = vpop.f32.mrf.mxu0
    %v653 = vadd.f32 %v156, %v652
    %654 = vdwg.mxu0
    %655 = vmax.xlane.f32.xlu0 %v616
    %v656 = vpop.xlane.xlu0 %655
    %657 = vmax.xlane.f32.xlu0 %v618
    %v658 = vpop.xlane.xlu0 %657
    %659 = vmax.xlane.f32.xlu0 %v621
    %v660 = vpop.xlane.xlu0 %659
    %661 = vmax.xlane.f32.xlu0 %v623
    %v662 = vpop.xlane.xlu0 %661
    %663 = vmax.xlane.f32.xlu0 %v626
    %v664 = vpop.xlane.xlu0 %663
    %665 = vmax.xlane.f32.xlu0 %v628
    %v666 = vpop.xlane.xlu0 %665
    %667 = vmax.xlane.f32.xlu0 %v631
    %v668 = vpop.xlane.xlu0 %667
    %669 = vmax.xlane.f32.xlu0 %v633
    %v670 = vpop.xlane.xlu0 %669
    %671 = vmax.xlane.f32.xlu0 %v636
    %v672 = vpop.xlane.xlu0 %671
    %673 = vmax.xlane.f32.xlu0 %v638
    %v674 = vpop.xlane.xlu0 %673
    %675 = vmax.xlane.f32.xlu0 %v641
    %v676 = vpop.xlane.xlu0 %675
    %677 = vmax.xlane.f32.xlu0 %v643
    %v678 = vpop.xlane.xlu0 %677
    %679 = vmax.xlane.f32.xlu0 %v646
    %v680 = vpop.xlane.xlu0 %679
    %681 = vmax.xlane.f32.xlu0 %v648
    %v682 = vpop.xlane.xlu0 %681
    %683 = vmax.xlane.f32.xlu0 %v651
    %v684 = vpop.xlane.xlu0 %683
    %685 = vmax.xlane.f32.xlu0 %v653
    %v686 = vpop.xlane.xlu0 %685
    %v687 = vsub.f32 %v616, %v656
    %v688 = vsub.f32 %v618, %v658
    %v689 = vsub.f32 %v621, %v660
    %v690 = vsub.f32 %v623, %v662
    %v691 = vsub.f32 %v626, %v664
    %v692 = vsub.f32 %v628, %v666
    %v693 = vsub.f32 %v631, %v668
    %v694 = vsub.f32 %v633, %v670
    %v695 = vsub.f32 %v636, %v672
    %v696 = vsub.f32 %v638, %v674
    %v697 = vsub.f32 %v641, %v676
    %v698 = vsub.f32 %v643, %v678
    %v699 = vsub.f32 %v646, %v680
    %v700 = vsub.f32 %v648, %v682
    %v701 = vsub.f32 %v651, %v684
    %v702 = vsub.f32 %v653, %v686
    %v703 = vmul.f32 %v687, 1.442695
    %v704 = vpow.pop %v703
    %v705 = vmul.f32 %v688, 1.442695
    %v706 = vpow.pop %v705
    %v707 = vmul.f32 %v689, 1.442695
    %v708 = vpow.pop %v707
    %v709 = vmul.f32 %v690, 1.442695
    %v710 = vpow.pop %v709
    %v711 = vmul.f32 %v691, 1.442695
    %v712 = vpow.pop %v711
    %v713 = vmul.f32 %v692, 1.442695
    %v714 = vpow.pop %v713
    %v715 = vmul.f32 %v693, 1.442695
    %v716 = vpow.pop %v715
    %v717 = vmul.f32 %v694, 1.442695
    %v718 = vpow.pop %v717
    %v719 = vmul.f32 %v695, 1.442695
    %v720 = vpow.pop %v719
    %v721 = vmul.f32 %v696, 1.442695
    %v722 = vpow.pop %v721
    %v723 = vmul.f32 %v697, 1.442695
    %v724 = vpow.pop %v723
    %v725 = vmul.f32 %v698, 1.442695
    %v726 = vpow.pop %v725
    %v727 = vmul.f32 %v699, 1.442695
    %v728 = vpow.pop %v727
    %v729 = vmul.f32 %v700, 1.442695
    %v730 = vpow.pop %v729
    %v731 = vmul.f32 %v701, 1.442695
    %v732 = vpow.pop %v731
    %v733 = vmul.f32 %v702, 1.442695
    %v734 = vpow.pop %v733
    %735 = vadd.xlane.f32.xlu0 %v704
    %v736 = vpop.xlane.xlu0 %735
    %737 = vadd.xlane.f32.xlu0 %v706
    %v738 = vpop.xlane.xlu0 %737
    %739 = vadd.xlane.f32.xlu0 %v708
    %v740 = vpop.xlane.xlu0 %739
    %741 = vadd.xlane.f32.xlu0 %v710
    %v742 = vpop.xlane.xlu0 %741
    %743 = vadd.xlane.f32.xlu0 %v712
    %v744 = vpop.xlane.xlu0 %743
    %745 = vadd.xlane.f32.xlu0 %v714
    %v746 = vpop.xlane.xlu0 %745
    %747 = vadd.xlane.f32.xlu0 %v716
    %v748 = vpop.xlane.xlu0 %747
    %749 = vadd.xlane.f32.xlu0 %v718
    %v750 = vpop.xlane.xlu0 %749
    %751 = vadd.xlane.f32.xlu0 %v720
    %v752 = vpop.xlane.xlu0 %751
    %753 = vadd.xlane.f32.xlu0 %v722
    %v754 = vpop.xlane.xlu0 %753
    %755 = vadd.xlane.f32.xlu0 %v724
    %v756 = vpop.xlane.xlu0 %755
    %757 = vadd.xlane.f32.xlu0 %v726
    %v758 = vpop.xlane.xlu0 %757
    %759 = vadd.xlane.f32.xlu0 %v728
    %v760 = vpop.xlane.xlu0 %759
    %761 = vadd.xlane.f32.xlu0 %v730
    %v762 = vpop.xlane.xlu0 %761
    %763 = vadd.xlane.f32.xlu0 %v732
    %v764 = vpop.xlane.xlu0 %763
    %765 = vadd.xlane.f32.xlu0 %v734
    %v766 = vpop.xlane.xlu0 %765
    %v767 = vrcp.pop %v736
    %v768 = vrcp.pop %v738
    %v769 = vrcp.pop %v740
    %v770 = vrcp.pop %v742
    %v771 = vrcp.pop %v744
    %v772 = vrcp.pop %v746
    %v773 = vrcp.pop %v748
    %v774 = vrcp.pop %v750
    %v775 = vrcp.pop %v752
    %v776 = vrcp.pop %v754
    %v777 = vrcp.pop %v756
    %v778 = vrcp.pop %v758
    %v779 = vrcp.pop %v760
    %v780 = vrcp.pop %v762
    %v781 = vrcp.pop %v764
    %v782 = vrcp.pop %v766
    %v783 = vmul.f32 %v704, %v767
    %v784 = vmul.f32 %v706, %v768
    %v785 = vmul.f32 %v708, %v769
    %v786 = vmul.f32 %v710, %v770
    %v787 = vmul.f32 %v712, %v771
    %v788 = vmul.f32 %v714, %v772
    %v789 = vmul.f32 %v716, %v773
    %v790 = vmul.f32 %v718, %v774
    %v791 = vmul.f32 %v720, %v775
    %v792 = vmul.f32 %v722, %v776
    %v793 = vmul.f32 %v724, %v777
    %v794 = vmul.f32 %v726, %v778
    %v795 = vmul.f32 %v728, %v779
    %v796 = vmul.f32 %v730, %v780
    %v797 = vmul.f32 %v732, %v781
    %v798 = vmul.f32 %v734, %v782
    %v799 = vpack.c.bf16 %v784, %v783
    %v800 = vpack.c.bf16 %v786, %v785
    %v801 = vpack.c.bf16 %v788, %v787
    %v802 = vpack.c.bf16 %v790, %v789
    %v803 = vpack.c.bf16 %v792, %v791
    %v804 = vpack.c.bf16 %v794, %v793
    %v805 = vpack.c.bf16 %v796, %v795
    %v806 = vpack.c.bf16 %v798, %v797
    %807 = vmatpush.bf16.msra.mxu0 %v554
    %808 = vmatpush.bf16.msra.mxu0 %v552
    %809 = vmatpush.bf16.msra.mxu0 %v548
    %810 = vmatpush.bf16.msra.mxu0 %v546
    %811 = vmatpush.bf16.msra.mxu0 %v542
    %812 = vmatpush.bf16.msra.mxu0 %v540
    %813 = vmatpush.bf16.msra.mxu0 %v536
    %814 = vmatpush.bf16.msra.mxu0 %v535
    %815 = vmatmul.bf16.gmra.mxu0 %v799
    %v816 = vpop.f32.mrf.mxu0
    %v817 = vadd.f32 0.0, %v816
    %v818 = vpop.f32.mrf.mxu0
    %v819 = vadd.f32 0.0, %v818
    %820 = vmatmul.bf16.gmra.mxu0 %v800
    %v821 = vpop.f32.mrf.mxu0
    %v822 = vadd.f32 0.0, %v821
    %v823 = vpop.f32.mrf.mxu0
    %v824 = vadd.f32 0.0, %v823
    %825 = vmatmul.bf16.gmra.mxu0 %v801
    %v826 = vpop.f32.mrf.mxu0
    %v827 = vadd.f32 0.0, %v826
    %v828 = vpop.f32.mrf.mxu0
    %v829 = vadd.f32 0.0, %v828
    %830 = vmatmul.bf16.gmra.mxu0 %v802
    %v831 = vpop.f32.mrf.mxu0
    %v832 = vadd.f32 0.0, %v831
    %v833 = vpop.f32.mrf.mxu0
    %v834 = vadd.f32 0.0, %v833
    %835 = vmatmul.bf16.gmra.mxu0 %v803
    %v836 = vpop.f32.mrf.mxu0
    %v837 = vadd.f32 0.0, %v836
    %v838 = vpop.f32.mrf.mxu0
    %v839 = vadd.f32 0.0, %v838
    %840 = vmatmul.bf16.gmra.mxu0 %v804
    %v841 = vpop.f32.mrf.mxu0
    %v842 = vadd.f32 0.0, %v841
    %v843 = vpop.f32.mrf.mxu0
    %v844 = vadd.f32 0.0, %v843
    %845 = vmatmul.bf16.gmra.mxu0 %v805
    %v846 = vpop.f32.mrf.mxu0
    %v847 = vadd.f32 0.0, %v846
    %v848 = vpop.f32.mrf.mxu0
    %v849 = vadd.f32 0.0, %v848
    %850 = vmatmul.bf16.gmra.mxu0 %v806
    %v851 = vpop.f32.mrf.mxu0
    %v852 = vadd.f32 0.0, %v851
    %v853 = vpop.f32.mrf.mxu0
    %v854 = vadd.f32 0.0, %v853
    %855 = vdwg.mxu0
    %860 = vrot.lane.b32.xlu0 %v827, 32
    %v861 = vpop.permute.xlu0 %860
    %862 = vrot.lane.b32.xlu0 %v829, 32
    %v863 = vpop.permute.xlu0 %862
    %864 = vrot.lane.b32.xlu0 %v832, 32
    %v865 = vpop.permute.xlu0 %864
    %866 = vrot.lane.b32.xlu0 %v834, 32
    %v867 = vpop.permute.xlu0 %866
    %876 = vrot.lane.b32.xlu0 %v837, 64
    %v877 = vpop.permute.xlu0 %876
    %878 = vrot.lane.b32.xlu0 %v839, 64
    %v879 = vpop.permute.xlu0 %878
    %880 = vrot.lane.b32.xlu0 %v842, 64
    %v881 = vpop.permute.xlu0 %880
    %882 = vrot.lane.b32.xlu0 %v844, 64
    %v883 = vpop.permute.xlu0 %882
    %892 = vrot.lane.b32.xlu0 %v847, 96
    %v893 = vpop.permute.xlu0 %892
    %894 = vrot.lane.b32.xlu0 %v849, 96
    %v895 = vpop.permute.xlu0 %894
    %896 = vrot.lane.b32.xlu0 %v852, 96
    %v897 = vpop.permute.xlu0 %896
    %898 = vrot.lane.b32.xlu0 %v854, 96
    %v899 = vpop.permute.xlu0 %898
    %v904 = vsel %vm557, %v817, %v861
    %v905 = vsel %vm557, %v819, %v863
    %v906 = vsel %vm557, %v822, %v865
    %v907 = vsel %vm557, %v824, %v867
    %vm908 = vcmask 523264
    %v909 = vsel %vm908, %v904, %v877
    %v910 = vsel %vm908, %v905, %v879
    %v911 = vsel %vm908, %v906, %v881
    %v912 = vsel %vm908, %v907, %v883
    %vm913 = vcmask 785408
    %v914 = vsel %vm913, %v909, %v893
    %v915 = vsel %vm913, %v910, %v895
    %v916 = vsel %vm913, %v911, %v897
    %v917 = vsel %vm913, %v912, %v899
    %v918 = vpack.c.bf16 %v915, %v914
    %v919 = vpack.c.bf16 %v917, %v916
    %v920 = vld [vmem:[#allocation2] sm:$0xf]
    %v921 = vld [vmem:[#allocation2 + $0x4] sm:$0xf]
    %v922 = vld [vmem:[#allocation2 + $0x8] sm:$0xf]
    %v923 = vld [vmem:[#allocation2 + $0xc] sm:$0xf]
    %v924 = vld [vmem:[#allocation2 + $0x10] sm:$0xf]
    %v925 = vld [vmem:[#allocation2 + $0x14] sm:$0xf]
    %v926 = vld [vmem:[#allocation2 + $0x18] sm:$0xf]
    %v927 = vld [vmem:[#allocation2 + $0x1c] sm:$0xf]
    %v928 = vld [vmem:[#allocation2 + $0x20] sm:$0xf]
    %v929 = vld [vmem:[#allocation2 + $0x24] sm:$0xf]
    %v930 = vld [vmem:[#allocation2 + $0x28] sm:$0xf]
    %v931 = vld [vmem:[#allocation2 + $0x2c] sm:$0xf]
    %v932 = vld [vmem:[#allocation2 + $0x30] sm:$0xf]
    %v933 = vld [vmem:[#allocation2 + $0x34] sm:$0xf]
    %v934 = vld [vmem:[#allocation2 + $0x38] sm:$0xf]
    %v935 = vld [vmem:[#allocation2 + $0x3c] sm:$0xf]
    %v936 = vld [vmem:[%s7] sm:$0x1]
    %v938 = vperm.slane %v936, 0
    %v956 = vunpack.c.l.b16 %v920
    %v957 = vunpack.c.l.b16 %v921
    %v958 = vunpack.c.l.b16 %v922
    %v959 = vunpack.c.l.b16 %v923
    %v960 = vunpack.c.l.b16 %v924
    %v961 = vunpack.c.l.b16 %v925
    %v962 = vunpack.c.l.b16 %v926
    %v963 = vunpack.c.l.b16 %v927
    %v964 = vunpack.c.l.b16 %v928
    %v965 = vunpack.c.l.b16 %v929
    %v966 = vunpack.c.l.b16 %v930
    %v967 = vunpack.c.l.b16 %v931
    %v968 = vunpack.c.l.b16 %v932
    %v969 = vunpack.c.l.b16 %v933
    %v970 = vunpack.c.l.b16 %v934
    %v971 = vunpack.c.l.b16 %v935
    %v972 = vpack.c.b16 %v957, %v956
    %v973 = vpack.c.b16 %v959, %v958
    %v974 = vpack.c.b16 %v961, %v960
    %v975 = vpack.c.b16 %v963, %v962
    %v976 = vpack.c.b16 %v965, %v964
    %v977 = vpack.c.b16 %v967, %v966
    %v978 = vpack.c.b16 %v969, %v968
    %v979 = vpack.c.b16 %v971, %v970
    %988 = vmatpush.bf16.msra.mxu0 %v979
    %989 = vmatpush.bf16.msra.mxu0 %v978
    %990 = vmatpush.bf16.msra.mxu0 %v977
    %991 = vmatpush.bf16.msra.mxu0 %v976
    %992 = vmatpush.bf16.msra.mxu0 %v975
    %993 = vmatpush.bf16.msra.mxu0 %v974
    %994 = vmatpush.bf16.msra.mxu0 %v973
    %995 = vmatpush.bf16.msra.mxu0 %v972
    %996 = vmatmul.bf16.gmra.mxu0 %v918
    %v997 = vpop.f32.mrf.mxu0
    %v998 = vadd.f32 %v938, %v997
    %v999 = vpop.f32.mrf.mxu0
    %v1000 = vadd.f32 %v938, %v999
    %1001 = vmatmul.bf16.gmra.mxu0 %v919
    %v1002 = vpop.f32.mrf.mxu0
    %v1003 = vadd.f32 %v938, %v1002
    %v1004 = vpop.f32.mrf.mxu0
    %v1005 = vadd.f32 %v938, %v1004
    %1006 = vdwg.mxu0
    %v1007 = vadd.f32 %v137, %v998
    %v1008 = vadd.f32 %v138, %v1000
    %v1009 = vadd.f32 %v139, %v1003
    %v1010 = vadd.f32 %v140, %v1005
    %v1011 = vld [vmem:[#allocation4] sm:$0x1]
    %v1012 = vld [vmem:[#allocation6] sm:$0x1]
    %1013 = vadd.xlane.f32.xlu0 %v1007
    %v1014 = vpop.xlane.xlu0 %1013
    %1015 = vadd.xlane.f32.xlu0 %v1008
    %v1016 = vpop.xlane.xlu0 %1015
    %1017 = vadd.xlane.f32.xlu0 %v1009
    %v1018 = vpop.xlane.xlu0 %1017
    %1019 = vadd.xlane.f32.xlu0 %v1010
    %v1020 = vpop.xlane.xlu0 %1019
    %v1021 = vmul.f32 %v1014, %v173
    %v1022 = vmul.f32 %v1016, %v173
    %v1023 = vmul.f32 %v1018, %v173
    %v1024 = vmul.f32 %v1020, %v173
    %v1025 = vsub.f32 %v1007, %v1021
    %v1026 = vsub.f32 %v1008, %v1022
    %v1027 = vsub.f32 %v1009, %v1023
    %v1028 = vsub.f32 %v1010, %v1024
    %v1029 = vmul.f32 %v1025, %v1025
    %v1030 = vmul.f32 %v1026, %v1026
    %v1031 = vmul.f32 %v1027, %v1027
    %v1032 = vmul.f32 %v1028, %v1028
    %1033 = vadd.xlane.f32.xlu0 %v1029
    %v1034 = vpop.xlane.xlu0 %1033
    %1035 = vadd.xlane.f32.xlu0 %v1030
    %v1036 = vpop.xlane.xlu0 %1035
    %1037 = vadd.xlane.f32.xlu0 %v1031
    %v1038 = vpop.xlane.xlu0 %1037
    %1039 = vadd.xlane.f32.xlu0 %v1032
    %v1040 = vpop.xlane.xlu0 %1039
    %v1041 = vmul.f32 %v1034, %v173
    %v1042 = vmul.f32 %v1036, %v173
    %v1043 = vmul.f32 %v1038, %v173
    %v1044 = vmul.f32 %v1040, %v173
    %v1045 = vadd.f32 %v1041, 1e-05
    %v1046 = vadd.f32 %v1042, 1e-05
    %v1047 = vadd.f32 %v1043, 1e-05
    %v1048 = vadd.f32 %v1044, 1e-05
    %v1049 = vrsqrt.pop %v1045
    %v1050 = vmul.f32 %v1049, %v1045
    %v1051 = vmul.f32 %v1050, %v1049
    %v1052 = vmul.f32 0.5, %v1051
    %v1053 = vsub.f32 1.5, %v1052
    %v1054 = vmul.f32 %v1049, %v1053
    %vm1055 = vweird.f32 %v1045
    %vm1056 = vweird.f32 %v1049
    %vm1057 = vmor %vm1055, %vm1056
    %v1058 = vsel %vm1057, %v1049, %v1054
    %v1059 = vrsqrt.pop %v1046
    %v1060 = vmul.f32 %v1059, %v1046
    %v1061 = vmul.f32 %v1060, %v1059
    %v1062 = vmul.f32 0.5, %v1061
    %v1063 = vsub.f32 1.5, %v1062
    %v1064 = vmul.f32 %v1059, %v1063
    %vm1065 = vweird.f32 %v1046
    %vm1066 = vweird.f32 %v1059
    %vm1067 = vmor %vm1065, %vm1066
    %v1068 = vsel %vm1067, %v1059, %v1064
    %v1069 = vrsqrt.pop %v1047
    %v1070 = vmul.f32 %v1069, %v1047
    %v1071 = vmul.f32 %v1070, %v1069
    %v1072 = vmul.f32 0.5, %v1071
    %v1073 = vsub.f32 1.5, %v1072
    %v1074 = vmul.f32 %v1069, %v1073
    %vm1075 = vweird.f32 %v1047
    %vm1076 = vweird.f32 %v1069
    %vm1077 = vmor %vm1075, %vm1076
    %v1078 = vsel %vm1077, %v1069, %v1074
    %v1079 = vrsqrt.pop %v1048
    %v1080 = vmul.f32 %v1079, %v1048
    %v1081 = vmul.f32 %v1080, %v1079
    %v1082 = vmul.f32 0.5, %v1081
    %v1083 = vsub.f32 1.5, %v1082
    %v1084 = vmul.f32 %v1079, %v1083
    %vm1085 = vweird.f32 %v1048
    %vm1086 = vweird.f32 %v1079
    %vm1087 = vmor %vm1085, %vm1086
    %v1088 = vsel %vm1087, %v1079, %v1084
    %v1089 = vmul.f32 %v1025, %v1058
    %v1090 = vmul.f32 %v1026, %v1068
    %v1091 = vmul.f32 %v1027, %v1078
    %v1092 = vmul.f32 %v1028, %v1088
    %v1094 = vperm.slane %v1011, 0
    %v1096 = vmul.f32 %v1089, %v1094
    %v1097 = vmul.f32 %v1090, %v1094
    %v1098 = vmul.f32 %v1091, %v1094
    %v1099 = vmul.f32 %v1092, %v1094
    %v1101 = vperm.slane %v1012, 0
    %v1103 = vadd.f32 %v1096, %v1101
    %v1104 = vadd.f32 %v1097, %v1101
    %v1105 = vadd.f32 %v1098, %v1101
    %v1106 = vadd.f32 %v1099, %v1101
    %v1107 = vpack.c.bf16 %v1104, %v1103
    %v1108 = vpack.c.bf16 %v1106, %v1105
    %v1109 = vld [vmem:[#allocation7] sm:$0xff]
    %v1110 = vld [vmem:[#allocation7 + $0x8] sm:$0xff]
    %v1111 = vld [vmem:[#allocation7 + $0x10] sm:$0xff]
    %v1112 = vld [vmem:[#allocation7 + $0x18] sm:$0xff]
    %v1113 = vld [vmem:[#allocation7 + $0x20] sm:$0xff]
    %v1114 = vld [vmem:[#allocation7 + $0x28] sm:$0xff]
    %v1115 = vld [vmem:[#allocation7 + $0x30] sm:$0xff]
    %v1116 = vld [vmem:[#allocation7 + $0x38] sm:$0xff]
    %v1117 = vld [vmem:[#allocation7 + $0x40] sm:$0xff]
    %v1118 = vld [vmem:[#allocation7 + $0x48] sm:$0xff]
    %v1119 = vld [vmem:[#allocation7 + $0x50] sm:$0xff]
    %v1120 = vld [vmem:[#allocation7 + $0x58] sm:$0xff]
    %v1121 = vld [vmem:[#allocation7 + $0x60] sm:$0xff]
    %v1122 = vld [vmem:[#allocation7 + $0x68] sm:$0xff]
    %v1123 = vld [vmem:[#allocation7 + $0x70] sm:$0xff]
    %v1124 = vld [vmem:[#allocation7 + $0x78] sm:$0xff]
    %v1125 = vld [vmem:[#allocation7 + $0x80] sm:$0xff]
    %v1126 = vld [vmem:[#allocation7 + $0x88] sm:$0xff]
    %v1127 = vld [vmem:[#allocation7 + $0x90] sm:$0xff]
    %v1128 = vld [vmem:[#allocation7 + $0x98] sm:$0xff]
    %v1129 = vld [vmem:[#allocation7 + $0xa0] sm:$0xff]
    %v1130 = vld [vmem:[#allocation7 + $0xa8] sm:$0xff]
    %v1131 = vld [vmem:[#allocation7 + $0xb0] sm:$0xff]
    %v1132 = vld [vmem:[#allocation7 + $0xb8] sm:$0xff]
    %v1133 = vld [vmem:[#allocation7 + $0xc0] sm:$0xff]
    %v1134 = vld [vmem:[#allocation7 + $0xc8] sm:$0xff]
    %v1135 = vld [vmem:[#allocation7 + $0xd0] sm:$0xff]
    %v1136 = vld [vmem:[#allocation7 + $0xd8] sm:$0xff]
    %v1137 = vld [vmem:[#allocation7 + $0xe0] sm:$0xff]
    %v1138 = vld [vmem:[#allocation7 + $0xe8] sm:$0xff]
    %v1139 = vld [vmem:[#allocation7 + $0xf0] sm:$0xff]
    %v1140 = vld [vmem:[#allocation7 + $0xf8] sm:$0xff]
    %v1141 = vld [vmem:[%s11] sm:$0xf]
    %v1143 = vperm.slane %v1141, 0
    %v1144 = vperm.slane %v1141, 1
    %v1145 = vperm.slane %v1141, 2
    %v1146 = vperm.slane %v1141, 3
    %v1183 = vunpack.c.l.b16 %v1109
    %v1184 = vunpack.c.h.b16 %v1109
    %v1185 = vunpack.c.l.b16 %v1110
    %v1186 = vunpack.c.h.b16 %v1110
    %v1187 = vunpack.c.l.b16 %v1111
    %v1188 = vunpack.c.h.b16 %v1111
    %v1189 = vunpack.c.l.b16 %v1112
    %v1190 = vunpack.c.h.b16 %v1112
    %v1191 = vunpack.c.l.b16 %v1113
    %v1192 = vunpack.c.h.b16 %v1113
    %v1193 = vunpack.c.l.b16 %v1114
    %v1194 = vunpack.c.h.b16 %v1114
    %v1195 = vunpack.c.l.b16 %v1115
    %v1196 = vunpack.c.h.b16 %v1115
    %v1197 = vunpack.c.l.b16 %v1116
    %v1198 = vunpack.c.h.b16 %v1116
    %v1199 = vunpack.c.l.b16 %v1117
    %v1200 = vunpack.c.h.b16 %v1117
    %v1201 = vunpack.c.l.b16 %v1118
    %v1202 = vunpack.c.h.b16 %v1118
    %v1203 = vunpack.c.l.b16 %v1119
    %v1204 = vunpack.c.h.b16 %v1119
    %v1205 = vunpack.c.l.b16 %v1120
    %v1206 = vunpack.c.h.b16 %v1120
    %v1207 = vunpack.c.l.b16 %v1121
    %v1208 = vunpack.c.h.b16 %v1121
    %v1209 = vunpack.c.l.b16 %v1122
    %v1210 = vunpack.c.h.b16 %v1122
    %v1211 = vunpack.c.l.b16 %v1123
    %v1212 = vunpack.c.h.b16 %v1123
    %v1213 = vunpack.c.l.b16 %v1124
    %v1214 = vunpack.c.h.b16 %v1124
    %v1215 = vunpack.c.l.b16 %v1125
    %v1216 = vunpack.c.h.b16 %v1125
    %v1217 = vunpack.c.l.b16 %v1126
    %v1218 = vunpack.c.h.b16 %v1126
    %v1219 = vunpack.c.l.b16 %v1127
    %v1220 = vunpack.c.h.b16 %v1127
    %v1221 = vunpack.c.l.b16 %v1128
    %v1222 = vunpack.c.h.b16 %v1128
    %v1223 = vunpack.c.l.b16 %v1129
    %v1224 = vunpack.c.h.b16 %v1129
    %v1225 = vunpack.c.l.b16 %v1130
    %v1226 = vunpack.c.h.b16 %v1130
    %v1227 = vunpack.c.l.b16 %v1131
    %v1228 = vunpack.c.h.b16 %v1131
    %v1229 = vunpack.c.l.b16 %v1132
    %v1230 = vunpack.c.h.b16 %v1132
    %v1231 = vunpack.c.l.b16 %v1133
    %v1232 = vunpack.c.h.b16 %v1133
    %v1233 = vunpack.c.l.b16 %v1134
    %v1234 = vunpack.c.h.b16 %v1134
    %v1235 = vunpack.c.l.b16 %v1135
    %v1236 = vunpack.c.h.b16 %v1135
    %v1237 = vunpack.c.l.b16 %v1136
    %v1238 = vunpack.c.h.b16 %v1136
    %v1239 = vunpack.c.l.b16 %v1137
    %v1240 = vunpack.c.h.b16 %v1137
    %v1241 = vunpack.c.l.b16 %v1138
    %v1242 = vunpack.c.h.b16 %v1138
    %v1243 = vunpack.c.l.b16 %v1139
    %v1244 = vunpack.c.h.b16 %v1139
    %v1245 = vunpack.c.l.b16 %v1140
    %v1246 = vunpack.c.h.b16 %v1140
    %v1247 = vpack.c.b16 %v1187, %v1183
    %v1248 = vpack.c.b16 %v1188, %v1184
    %v1249 = vpack.c.b16 %v1189, %v1185
    %v1250 = vpack.c.b16 %v1190, %v1186
    %v1251 = vpack.c.b16 %v1195, %v1191
    %v1252 = vpack.c.b16 %v1196, %v1192
    %v1253 = vpack.c.b16 %v1197, %v1193
    %v1254 = vpack.c.b16 %v1198, %v1194
    %v1255 = vpack.c.b16 %v1203, %v1199
    %v1256 = vpack.c.b16 %v1204, %v1200
    %v1257 = vpack.c.b16 %v1205, %v1201
    %v1258 = vpack.c.b16 %v1206, %v1202
    %v1259 = vpack.c.b16 %v1211, %v1207
    %v1260 = vpack.c.b16 %v1212, %v1208
    %v1261 = vpack.c.b16 %v1213, %v1209
    %v1262 = vpack.c.b16 %v1214, %v1210
    %v1263 = vpack.c.b16 %v1219, %v1215
    %v1264 = vpack.c.b16 %v1220, %v1216
    %v1265 = vpack.c.b16 %v1221, %v1217
    %v1266 = vpack.c.b16 %v1222, %v1218
    %v1267 = vpack.c.b16 %v1227, %v1223
    %v1268 = vpack.c.b16 %v1228, %v1224
    %v1269 = vpack.c.b16 %v1229, %v1225
    %v1270 = vpack.c.b16 %v1230, %v1226
    %v1271 = vpack.c.b16 %v1235, %v1231
    %v1272 = vpack.c.b16 %v1236, %v1232
    %v1273 = vpack.c.b16 %v1237, %v1233
    %v1274 = vpack.c.b16 %v1238, %v1234
    %v1275 = vpack.c.b16 %v1243, %v1239
    %v1276 = vpack.c.b16 %v1244, %v1240
    %v1277 = vpack.c.b16 %v1245, %v1241
    %v1278 = vpack.c.b16 %v1246, %v1242
    %1311 = vmatpush.bf16.msra.mxu0 %v1275
    %1312 = vmatpush.bf16.msra.mxu0 %v1271
    %1313 = vmatpush.bf16.msra.mxu0 %v1267
    %1314 = vmatpush.bf16.msra.mxu0 %v1263
    %1315 = vmatpush.bf16.msra.mxu0 %v1259
    %1316 = vmatpush.bf16.msra.mxu0 %v1255
    %1317 = vmatpush.bf16.msra.mxu0 %v1251
    %1318 = vmatpush.bf16.msra.mxu0 %v1247
    %1319 = vmatmul.bf16.gmra.mxu0 %v1107
    %v1320 = vpop.f32.mrf.mxu0
    %v1321 = vadd.f32 %v1143, %v1320
    %v1322 = vpop.f32.mrf.mxu0
    %v1323 = vadd.f32 %v1143, %v1322
    %1324 = vmatmul.bf16.gmra.mxu0 %v1108
    %v1325 = vpop.f32.mrf.mxu0
    %v1326 = vadd.f32 %v1143, %v1325
    %v1327 = vpop.f32.mrf.mxu0
    %v1328 = vadd.f32 %v1143, %v1327
    %1329 = vdwg.mxu0
    %1330 = vmatpush.bf16.msra.mxu0 %v1276
    %1331 = vmatpush.bf16.msra.mxu0 %v1272
    %1332 = vmatpush.bf16.msra.mxu0 %v1268
    %1333 = vmatpush.bf16.msra.mxu0 %v1264
    %1334 = vmatpush.bf16.msra.mxu0 %v1260
    %1335 = vmatpush.bf16.msra.mxu0 %v1256
    %1336 = vmatpush.bf16.msra.mxu0 %v1252
    %1337 = vmatpush.bf16.msra.mxu0 %v1248
    %1338 = vmatmul.bf16.gmra.mxu0 %v1107
    %v1339 = vpop.f32.mrf.mxu0
    %v1340 = vadd.f32 %v1144, %v1339
    %v1341 = vpop.f32.mrf.mxu0
    %v1342 = vadd.f32 %v1144, %v1341
    %1343 = vmatmul.bf16.gmra.mxu0 %v1108
    %v1344 = vpop.f32.mrf.mxu0
    %v1345 = vadd.f32 %v1144, %v1344
    %v1346 = vpop.f32.mrf.mxu0
    %v1347 = vadd.f32 %v1144, %v1346
    %1348 = vdwg.mxu0
    %1349 = vmatpush.bf16.msra.mxu0 %v1277
    %1350 = vmatpush.bf16.msra.mxu0 %v1273
    %1351 = vmatpush.bf16.msra.mxu0 %v1269
    %1352 = vmatpush.bf16.msra.mxu0 %v1265
    %1353 = vmatpush.bf16.msra.mxu0 %v1261
    %1354 = vmatpush.bf16.msra.mxu0 %v1257
    %1355 = vmatpush.bf16.msra.mxu0 %v1253
    %1356 = vmatpush.bf16.msra.mxu0 %v1249
    %1357 = vmatmul.bf16.gmra.mxu0 %v1107
    %v1358 = vpop.f32.mrf.mxu0
    %v1359 = vadd.f32 %v1145, %v1358
    %v1360 = vpop.f32.mrf.mxu0
    %v1361 = vadd.f32 %v1145, %v1360
    %1362 = vmatmul.bf16.gmra.mxu0 %v1108
    %v1363 = vpop.f32.mrf.mxu0
    %v1364 = vadd.f32 %v1145, %v1363
    %v1365 = vpop.f32.mrf.mxu0
    %v1366 = vadd.f32 %v1145, %v1365
    %1367 = vdwg.mxu0
    %1368 = vmatpush.bf16.msra.mxu0 %v1278
    %1369 = vmatpush.bf16.msra.mxu0 %v1274
    %1370 = vmatpush.bf16.msra.mxu0 %v1270
    %1371 = vmatpush.bf16.msra.mxu0 %v1266
    %1372 = vmatpush.bf16.msra.mxu0 %v1262
    %1373 = vmatpush.bf16.msra.mxu0 %v1258
    %1374 = vmatpush.bf16.msra.mxu0 %v1254
    %1375 = vmatpush.bf16.msra.mxu0 %v1250
    %1376 = vmatmul.bf16.gmra.mxu0 %v1107
    %v1377 = vpop.f32.mrf.mxu0
    %v1378 = vadd.f32 %v1146, %v1377
    %v1379 = vpop.f32.mrf.mxu0
    %v1380 = vadd.f32 %v1146, %v1379
    %1381 = vmatmul.bf16.gmra.mxu0 %v1108
    %v1382 = vpop.f32.mrf.mxu0
    %v1383 = vadd.f32 %v1146, %v1382
    %v1384 = vpop.f32.mrf.mxu0
    %v1385 = vadd.f32 %v1146, %v1384
    %1386 = vdwg.mxu0
    %v1387 = vmax.f32 %v1321, 0.0
    %v1388 = vmax.f32 %v1340, 0.0
    %v1389 = vmax.f32 %v1359, 0.0
    %v1390 = vmax.f32 %v1378, 0.0
    %v1391 = vmax.f32 %v1323, 0.0
    %v1392 = vmax.f32 %v1342, 0.0
    %v1393 = vmax.f32 %v1361, 0.0
    %v1394 = vmax.f32 %v1380, 0.0
    %v1395 = vmax.f32 %v1326, 0.0
    %v1396 = vmax.f32 %v1345, 0.0
    %v1397 = vmax.f32 %v1364, 0.0
    %v1398 = vmax.f32 %v1383, 0.0
    %v1399 = vmax.f32 %v1328, 0.0
    %v1400 = vmax.f32 %v1347, 0.0
    %v1401 = vmax.f32 %v1366, 0.0
    %v1402 = vmax.f32 %v1385, 0.0
    %v1403 = vpack.c.bf16 %v1391, %v1387
    %v1404 = vpack.c.bf16 %v1392, %v1388
    %v1405 = vpack.c.bf16 %v1393, %v1389
    %v1406 = vpack.c.bf16 %v1394, %v1390
    %v1407 = vpack.c.bf16 %v1399, %v1395
    %v1408 = vpack.c.bf16 %v1400, %v1396
    %v1409 = vpack.c.bf16 %v1401, %v1397
    %v1410 = vpack.c.bf16 %v1402, %v1398
    %v1411 = vld [vmem:[#allocation9] sm:$0xf]
    %v1412 = vld [vmem:[#allocation9 + $0x4] sm:$0xf]
    %v1413 = vld [vmem:[#allocation9 + $0x8] sm:$0xf]
    %v1414 = vld [vmem:[#allocation9 + $0xc] sm:$0xf]
    %v1415 = vld [vmem:[#allocation9 + $0x10] sm:$0xf]
    %v1416 = vld [vmem:[#allocation9 + $0x14] sm:$0xf]
    %v1417 = vld [vmem:[#allocation9 + $0x18] sm:$0xf]
    %v1418 = vld [vmem:[#allocation9 + $0x1c] sm:$0xf]
    %v1419 = vld [vmem:[#allocation9 + $0x20] sm:$0xf]
    %v1420 = vld [vmem:[#allocation9 + $0x24] sm:$0xf]
    %v1421 = vld [vmem:[#allocation9 + $0x28] sm:$0xf]
    %v1422 = vld [vmem:[#allocation9 + $0x2c] sm:$0xf]
    %v1423 = vld [vmem:[#allocation9 + $0x30] sm:$0xf]
    %v1424 = vld [vmem:[#allocation9 + $0x34] sm:$0xf]
    %v1425 = vld [vmem:[#allocation9 + $0x38] sm:$0xf]
    %v1426 = vld [vmem:[#allocation9 + $0x3c] sm:$0xf]
    %v1427 = vld [vmem:[#allocation9 + $0x40] sm:$0xf]
    %v1428 = vld [vmem:[#allocation9 + $0x44] sm:$0xf]
    %v1429 = vld [vmem:[#allocation9 + $0x48] sm:$0xf]
    %v1430 = vld [vmem:[#allocation9 + $0x4c] sm:$0xf]
    %v1431 = vld [vmem:[#allocation9 + $0x50] sm:$0xf]
    %v1432 = vld [vmem:[#allocation9 + $0x54] sm:$0xf]
    %v1433 = vld [vmem:[#allocation9 + $0x58] sm:$0xf]
    %v1434 = vld [vmem:[#allocation9 + $0x5c] sm:$0xf]
    %v1435 = vld [vmem:[#allocation9 + $0x60] sm:$0xf]
    %v1436 = vld [vmem:[#allocation9 + $0x64] sm:$0xf]
    %v1437 = vld [vmem:[#allocation9 + $0x68] sm:$0xf]
    %v1438 = vld [vmem:[#allocation9 + $0x6c] sm:$0xf]
    %v1439 = vld [vmem:[#allocation9 + $0x70] sm:$0xf]
    %v1440 = vld [vmem:[#allocation9 + $0x74] sm:$0xf]
    %v1441 = vld [vmem:[#allocation9 + $0x78] sm:$0xf]
    %v1442 = vld [vmem:[#allocation9 + $0x7c] sm:$0xf]
    %v1443 = vld [vmem:[#allocation9 + $0x80] sm:$0xf]
    %v1444 = vld [vmem:[#allocation9 + $0x84] sm:$0xf]
    %v1445 = vld [vmem:[#allocation9 + $0x88] sm:$0xf]
    %v1446 = vld [vmem:[#allocation9 + $0x8c] sm:$0xf]
    %v1447 = vld [vmem:[#allocation9 + $0x90] sm:$0xf]
    %v1448 = vld [vmem:[#allocation9 + $0x94] sm:$0xf]
    %v1449 = vld [vmem:[#allocation9 + $0x98] sm:$0xf]
    %v1450 = vld [vmem:[#allocation9 + $0x9c] sm:$0xf]
    %v1451 = vld [vmem:[#allocation9 + $0xa0] sm:$0xf]
    %v1452 = vld [vmem:[#allocation9 + $0xa4] sm:$0xf]
    %v1453 = vld [vmem:[#allocation9 + $0xa8] sm:$0xf]
    %v1454 = vld [vmem:[#allocation9 + $0xac] sm:$0xf]
    %v1455 = vld [vmem:[#allocation9 + $0xb0] sm:$0xf]
    %v1456 = vld [vmem:[#allocation9 + $0xb4] sm:$0xf]
    %v1457 = vld [vmem:[#allocation9 + $0xb8] sm:$0xf]
    %v1458 = vld [vmem:[#allocation9 + $0xbc] sm:$0xf]
    %v1459 = vld [vmem:[#allocation9 + $0xc0] sm:$0xf]
    %v1460 = vld [vmem:[#allocation9 + $0xc4] sm:$0xf]
    %v1461 = vld [vmem:[#allocation9 + $0xc8] sm:$0xf]
    %v1462 = vld [vmem:[#allocation9 + $0xcc] sm:$0xf]
    %v1463 = vld [vmem:[#allocation9 + $0xd0] sm:$0xf]
    %v1464 = vld [vmem:[#allocation9 + $0xd4] sm:$0xf]
    %v1465 = vld [vmem:[#allocation9 + $0xd8] sm:$0xf]
    %v1466 = vld [vmem:[#allocation9 + $0xdc] sm:$0xf]
    %v1467 = vld [vmem:[#allocation9 + $0xe0] sm:$0xf]
    %v1468 = vld [vmem:[#allocation9 + $0xe4] sm:$0xf]
    %v1469 = vld [vmem:[#allocation9 + $0xe8] sm:$0xf]
    %v1470 = vld [vmem:[#allocation9 + $0xec] sm:$0xf]
    %v1471 = vld [vmem:[#allocation9 + $0xf0] sm:$0xf]
    %v1472 = vld [vmem:[#allocation9 + $0xf4] sm:$0xf]
    %v1473 = vld [vmem:[#allocation9 + $0xf8] sm:$0xf]
    %v1474 = vld [vmem:[#allocation9 + $0xfc] sm:$0xf]
    %v1475 = vld [vmem:[%s13] sm:$0x1]
    %v1477 = vperm.slane %v1475, 0
    %v1543 = vunpack.c.l.b16 %v1411
    %v1544 = vunpack.c.l.b16 %v1412
    %v1545 = vunpack.c.l.b16 %v1413
    %v1546 = vunpack.c.l.b16 %v1414
    %v1547 = vunpack.c.l.b16 %v1415
    %v1548 = vunpack.c.l.b16 %v1416
    %v1549 = vunpack.c.l.b16 %v1417
    %v1550 = vunpack.c.l.b16 %v1418
    %v1551 = vunpack.c.l.b16 %v1419
    %v1552 = vunpack.c.l.b16 %v1420
    %v1553 = vunpack.c.l.b16 %v1421
    %v1554 = vunpack.c.l.b16 %v1422
    %v1555 = vunpack.c.l.b16 %v1423
    %v1556 = vunpack.c.l.b16 %v1424
    %v1557 = vunpack.c.l.b16 %v1425
    %v1558 = vunpack.c.l.b16 %v1426
    %v1559 = vunpack.c.l.b16 %v1427
    %v1560 = vunpack.c.l.b16 %v1428
    %v1561 = vunpack.c.l.b16 %v1429
    %v1562 = vunpack.c.l.b16 %v1430
    %v1563 = vunpack.c.l.b16 %v1431
    %v1564 = vunpack.c.l.b16 %v1432
    %v1565 = vunpack.c.l.b16 %v1433
    %v1566 = vunpack.c.l.b16 %v1434
    %v1567 = vunpack.c.l.b16 %v1435
    %v1568 = vunpack.c.l.b16 %v1436
    %v1569 = vunpack.c.l.b16 %v1437
    %v1570 = vunpack.c.l.b16 %v1438
    %v1571 = vunpack.c.l.b16 %v1439
    %v1572 = vunpack.c.l.b16 %v1440
    %v1573 = vunpack.c.l.b16 %v1441
    %v1574 = vunpack.c.l.b16 %v1442
    %v1575 = vunpack.c.l.b16 %v1443
    %v1576 = vunpack.c.l.b16 %v1444
    %v1577 = vunpack.c.l.b16 %v1445
    %v1578 = vunpack.c.l.b16 %v1446
    %v1579 = vunpack.c.l.b16 %v1447
    %v1580 = vunpack.c.l.b16 %v1448
    %v1581 = vunpack.c.l.b16 %v1449
    %v1582 = vunpack.c.l.b16 %v1450
    %v1583 = vunpack.c.l.b16 %v1451
    %v1584 = vunpack.c.l.b16 %v1452
    %v1585 = vunpack.c.l.b16 %v1453
    %v1586 = vunpack.c.l.b16 %v1454
    %v1587 = vunpack.c.l.b16 %v1455
    %v1588 = vunpack.c.l.b16 %v1456
    %v1589 = vunpack.c.l.b16 %v1457
    %v1590 = vunpack.c.l.b16 %v1458
    %v1591 = vunpack.c.l.b16 %v1459
    %v1592 = vunpack.c.l.b16 %v1460
    %v1593 = vunpack.c.l.b16 %v1461
    %v1594 = vunpack.c.l.b16 %v1462
    %v1595 = vunpack.c.l.b16 %v1463
    %v1596 = vunpack.c.l.b16 %v1464
    %v1597 = vunpack.c.l.b16 %v1465
    %v1598 = vunpack.c.l.b16 %v1466
    %v1599 = vunpack.c.l.b16 %v1467
    %v1600 = vunpack.c.l.b16 %v1468
    %v1601 = vunpack.c.l.b16 %v1469
    %v1602 = vunpack.c.l.b16 %v1470
    %v1603 = vunpack.c.l.b16 %v1471
    %v1604 = vunpack.c.l.b16 %v1472
    %v1605 = vunpack.c.l.b16 %v1473
    %v1606 = vunpack.c.l.b16 %v1474
    %v1607 = vpack.c.b16 %v1544, %v1543
    %v1608 = vpack.c.b16 %v1546, %v1545
    %v1609 = vpack.c.b16 %v1548, %v1547
    %v1610 = vpack.c.b16 %v1550, %v1549
    %v1611 = vpack.c.b16 %v1552, %v1551
    %v1612 = vpack.c.b16 %v1554, %v1553
    %v1613 = vpack.c.b16 %v1556, %v1555
    %v1614 = vpack.c.b16 %v1558, %v1557
    %v1615 = vpack.c.b16 %v1560, %v1559
    %v1616 = vpack.c.b16 %v1562, %v1561
    %v1617 = vpack.c.b16 %v1564, %v1563
    %v1618 = vpack.c.b16 %v1566, %v1565
    %v1619 = vpack.c.b16 %v1568, %v1567
    %v1620 = vpack.c.b16 %v1570, %v1569
    %v1621 = vpack.c.b16 %v1572, %v1571
    %v1622 = vpack.c.b16 %v1574, %v1573
    %v1623 = vpack.c.b16 %v1576, %v1575
    %v1624 = vpack.c.b16 %v1578, %v1577
    %v1625 = vpack.c.b16 %v1580, %v1579
    %v1626 = vpack.c.b16 %v1582, %v1581
    %v1627 = vpack.c.b16 %v1584, %v1583
    %v1628 = vpack.c.b16 %v1586, %v1585
    %v1629 = vpack.c.b16 %v1588, %v1587
    %v1630 = vpack.c.b16 %v1590, %v1589
    %v1631 = vpack.c.b16 %v1592, %v1591
    %v1632 = vpack.c.b16 %v1594, %v1593
    %v1633 = vpack.c.b16 %v1596, %v1595
    %v1634 = vpack.c.b16 %v1598, %v1597
    %v1635 = vpack.c.b16 %v1600, %v1599
    %v1636 = vpack.c.b16 %v1602, %v1601
    %v1637 = vpack.c.b16 %v1604, %v1603
    %v1638 = vpack.c.b16 %v1606, %v1605
    %1671 = vmatpush.bf16.msra.mxu0 %v1614
    %1672 = vmatpush.bf16.msra.mxu0 %v1613
    %1673 = vmatpush.bf16.msra.mxu0 %v1612
    %1674 = vmatpush.bf16.msra.mxu0 %v1611
    %1675 = vmatpush.bf16.msra.mxu0 %v1610
    %1676 = vmatpush.bf16.msra.mxu0 %v1609
    %1677 = vmatpush.bf16.msra.mxu0 %v1608
    %1678 = vmatpush.bf16.msra.mxu0 %v1607
    %1679 = vmatmul.bf16.gmra.mxu0 %v1403
    %v1680 = vpop.f32.mrf.mxu0
    %v1681 = vadd.f32 %v1477, %v1680
    %v1682 = vpop.f32.mrf.mxu0
    %v1683 = vadd.f32 %v1477, %v1682
    %1684 = vmatmul.bf16.gmra.mxu0 %v1407
    %v1685 = vpop.f32.mrf.mxu0
    %v1686 = vadd.f32 %v1477, %v1685
    %v1687 = vpop.f32.mrf.mxu0
    %v1688 = vadd.f32 %v1477, %v1687
    %1689 = vdwg.mxu0
    %1690 = vmatpush.bf16.msra.mxu0 %v1622
    %1691 = vmatpush.bf16.msra.mxu0 %v1621
    %1692 = vmatpush.bf16.msra.mxu0 %v1620
    %1693 = vmatpush.bf16.msra.mxu0 %v1619
    %1694 = vmatpush.bf16.msra.mxu0 %v1618
    %1695 = vmatpush.bf16.msra.mxu0 %v1617
    %1696 = vmatpush.bf16.msra.mxu0 %v1616
    %1697 = vmatpush.bf16.msra.mxu0 %v1615
    %1698 = vmatmul.bf16.gmra.mxu0 %v1404
    %v1699 = vpop.f32.mrf.mxu0
    %v1700 = vadd.f32 %v1681, %v1699
    %v1701 = vpop.f32.mrf.mxu0
    %v1702 = vadd.f32 %v1683, %v1701
    %1703 = vmatmul.bf16.gmra.mxu0 %v1408
    %v1704 = vpop.f32.mrf.mxu0
    %v1705 = vadd.f32 %v1686, %v1704
    %v1706 = vpop.f32.mrf.mxu0
    %v1707 = vadd.f32 %v1688, %v1706
    %1708 = vdwg.mxu0
    %1709 = vmatpush.bf16.msra.mxu0 %v1630
    %1710 = vmatpush.bf16.msra.mxu0 %v1629
    %1711 = vmatpush.bf16.msra.mxu0 %v1628
    %1712 = vmatpush.bf16.msra.mxu0 %v1627
    %1713 = vmatpush.bf16.msra.mxu0 %v1626
    %1714 = vmatpush.bf16.msra.mxu0 %v1625
    %1715 = vmatpush.bf16.msra.mxu0 %v1624
    %1716 = vmatpush.bf16.msra.mxu0 %v1623
    %1717 = vmatmul.bf16.gmra.mxu0 %v1405
    %v1718 = vpop.f32.mrf.mxu0
    %v1719 = vadd.f32 %v1700, %v1718
    %v1720 = vpop.f32.mrf.mxu0
    %v1721 = vadd.f32 %v1702, %v1720
    %1722 = vmatmul.bf16.gmra.mxu0 %v1409
    %v1723 = vpop.f32.mrf.mxu0
    %v1724 = vadd.f32 %v1705, %v1723
    %v1725 = vpop.f32.mrf.mxu0
    %v1726 = vadd.f32 %v1707, %v1725
    %1727 = vdwg.mxu0
    %1728 = vmatpush.bf16.msra.mxu0 %v1638
    %1729 = vmatpush.bf16.msra.mxu0 %v1637
    %1730 = vmatpush.bf16.msra.mxu0 %v1636
    %1731 = vmatpush.bf16.msra.mxu0 %v1635
    %1732 = vmatpush.bf16.msra.mxu0 %v1634
    %1733 = vmatpush.bf16.msra.mxu0 %v1633
    %1734 = vmatpush.bf16.msra.mxu0 %v1632
    %1735 = vmatpush.bf16.msra.mxu0 %v1631
    %1736 = vmatmul.bf16.gmra.mxu0 %v1406
    %v1737 = vpop.f32.mrf.mxu0
    %v1738 = vadd.f32 %v1719, %v1737
    %v1739 = vpop.f32.mrf.mxu0
    %v1740 = vadd.f32 %v1721, %v1739
    %1741 = vmatmul.bf16.gmra.mxu0 %v1410
    %v1742 = vpop.f32.mrf.mxu0
    %v1743 = vadd.f32 %v1724, %v1742
    %v1744 = vpop.f32.mrf.mxu0
    %v1745 = vadd.f32 %v1726, %v1744
    %1746 = vdwg.mxu0
    %v1747 = vadd.f32 %v1007, %v1738
    %v1748 = vadd.f32 %v1008, %v1740
    %v1749 = vadd.f32 %v1009, %v1743
    %v1750 = vadd.f32 %v1010, %v1745
    %s1751 = scalar_lea.vmem %s3, 1
    %v1752 = vld [vmem:[%s1751] sm:$0x1]
    %s1753 = scalar_lea.vmem %s4, 1
    %v1754 = vld [vmem:[%s1753] sm:$0x1]
    %1755 = vadd.xlane.f32.xlu0 %v1747
    %v1756 = vpop.xlane.xlu0 %1755
    %1757 = vadd.xlane.f32.xlu0 %v1748
    %v1758 = vpop.xlane.xlu0 %1757
    %1759 = vadd.xlane.f32.xlu0 %v1749
    %v1760 = vpop.xlane.xlu0 %1759
    %1761 = vadd.xlane.f32.xlu0 %v1750
    %v1762 = vpop.xlane.xlu0 %1761
    %v1763 = vmul.f32 %v1756, %v173
    %v1764 = vmul.f32 %v1758, %v173
    %v1765 = vmul.f32 %v1760, %v173
    %v1766 = vmul.f32 %v1762, %v173
    %v1767 = vsub.f32 %v1747, %v1763
    %v1768 = vsub.f32 %v1748, %v1764
    %v1769 = vsub.f32 %v1749, %v1765
    %v1770 = vsub.f32 %v1750, %v1766
    %v1771 = vmul.f32 %v1767, %v1767
    %v1772 = vmul.f32 %v1768, %v1768
    %v1773 = vmul.f32 %v1769, %v1769
    %v1774 = vmul.f32 %v1770, %v1770
    %1775 = vadd.xlane.f32.xlu0 %v1771
    %v1776 = vpop.xlane.xlu0 %1775
    %1777 = vadd.xlane.f32.xlu0 %v1772
    %v1778 = vpop.xlane.xlu0 %1777
    %1779 = vadd.xlane.f32.xlu0 %v1773
    %v1780 = vpop.xlane.xlu0 %1779
    %1781 = vadd.xlane.f32.xlu0 %v1774
    %v1782 = vpop.xlane.xlu0 %1781
    %v1783 = vmul.f32 %v1776, %v173
    %v1784 = vmul.f32 %v1778, %v173
    %v1785 = vmul.f32 %v1780, %v173
    %v1786 = vmul.f32 %v1782, %v173
    %v1787 = vadd.f32 %v1783, 1e-05
    %v1788 = vadd.f32 %v1784, 1e-05
    %v1789 = vadd.f32 %v1785, 1e-05
    %v1790 = vadd.f32 %v1786, 1e-05
    %v1791 = vrsqrt.pop %v1787
    %v1792 = vmul.f32 %v1791, %v1787
    %v1793 = vmul.f32 %v1792, %v1791
    %v1794 = vmul.f32 0.5, %v1793
    %v1795 = vsub.f32 1.5, %v1794
    %v1796 = vmul.f32 %v1791, %v1795
    %vm1797 = vweird.f32 %v1787
    %vm1798 = vweird.f32 %v1791
    %vm1799 = vmor %vm1797, %vm1798
    %v1800 = vsel %vm1799, %v1791, %v1796
    %v1801 = vrsqrt.pop %v1788
    %v1802 = vmul.f32 %v1801, %v1788
    %v1803 = vmul.f32 %v1802, %v1801
    %v1804 = vmul.f32 0.5, %v1803
    %v1805 = vsub.f32 1.5, %v1804
    %v1806 = vmul.f32 %v1801, %v1805
    %vm1807 = vweird.f32 %v1788
    %vm1808 = vweird.f32 %v1801
    %vm1809 = vmor %vm1807, %vm1808
    %v1810 = vsel %vm1809, %v1801, %v1806
    %v1811 = vrsqrt.pop %v1789
    %v1812 = vmul.f32 %v1811, %v1789
    %v1813 = vmul.f32 %v1812, %v1811
    %v1814 = vmul.f32 0.5, %v1813
    %v1815 = vsub.f32 1.5, %v1814
    %v1816 = vmul.f32 %v1811, %v1815
    %vm1817 = vweird.f32 %v1789
    %vm1818 = vweird.f32 %v1811
    %vm1819 = vmor %vm1817, %vm1818
    %v1820 = vsel %vm1819, %v1811, %v1816
    %v1821 = vrsqrt.pop %v1790
    %v1822 = vmul.f32 %v1821, %v1790
    %v1823 = vmul.f32 %v1822, %v1821
    %v1824 = vmul.f32 0.5, %v1823
    %v1825 = vsub.f32 1.5, %v1824
    %v1826 = vmul.f32 %v1821, %v1825
    %vm1827 = vweird.f32 %v1790
    %vm1828 = vweird.f32 %v1821
    %vm1829 = vmor %vm1827, %vm1828
    %v1830 = vsel %vm1829, %v1821, %v1826
    %v1831 = vmul.f32 %v1767, %v1800
    %v1832 = vmul.f32 %v1768, %v1810
    %v1833 = vmul.f32 %v1769, %v1820
    %v1834 = vmul.f32 %v1770, %v1830
    %v1836 = vperm.slane %v1752, 0
    %v1838 = vmul.f32 %v1831, %v1836
    %v1839 = vmul.f32 %v1832, %v1836
    %v1840 = vmul.f32 %v1833, %v1836
    %v1841 = vmul.f32 %v1834, %v1836
    %v1843 = vperm.slane %v1754, 0
    %v1845 = vadd.f32 %v1838, %v1843
    %v1846 = vadd.f32 %v1839, %v1843
    %v1847 = vadd.f32 %v1840, %v1843
    %v1848 = vadd.f32 %v1841, %v1843
    %v1849 = vpack.c.bf16 %v1846, %v1845
    %v1850 = vpack.c.bf16 %v1848, %v1847
    %s1851 = scalar_lea.vmem %s5, 192
    %v1852 = vld [vmem:[%s1851] sm:$0xff]
    %v1853 = vld [vmem:[%s1851 + $0x8] sm:$0xf]
    %v1854 = vld [vmem:[%s1851 + $0xc] sm:$0xff]
    %v1855 = vld [vmem:[%s1851 + $0x14] sm:$0xf]
    %v1856 = vld [vmem:[%s1851 + $0x18] sm:$0xff]
    %v1857 = vld [vmem:[%s1851 + $0x20] sm:$0xf]
    %v1858 = vld [vmem:[%s1851 + $0x24] sm:$0xff]
    %v1859 = vld [vmem:[%s1851 + $0x2c] sm:$0xf]
    %v1860 = vld [vmem:[%s1851 + $0x30] sm:$0xff]
    %v1861 = vld [vmem:[%s1851 + $0x38] sm:$0xf]
    %v1862 = vld [vmem:[%s1851 + $0x3c] sm:$0xff]
    %v1863 = vld [vmem:[%s1851 + $0x44] sm:$0xf]
    %v1864 = vld [vmem:[%s1851 + $0x48] sm:$0xff]
    %v1865 = vld [vmem:[%s1851 + $0x50] sm:$0xf]
    %v1866 = vld [vmem:[%s1851 + $0x54] sm:$0xff]
    %v1867 = vld [vmem:[%s1851 + $0x5c] sm:$0xf]
    %v1868 = vld [vmem:[%s1851 + $0x60] sm:$0xff]
    %v1869 = vld [vmem:[%s1851 + $0x68] sm:$0xf]
    %v1870 = vld [vmem:[%s1851 + $0x6c] sm:$0xff]
    %v1871 = vld [vmem:[%s1851 + $0x74] sm:$0xf]
    %v1872 = vld [vmem:[%s1851 + $0x78] sm:$0xff]
    %v1873 = vld [vmem:[%s1851 + $0x80] sm:$0xf]
    %v1874 = vld [vmem:[%s1851 + $0x84] sm:$0xff]
    %v1875 = vld [vmem:[%s1851 + $0x8c] sm:$0xf]
    %v1876 = vld [vmem:[%s1851 + $0x90] sm:$0xff]
    %v1877 = vld [vmem:[%s1851 + $0x98] sm:$0xf]
    %v1878 = vld [vmem:[%s1851 + $0x9c] sm:$0xff]
    %v1879 = vld [vmem:[%s1851 + $0xa4] sm:$0xf]
    %v1880 = vld [vmem:[%s1851 + $0xa8] sm:$0xff]
    %v1881 = vld [vmem:[%s1851 + $0xb0] sm:$0xf]
    %v1882 = vld [vmem:[%s1851 + $0xb4] sm:$0xff]
    %v1883 = vld [vmem:[%s1851 + $0xbc] sm:$0xf]
    %v1916 = vunpack.c.l.b16 %v1852
    %v1917 = vunpack.c.h.b16 %v1852
    %v1918 = vunpack.c.l.b16 %v1853
    %v1919 = vunpack.c.l.b16 %v1854
    %v1920 = vunpack.c.h.b16 %v1854
    %v1921 = vunpack.c.l.b16 %v1855
    %v1922 = vunpack.c.l.b16 %v1856
    %v1923 = vunpack.c.h.b16 %v1856
    %v1924 = vunpack.c.l.b16 %v1857
    %v1925 = vunpack.c.l.b16 %v1858
    %v1926 = vunpack.c.h.b16 %v1858
    %v1927 = vunpack.c.l.b16 %v1859
    %v1928 = vunpack.c.l.b16 %v1860
    %v1929 = vunpack.c.h.b16 %v1860
    %v1930 = vunpack.c.l.b16 %v1861
    %v1931 = vunpack.c.l.b16 %v1862
    %v1932 = vunpack.c.h.b16 %v1862
    %v1933 = vunpack.c.l.b16 %v1863
    %v1934 = vunpack.c.l.b16 %v1864
    %v1935 = vunpack.c.h.b16 %v1864
    %v1936 = vunpack.c.l.b16 %v1865
    %v1937 = vunpack.c.l.b16 %v1866
    %v1938 = vunpack.c.h.b16 %v1866
    %v1939 = vunpack.c.l.b16 %v1867
    %v1940 = vunpack.c.l.b16 %v1868
    %v1941 = vunpack.c.h.b16 %v1868
    %v1942 = vunpack.c.l.b16 %v1869
    %v1943 = vunpack.c.l.b16 %v1870
    %v1944 = vunpack.c.h.b16 %v1870
    %v1945 = vunpack.c.l.b16 %v1871
    %v1946 = vunpack.c.l.b16 %v1872
    %v1947 = vunpack.c.h.b16 %v1872
    %v1948 = vunpack.c.l.b16 %v1873
    %v1949 = vunpack.c.l.b16 %v1874
    %v1950 = vunpack.c.h.b16 %v1874
    %v1951 = vunpack.c.l.b16 %v1875
    %v1952 = vunpack.c.l.b16 %v1876
    %v1953 = vunpack.c.h.b16 %v1876
    %v1954 = vunpack.c.l.b16 %v1877
    %v1955 = vunpack.c.l.b16 %v1878
    %v1956 = vunpack.c.h.b16 %v1878
    %v1957 = vunpack.c.l.b16 %v1879
    %v1958 = vunpack.c.l.b16 %v1880
    %v1959 = vunpack.c.h.b16 %v1880
    %v1960 = vunpack.c.l.b16 %v1881
    %v1961 = vunpack.c.l.b16 %v1882
    %v1962 = vunpack.c.h.b16 %v1882
    %v1963 = vunpack.c.l.b16 %v1883
    %v1964 = vpack.c.b16 %v1919, %v1916
    %v1965 = vpack.c.b16 %v1920, %v1917
    %v1966 = vpack.c.b16 %v1921, %v1918
    %v1967 = vpack.c.b16 %v1925, %v1922
    %v1968 = vpack.c.b16 %v1926, %v1923
    %v1969 = vpack.c.b16 %v1927, %v1924
    %v1970 = vpack.c.b16 %v1931, %v1928
    %v1971 = vpack.c.b16 %v1932, %v1929
    %v1972 = vpack.c.b16 %v1933, %v1930
    %v1973 = vpack.c.b16 %v1937, %v1934
    %v1974 = vpack.c.b16 %v1938, %v1935
    %v1975 = vpack.c.b16 %v1939, %v1936
    %v1976 = vpack.c.b16 %v1943, %v1940
    %v1977 = vpack.c.b16 %v1944, %v1941
    %v1978 = vpack.c.b16 %v1945, %v1942
    %v1979 = vpack.c.b16 %v1949, %v1946
    %v1980 = vpack.c.b16 %v1950, %v1947
    %v1981 = vpack.c.b16 %v1951, %v1948
    %v1982 = vpack.c.b16 %v1955, %v1952
    %v1983 = vpack.c.b16 %v1956, %v1953
    %v1984 = vpack.c.b16 %v1957, %v1954
    %v1985 = vpack.c.b16 %v1961, %v1958
    %v1986 = vpack.c.b16 %v1962, %v1959
    %v1987 = vpack.c.b16 %v1963, %v1960
    %2012 = vmatpush.bf16.msra.mxu0 %v1985
    %2013 = vmatpush.bf16.msra.mxu0 %v1982
    %2014 = vmatpush.bf16.msra.mxu0 %v1979
    %2015 = vmatpush.bf16.msra.mxu0 %v1976
    %2016 = vmatpush.bf16.msra.mxu0 %v1973
    %2017 = vmatpush.bf16.msra.mxu0 %v1970
    %2018 = vmatpush.bf16.msra.mxu0 %v1967
    %2019 = vmatpush.bf16.msra.mxu0 %v1964
    %2020 = vmatmul.bf16.gmra.mxu0 %v1849
    %v2021 = vpop.f32.mrf.mxu0
    %v2022 = vadd.f32 0.0, %v2021
    %v2023 = vpop.f32.mrf.mxu0
    %v2024 = vadd.f32 0.0, %v2023
    %2025 = vmatmul.bf16.gmra.mxu0 %v1850
    %v2026 = vpop.f32.mrf.mxu0
    %v2027 = vadd.f32 0.0, %v2026
    %v2028 = vpop.f32.mrf.mxu0
    %v2029 = vadd.f32 0.0, %v2028
    %2030 = vdwg.mxu0
    %2031 = vmatpush.bf16.msra.mxu0 %v1986
    %2032 = vmatpush.bf16.msra.mxu0 %v1983
    %2033 = vmatpush.bf16.msra.mxu0 %v1980
    %2034 = vmatpush.bf16.msra.mxu0 %v1977
    %2035 = vmatpush.bf16.msra.mxu0 %v1974
    %2036 = vmatpush.bf16.msra.mxu0 %v1971
    %2037 = vmatpush.bf16.msra.mxu0 %v1968
    %2038 = vmatpush.bf16.msra.mxu0 %v1965
    %2039 = vmatmul.bf16.gmra.mxu0 %v1849
    %v2040 = vpop.f32.mrf.mxu0
    %v2041 = vadd.f32 0.0, %v2040
    %v2042 = vpop.f32.mrf.mxu0
    %v2043 = vadd.f32 0.0, %v2042
    %2044 = vmatmul.bf16.gmra.mxu0 %v1850
    %v2045 = vpop.f32.mrf.mxu0
    %v2046 = vadd.f32 0.0, %v2045
    %v2047 = vpop.f32.mrf.mxu0
    %v2048 = vadd.f32 0.0, %v2047
    %2049 = vdwg.mxu0
    %2050 = vmatpush.bf16.msra.mxu0 %v1987
    %2051 = vmatpush.bf16.msra.mxu0 %v1984
    %2052 = vmatpush.bf16.msra.mxu0 %v1981
    %2053 = vmatpush.bf16.msra.mxu0 %v1978
    %2054 = vmatpush.bf16.msra.mxu0 %v1975
    %2055 = vmatpush.bf16.msra.mxu0 %v1972
    %2056 = vmatpush.bf16.msra.mxu0 %v1969
    %2057 = vmatpush.bf16.msra.mxu0 %v1966
    %2058 = vmatmul.bf16.gmra.mxu0 %v1849
    %v2059 = vpop.f32.mrf.mxu0
    %v2060 = vadd.f32 0.0, %v2059
    %v2061 = vpop.f32.mrf.mxu0
    %v2062 = vadd.f32 0.0, %v2061
    %2063 = vmatmul.bf16.gmra.mxu0 %v1850
    %v2064 = vpop.f32.mrf.mxu0
    %v2065 = vadd.f32 0.0, %v2064
    %v2066 = vpop.f32.mrf.mxu0
    %v2067 = vadd.f32 0.0, %v2066
    %2068 = vdwg.mxu0
    %v2069 = vpack.c.bf16 %v2041, %v2022
    %v2070 = vpack.c.bf16 %v2060, %v2060
    %v2071 = vpack.c.bf16 %v2043, %v2024
    %v2072 = vpack.c.bf16 %v2062, %v2062
    %v2073 = vpack.c.bf16 %v2046, %v2027
    %v2074 = vpack.c.bf16 %v2065, %v2065
    %v2075 = vpack.c.bf16 %v2048, %v2029
    %v2076 = vpack.c.bf16 %v2067, %v2067
    %v2081 = vunpack.c.l.b16 %v2069
    %v2082 = vunpack.c.l.b16 %v2071
    %v2083 = vunpack.c.l.b16 %v2073
    %v2084 = vunpack.c.l.b16 %v2075
    %v2085 = vpack.c.b16 %v2082, %v2081
    %v2086 = vpack.c.b16 %v2084, %v2083
    %2087 = vrot.lane.b32.xlu0 %v2085, 96
    %v2088 = vpop.permute.xlu0 %2087
    %2089 = vrot.lane.b32.xlu0 %v2086, 96
    %v2090 = vpop.permute.xlu0 %2089
    %2091 = vrot.lane.b32.xlu0 %v2085, 64
    %v2092 = vpop.permute.xlu0 %2091
    %2093 = vrot.lane.b32.xlu0 %v2086, 64
    %v2094 = vpop.permute.xlu0 %2093
    %2095 = vrot.lane.b32.xlu0 %v2085, 32
    %v2096 = vpop.permute.xlu0 %2095
    %2097 = vrot.lane.b32.xlu0 %v2086, 32
    %v2098 = vpop.permute.xlu0 %2097
    %v2099 = vunpack.c.h.b16 %v2069
    %v2100 = vunpack.c.h.b16 %v2071
    %v2101 = vunpack.c.h.b16 %v2073
    %v2102 = vunpack.c.h.b16 %v2075
    %v2103 = vpack.c.b16 %v2100, %v2099
    %v2104 = vpack.c.b16 %v2102, %v2101
    %2105 = vrot.lane.b32.xlu0 %v2103, 96
    %v2106 = vpop.permute.xlu0 %2105
    %2107 = vrot.lane.b32.xlu0 %v2104, 96
    %v2108 = vpop.permute.xlu0 %2107
    %2109 = vrot.lane.b32.xlu0 %v2103, 64
    %v2110 = vpop.permute.xlu0 %2109
    %2111 = vrot.lane.b32.xlu0 %v2104, 64
    %v2112 = vpop.permute.xlu0 %2111
    %2113 = vrot.lane.b32.xlu0 %v2103, 32
    %v2114 = vpop.permute.xlu0 %2113
    %2115 = vrot.lane.b32.xlu0 %v2104, 32
    %v2116 = vpop.permute.xlu0 %2115
    %v2121 = vunpack.c.l.b16 %v2070
    %v2122 = vunpack.c.l.b16 %v2072
    %v2123 = vunpack.c.l.b16 %v2074
    %v2124 = vunpack.c.l.b16 %v2076
    %v2125 = vpack.c.b16 %v2122, %v2121
    %v2126 = vpack.c.b16 %v2124, %v2123
    %2129 = vrot.lane.b32.xlu0 %v2125, 96
    %v2130 = vpop.permute.xlu0 %2129
    %2131 = vrot.lane.b32.xlu0 %v2126, 96
    %v2132 = vpop.permute.xlu0 %2131
    %2135 = vrot.lane.b32.xlu0 %v2125, 64
    %v2136 = vpop.permute.xlu0 %2135
    %2137 = vrot.lane.b32.xlu0 %v2126, 64
    %v2138 = vpop.permute.xlu0 %2137
    %2141 = vrot.lane.b32.xlu0 %v2125, 32
    %v2142 = vpop.permute.xlu0 %2141
    %2143 = vrot.lane.b32.xlu0 %v2126, 32
    %v2144 = vpop.permute.xlu0 %2143
    %v2148 = vsel %vm557, %v2085, 0
    %v2151 = vsel %vm557, %v2086, 0
    %v2154 = vsel %vm557, %v2088, 0
    %v2157 = vsel %vm557, %v2090, 0
    %v2160 = vsel %vm557, %v2092, 0
    %v2163 = vsel %vm557, %v2094, 0
    %v2166 = vsel %vm557, %v2096, 0
    %v2169 = vsel %vm557, %v2098, 0
    %v2172 = vsel %vm557, %v2103, 0
    %v2175 = vsel %vm557, %v2104, 0
    %v2178 = vsel %vm557, %v2106, 0
    %v2181 = vsel %vm557, %v2108, 0
    %v2184 = vsel %vm557, %v2110, 0
    %v2187 = vsel %vm557, %v2112, 0
    %v2190 = vsel %vm557, %v2114, 0
    %v2193 = vsel %vm557, %v2116, 0
    %2195 = vmatpush.bf16.xpose.msra.mxu0 %v2193
    %2196 = vmatpush.bf16.xpose.msra.mxu0 %v2190
    %2197 = vmatpush.bf16.xpose.msra.mxu0 %v2187
    %2198 = vmatpush.bf16.xpose.msra.mxu0 %v2184
    %2199 = vmatpush.bf16.xpose.msra.mxu0 %v2181
    %2200 = vmatpush.bf16.xpose.msra.mxu0 %v2178
    %2201 = vmatpush.bf16.xpose.msra.mxu0 %v2175
    %2202 = vmatpush.bf16.xpose.msra.mxu0 %v2172
    %2203 = vmatmul.bf16.gmra.mxu0 %v2148
    %v2204 = vpop.f32.mrf.mxu0
    %v2205 = vadd.f32 %v141, %v2204
    %v2206 = vpop.f32.mrf.mxu0
    %v2207 = vadd.f32 %v142, %v2206
    %2208 = vmatmul.bf16.gmra.mxu0 %v2151
    %v2209 = vpop.f32.mrf.mxu0
    %v2210 = vadd.f32 %v143, %v2209
    %v2211 = vpop.f32.mrf.mxu0
    %v2212 = vadd.f32 %v144, %v2211
    %2213 = vmatmul.bf16.gmra.mxu0 %v2154
    %v2214 = vpop.f32.mrf.mxu0
    %v2215 = vadd.f32 %v145, %v2214
    %v2216 = vpop.f32.mrf.mxu0
    %v2217 = vadd.f32 %v146, %v2216
    %2218 = vmatmul.bf16.gmra.mxu0 %v2157
    %v2219 = vpop.f32.mrf.mxu0
    %v2220 = vadd.f32 %v147, %v2219
    %v2221 = vpop.f32.mrf.mxu0
    %v2222 = vadd.f32 %v148, %v2221
    %2223 = vmatmul.bf16.gmra.mxu0 %v2160
    %v2224 = vpop.f32.mrf.mxu0
    %v2225 = vadd.f32 %v149, %v2224
    %v2226 = vpop.f32.mrf.mxu0
    %v2227 = vadd.f32 %v150, %v2226
    %2228 = vmatmul.bf16.gmra.mxu0 %v2163
    %v2229 = vpop.f32.mrf.mxu0
    %v2230 = vadd.f32 %v151, %v2229
    %v2231 = vpop.f32.mrf.mxu0
    %v2232 = vadd.f32 %v152, %v2231
    %2233 = vmatmul.bf16.gmra.mxu0 %v2166
    %v2234 = vpop.f32.mrf.mxu0
    %v2235 = vadd.f32 %v153, %v2234
    %v2236 = vpop.f32.mrf.mxu0
    %v2237 = vadd.f32 %v154, %v2236
    %2238 = vmatmul.bf16.gmra.mxu0 %v2169
    %v2239 = vpop.f32.mrf.mxu0
    %v2240 = vadd.f32 %v155, %v2239
    %v2241 = vpop.f32.mrf.mxu0
    %v2242 = vadd.f32 %v156, %v2241
    %2243 = vdwg.mxu0
    %2244 = vmax.xlane.f32.xlu0 %v2205
    %v2245 = vpop.xlane.xlu0 %2244
    %2246 = vmax.xlane.f32.xlu0 %v2207
    %v2247 = vpop.xlane.xlu0 %2246
    %2248 = vmax.xlane.f32.xlu0 %v2210
    %v2249 = vpop.xlane.xlu0 %2248
    %2250 = vmax.xlane.f32.xlu0 %v2212
    %v2251 = vpop.xlane.xlu0 %2250
    %2252 = vmax.xlane.f32.xlu0 %v2215
    %v2253 = vpop.xlane.xlu0 %2252
    %2254 = vmax.xlane.f32.xlu0 %v2217
    %v2255 = vpop.xlane.xlu0 %2254
    %2256 = vmax.xlane.f32.xlu0 %v2220
    %v2257 = vpop.xlane.xlu0 %2256
    %2258 = vmax.xlane.f32.xlu0 %v2222
    %v2259 = vpop.xlane.xlu0 %2258
    %2260 = vmax.xlane.f32.xlu0 %v2225
    %v2261 = vpop.xlane.xlu0 %2260
    %2262 = vmax.xlane.f32.xlu0 %v2227
    %v2263 = vpop.xlane.xlu0 %2262
    %2264 = vmax.xlane.f32.xlu0 %v2230
    %v2265 = vpop.xlane.xlu0 %2264
    %2266 = vmax.xlane.f32.xlu0 %v2232
    %v2267 = vpop.xlane.xlu0 %2266
    %2268 = vmax.xlane.f32.xlu0 %v2235
    %v2269 = vpop.xlane.xlu0 %2268
    %2270 = vmax.xlane.f32.xlu0 %v2237
    %v2271 = vpop.xlane.xlu0 %2270
    %2272 = vmax.xlane.f32.xlu0 %v2240
    %v2273 = vpop.xlane.xlu0 %2272
    %2274 = vmax.xlane.f32.xlu0 %v2242
    %v2275 = vpop.xlane.xlu0 %2274
    %v2276 = vsub.f32 %v2205, %v2245
    %v2277 = vsub.f32 %v2207, %v2247
    %v2278 = vsub.f32 %v2210, %v2249
    %v2279 = vsub.f32 %v2212, %v2251
    %v2280 = vsub.f32 %v2215, %v2253
    %v2281 = vsub.f32 %v2217, %v2255
    %v2282 = vsub.f32 %v2220, %v2257
    %v2283 = vsub.f32 %v2222, %v2259
    %v2284 = vsub.f32 %v2225, %v2261
    %v2285 = vsub.f32 %v2227, %v2263
    %v2286 = vsub.f32 %v2230, %v2265
    %v2287 = vsub.f32 %v2232, %v2267
    %v2288 = vsub.f32 %v2235, %v2269
    %v2289 = vsub.f32 %v2237, %v2271
    %v2290 = vsub.f32 %v2240, %v2273
    %v2291 = vsub.f32 %v2242, %v2275
    %v2292 = vmul.f32 %v2276, 1.442695
    %v2293 = vpow.pop %v2292
    %v2294 = vmul.f32 %v2277, 1.442695
    %v2295 = vpow.pop %v2294
    %v2296 = vmul.f32 %v2278, 1.442695
    %v2297 = vpow.pop %v2296
    %v2298 = vmul.f32 %v2279, 1.442695
    %v2299 = vpow.pop %v2298
    %v2300 = vmul.f32 %v2280, 1.442695
    %v2301 = vpow.pop %v2300
    %v2302 = vmul.f32 %v2281, 1.442695
    %v2303 = vpow.pop %v2302
    %v2304 = vmul.f32 %v2282, 1.442695
    %v2305 = vpow.pop %v2304
    %v2306 = vmul.f32 %v2283, 1.442695
    %v2307 = vpow.pop %v2306
    %v2308 = vmul.f32 %v2284, 1.442695
    %v2309 = vpow.pop %v2308
    %v2310 = vmul.f32 %v2285, 1.442695
    %v2311 = vpow.pop %v2310
    %v2312 = vmul.f32 %v2286, 1.442695
    %v2313 = vpow.pop %v2312
    %v2314 = vmul.f32 %v2287, 1.442695
    %v2315 = vpow.pop %v2314
    %v2316 = vmul.f32 %v2288, 1.442695
    %v2317 = vpow.pop %v2316
    %v2318 = vmul.f32 %v2289, 1.442695
    %v2319 = vpow.pop %v2318
    %v2320 = vmul.f32 %v2290, 1.442695
    %v2321 = vpow.pop %v2320
    %v2322 = vmul.f32 %v2291, 1.442695
    %v2323 = vpow.pop %v2322
    %2324 = vadd.xlane.f32.xlu0 %v2293
    %v2325 = vpop.xlane.xlu0 %2324
    %2326 = vadd.xlane.f32.xlu0 %v2295
    %v2327 = vpop.xlane.xlu0 %2326
    %2328 = vadd.xlane.f32.xlu0 %v2297
    %v2329 = vpop.xlane.xlu0 %2328
    %2330 = vadd.xlane.f32.xlu0 %v2299
    %v2331 = vpop.xlane.xlu0 %2330
    %2332 = vadd.xlane.f32.xlu0 %v2301
    %v2333 = vpop.xlane.xlu0 %2332
    %2334 = vadd.xlane.f32.xlu0 %v2303
    %v2335 = vpop.xlane.xlu0 %2334
    %2336 = vadd.xlane.f32.xlu0 %v2305
    %v2337 = vpop.xlane.xlu0 %2336
    %2338 = vadd.xlane.f32.xlu0 %v2307
    %v2339 = vpop.xlane.xlu0 %2338
    %2340 = vadd.xlane.f32.xlu0 %v2309
    %v2341 = vpop.xlane.xlu0 %2340
    %2342 = vadd.xlane.f32.xlu0 %v2311
    %v2343 = vpop.xlane.xlu0 %2342
    %2344 = vadd.xlane.f32.xlu0 %v2313
    %v2345 = vpop.xlane.xlu0 %2344
    %2346 = vadd.xlane.f32.xlu0 %v2315
    %v2347 = vpop.xlane.xlu0 %2346
    %2348 = vadd.xlane.f32.xlu0 %v2317
    %v2349 = vpop.xlane.xlu0 %2348
    %2350 = vadd.xlane.f32.xlu0 %v2319
    %v2351 = vpop.xlane.xlu0 %2350
    %2352 = vadd.xlane.f32.xlu0 %v2321
    %v2353 = vpop.xlane.xlu0 %2352
    %2354 = vadd.xlane.f32.xlu0 %v2323
    %v2355 = vpop.xlane.xlu0 %2354
    %v2356 = vrcp.pop %v2325
    %v2357 = vrcp.pop %v2327
    %v2358 = vrcp.pop %v2329
    %v2359 = vrcp.pop %v2331
    %v2360 = vrcp.pop %v2333
    %v2361 = vrcp.pop %v2335
    %v2362 = vrcp.pop %v2337
    %v2363 = vrcp.pop %v2339
    %v2364 = vrcp.pop %v2341
    %v2365 = vrcp.pop %v2343
    %v2366 = vrcp.pop %v2345
    %v2367 = vrcp.pop %v2347
    %v2368 = vrcp.pop %v2349
    %v2369 = vrcp.pop %v2351
    %v2370 = vrcp.pop %v2353
    %v2371 = vrcp.pop %v2355
    %v2372 = vmul.f32 %v2293, %v2356
    %v2373 = vmul.f32 %v2295, %v2357
    %v2374 = vmul.f32 %v2297, %v2358
    %v2375 = vmul.f32 %v2299, %v2359
    %v2376 = vmul.f32 %v2301, %v2360
    %v2377 = vmul.f32 %v2303, %v2361
    %v2378 = vmul.f32 %v2305, %v2362
    %v2379 = vmul.f32 %v2307, %v2363
    %v2380 = vmul.f32 %v2309, %v2364
    %v2381 = vmul.f32 %v2311, %v2365
    %v2382 = vmul.f32 %v2313, %v2366
    %v2383 = vmul.f32 %v2315, %v2367
    %v2384 = vmul.f32 %v2317, %v2368
    %v2385 = vmul.f32 %v2319, %v2369
    %v2386 = vmul.f32 %v2321, %v2370
    %v2387 = vmul.f32 %v2323, %v2371
    %v2388 = vpack.c.bf16 %v2373, %v2372
    %v2389 = vpack.c.bf16 %v2375, %v2374
    %v2390 = vpack.c.bf16 %v2377, %v2376
    %v2391 = vpack.c.bf16 %v2379, %v2378
    %v2392 = vpack.c.bf16 %v2381, %v2380
    %v2393 = vpack.c.bf16 %v2383, %v2382
    %v2394 = vpack.c.bf16 %v2385, %v2384
    %v2395 = vpack.c.bf16 %v2387, %v2386
    %2396 = vmatpush.bf16.msra.mxu0 %v2144
    %2397 = vmatpush.bf16.msra.mxu0 %v2142
    %2398 = vmatpush.bf16.msra.mxu0 %v2138
    %2399 = vmatpush.bf16.msra.mxu0 %v2136
    %2400 = vmatpush.bf16.msra.mxu0 %v2132
    %2401 = vmatpush.bf16.msra.mxu0 %v2130
    %2402 = vmatpush.bf16.msra.mxu0 %v2126
    %2403 = vmatpush.bf16.msra.mxu0 %v2125
    %2404 = vmatmul.bf16.gmra.mxu0 %v2388
    %v2405 = vpop.f32.mrf.mxu0
    %v2406 = vadd.f32 0.0, %v2405
    %v2407 = vpop.f32.mrf.mxu0
    %v2408 = vadd.f32 0.0, %v2407
    %2409 = vmatmul.bf16.gmra.mxu0 %v2389
    %v2410 = vpop.f32.mrf.mxu0
    %v2411 = vadd.f32 0.0, %v2410
    %v2412 = vpop.f32.mrf.mxu0
    %v2413 = vadd.f32 0.0, %v2412
    %2414 = vmatmul.bf16.gmra.mxu0 %v2390
    %v2415 = vpop.f32.mrf.mxu0
    %v2416 = vadd.f32 0.0, %v2415
    %v2417 = vpop.f32.mrf.mxu0
    %v2418 = vadd.f32 0.0, %v2417
    %2419 = vmatmul.bf16.gmra.mxu0 %v2391
    %v2420 = vpop.f32.mrf.mxu0
    %v2421 = vadd.f32 0.0, %v2420
    %v2422 = vpop.f32.mrf.mxu0
    %v2423 = vadd.f32 0.0, %v2422
    %2424 = vmatmul.bf16.gmra.mxu0 %v2392
    %v2425 = vpop.f32.mrf.mxu0
    %v2426 = vadd.f32 0.0, %v2425
    %v2427 = vpop.f32.mrf.mxu0
    %v2428 = vadd.f32 0.0, %v2427
    %2429 = vmatmul.bf16.gmra.mxu0 %v2393
    %v2430 = vpop.f32.mrf.mxu0
    %v2431 = vadd.f32 0.0, %v2430
    %v2432 = vpop.f32.mrf.mxu0
    %v2433 = vadd.f32 0.0, %v2432
    %2434 = vmatmul.bf16.gmra.mxu0 %v2394
    %v2435 = vpop.f32.mrf.mxu0
    %v2436 = vadd.f32 0.0, %v2435
    %v2437 = vpop.f32.mrf.mxu0
    %v2438 = vadd.f32 0.0, %v2437
    %2439 = vmatmul.bf16.gmra.mxu0 %v2395
    %v2440 = vpop.f32.mrf.mxu0
    %v2441 = vadd.f32 0.0, %v2440
    %v2442 = vpop.f32.mrf.mxu0
    %v2443 = vadd.f32 0.0, %v2442
    %2444 = vdwg.mxu0
    %2449 = vrot.lane.b32.xlu0 %v2416, 32
    %v2450 = vpop.permute.xlu0 %2449
    %2451 = vrot.lane.b32.xlu0 %v2418, 32
    %v2452 = vpop.permute.xlu0 %2451
    %2453 = vrot.lane.b32.xlu0 %v2421, 32
    %v2454 = vpop.permute.xlu0 %2453
    %2455 = vrot.lane.b32.xlu0 %v2423, 32
    %v2456 = vpop.permute.xlu0 %2455
    %2465 = vrot.lane.b32.xlu0 %v2426, 64
    %v2466 = vpop.permute.xlu0 %2465
    %2467 = vrot.lane.b32.xlu0 %v2428, 64
    %v2468 = vpop.permute.xlu0 %2467
    %2469 = vrot.lane.b32.xlu0 %v2431, 64
    %v2470 = vpop.permute.xlu0 %2469
    %2471 = vrot.lane.b32.xlu0 %v2433, 64
    %v2472 = vpop.permute.xlu0 %2471
    %2481 = vrot.lane.b32.xlu0 %v2436, 96
    %v2482 = vpop.permute.xlu0 %2481
    %2483 = vrot.lane.b32.xlu0 %v2438, 96
    %v2484 = vpop.permute.xlu0 %2483
    %2485 = vrot.lane.b32.xlu0 %v2441, 96
    %v2486 = vpop.permute.xlu0 %2485
    %2487 = vrot.lane.b32.xlu0 %v2443, 96
    %v2488 = vpop.permute.xlu0 %2487
    %v2493 = vsel %vm557, %v2406, %v2450
    %v2494 = vsel %vm557, %v2408, %v2452
    %v2495 = vsel %vm557, %v2411, %v2454
    %v2496 = vsel %vm557, %v2413, %v2456
    %v2497 = vsel %vm908, %v2493, %v2466
    %v2498 = vsel %vm908, %v2494, %v2468
    %v2499 = vsel %vm908, %v2495, %v2470
    %v2500 = vsel %vm908, %v2496, %v2472
    %v2501 = vsel %vm913, %v2497, %v2482
    %v2502 = vsel %vm913, %v2498, %v2484
    %v2503 = vsel %vm913, %v2499, %v2486
    %v2504 = vsel %vm913, %v2500, %v2488
    %v2505 = vpack.c.bf16 %v2502, %v2501
    %v2506 = vpack.c.bf16 %v2504, %v2503
    %s2507 = scalar_lea.vmem [#allocation2], 64
    %v2508 = vld [vmem:[%s2507] sm:$0xf]
    %v2509 = vld [vmem:[%s2507 + $0x4] sm:$0xf]
    %v2510 = vld [vmem:[%s2507 + $0x8] sm:$0xf]
    %v2511 = vld [vmem:[%s2507 + $0xc] sm:$0xf]
    %v2512 = vld [vmem:[%s2507 + $0x10] sm:$0xf]
    %v2513 = vld [vmem:[%s2507 + $0x14] sm:$0xf]
    %v2514 = vld [vmem:[%s2507 + $0x18] sm:$0xf]
    %v2515 = vld [vmem:[%s2507 + $0x1c] sm:$0xf]
    %v2516 = vld [vmem:[%s2507 + $0x20] sm:$0xf]
    %v2517 = vld [vmem:[%s2507 + $0x24] sm:$0xf]
    %v2518 = vld [vmem:[%s2507 + $0x28] sm:$0xf]
    %v2519 = vld [vmem:[%s2507 + $0x2c] sm:$0xf]
    %v2520 = vld [vmem:[%s2507 + $0x30] sm:$0xf]
    %v2521 = vld [vmem:[%s2507 + $0x34] sm:$0xf]
    %v2522 = vld [vmem:[%s2507 + $0x38] sm:$0xf]
    %v2523 = vld [vmem:[%s2507 + $0x3c] sm:$0xf]
    %s2524 = scalar_lea.vmem %s7, 1
    %v2525 = vld [vmem:[%s2524] sm:$0x1]
    %v2527 = vperm.slane %v2525, 0
    %v2545 = vunpack.c.l.b16 %v2508
    %v2546 = vunpack.c.l.b16 %v2509
    %v2547 = vunpack.c.l.b16 %v2510
    %v2548 = vunpack.c.l.b16 %v2511
    %v2549 = vunpack.c.l.b16 %v2512
    %v2550 = vunpack.c.l.b16 %v2513
    %v2551 = vunpack.c.l.b16 %v2514
    %v2552 = vunpack.c.l.b16 %v2515
    %v2553 = vunpack.c.l.b16 %v2516
    %v2554 = vunpack.c.l.b16 %v2517
    %v2555 = vunpack.c.l.b16 %v2518
    %v2556 = vunpack.c.l.b16 %v2519
    %v2557 = vunpack.c.l.b16 %v2520
    %v2558 = vunpack.c.l.b16 %v2521
    %v2559 = vunpack.c.l.b16 %v2522
    %v2560 = vunpack.c.l.b16 %v2523
    %v2561 = vpack.c.b16 %v2546, %v2545
    %v2562 = vpack.c.b16 %v2548, %v2547
    %v2563 = vpack.c.b16 %v2550, %v2549
    %v2564 = vpack.c.b16 %v2552, %v2551
    %v2565 = vpack.c.b16 %v2554, %v2553
    %v2566 = vpack.c.b16 %v2556, %v2555
    %v2567 = vpack.c.b16 %v2558, %v2557
    %v2568 = vpack.c.b16 %v2560, %v2559
    %2577 = vmatpush.bf16.msra.mxu0 %v2568
    %2578 = vmatpush.bf16.msra.mxu0 %v2567
    %2579 = vmatpush.bf16.msra.mxu0 %v2566
    %2580 = vmatpush.bf16.msra.mxu0 %v2565
    %2581 = vmatpush.bf16.msra.mxu0 %v2564
    %2582 = vmatpush.bf16.msra.mxu0 %v2563
    %2583 = vmatpush.bf16.msra.mxu0 %v2562
    %2584 = vmatpush.bf16.msra.mxu0 %v2561
    %2585 = vmatmul.bf16.gmra.mxu0 %v2505
    %v2586 = vpop.f32.mrf.mxu0
    %v2587 = vadd.f32 %v2527, %v2586
    %v2588 = vpop.f32.mrf.mxu0
    %v2589 = vadd.f32 %v2527, %v2588
    %2590 = vmatmul.bf16.gmra.mxu0 %v2506
    %v2591 = vpop.f32.mrf.mxu0
    %v2592 = vadd.f32 %v2527, %v2591
    %v2593 = vpop.f32.mrf.mxu0
    %v2594 = vadd.f32 %v2527, %v2593
    %2595 = vdwg.mxu0
    %v2596 = vadd.f32 %v1747, %v2587
    %v2597 = vadd.f32 %v1748, %v2589
    %v2598 = vadd.f32 %v1749, %v2592
    %v2599 = vadd.f32 %v1750, %v2594
    %s2600 = scalar_lea.vmem [#allocation4], 1
    %v2601 = vld [vmem:[%s2600] sm:$0x1]
    %s2602 = scalar_lea.vmem [#allocation6], 1
    %v2603 = vld [vmem:[%s2602] sm:$0x1]
    %2604 = vadd.xlane.f32.xlu0 %v2596
    %v2605 = vpop.xlane.xlu0 %2604
    %2606 = vadd.xlane.f32.xlu0 %v2597
    %v2607 = vpop.xlane.xlu0 %2606
    %2608 = vadd.xlane.f32.xlu0 %v2598
    %v2609 = vpop.xlane.xlu0 %2608
    %2610 = vadd.xlane.f32.xlu0 %v2599
    %v2611 = vpop.xlane.xlu0 %2610
    %v2612 = vmul.f32 %v2605, %v173
    %v2613 = vmul.f32 %v2607, %v173
    %v2614 = vmul.f32 %v2609, %v173
    %v2615 = vmul.f32 %v2611, %v173
    %v2616 = vsub.f32 %v2596, %v2612
    %v2617 = vsub.f32 %v2597, %v2613
    %v2618 = vsub.f32 %v2598, %v2614
    %v2619 = vsub.f32 %v2599, %v2615
    %v2620 = vmul.f32 %v2616, %v2616
    %v2621 = vmul.f32 %v2617, %v2617
    %v2622 = vmul.f32 %v2618, %v2618
    %v2623 = vmul.f32 %v2619, %v2619
    %2624 = vadd.xlane.f32.xlu0 %v2620
    %v2625 = vpop.xlane.xlu0 %2624
    %2626 = vadd.xlane.f32.xlu0 %v2621
    %v2627 = vpop.xlane.xlu0 %2626
    %2628 = vadd.xlane.f32.xlu0 %v2622
    %v2629 = vpop.xlane.xlu0 %2628
    %2630 = vadd.xlane.f32.xlu0 %v2623
    %v2631 = vpop.xlane.xlu0 %2630
    %v2632 = vmul.f32 %v2625, %v173
    %v2633 = vmul.f32 %v2627, %v173
    %v2634 = vmul.f32 %v2629, %v173
    %v2635 = vmul.f32 %v2631, %v173
    %v2636 = vadd.f32 %v2632, 1e-05
    %v2637 = vadd.f32 %v2633, 1e-05
    %v2638 = vadd.f32 %v2634, 1e-05
    %v2639 = vadd.f32 %v2635, 1e-05
    %v2640 = vrsqrt.pop %v2636
    %v2641 = vmul.f32 %v2640, %v2636
    %v2642 = vmul.f32 %v2641, %v2640
    %v2643 = vmul.f32 0.5, %v2642
    %v2644 = vsub.f32 1.5, %v2643
    %v2645 = vmul.f32 %v2640, %v2644
    %vm2646 = vweird.f32 %v2636
    %vm2647 = vweird.f32 %v2640
    %vm2648 = vmor %vm2646, %vm2647
    %v2649 = vsel %vm2648, %v2640, %v2645
    %v2650 = vrsqrt.pop %v2637
    %v2651 = vmul.f32 %v2650, %v2637
    %v2652 = vmul.f32 %v2651, %v2650
    %v2653 = vmul.f32 0.5, %v2652
    %v2654 = vsub.f32 1.5, %v2653
    %v2655 = vmul.f32 %v2650, %v2654
    %vm2656 = vweird.f32 %v2637
    %vm2657 = vweird.f32 %v2650
    %vm2658 = vmor %vm2656, %vm2657
    %v2659 = vsel %vm2658, %v2650, %v2655
    %v2660 = vrsqrt.pop %v2638
    %v2661 = vmul.f32 %v2660, %v2638
    %v2662 = vmul.f32 %v2661, %v2660
    %v2663 = vmul.f32 0.5, %v2662
    %v2664 = vsub.f32 1.5, %v2663
    %v2665 = vmul.f32 %v2660, %v2664
    %vm2666 = vweird.f32 %v2638
    %vm2667 = vweird.f32 %v2660
    %vm2668 = vmor %vm2666, %vm2667
    %v2669 = vsel %vm2668, %v2660, %v2665
    %v2670 = vrsqrt.pop %v2639
    %v2671 = vmul.f32 %v2670, %v2639
    %v2672 = vmul.f32 %v2671, %v2670
    %v2673 = vmul.f32 0.5, %v2672
    %v2674 = vsub.f32 1.5, %v2673
    %v2675 = vmul.f32 %v2670, %v2674
    %vm2676 = vweird.f32 %v2639
    %vm2677 = vweird.f32 %v2670
    %vm2678 = vmor %vm2676, %vm2677
    %v2679 = vsel %vm2678, %v2670, %v2675
    %v2680 = vmul.f32 %v2616, %v2649
    %v2681 = vmul.f32 %v2617, %v2659
    %v2682 = vmul.f32 %v2618, %v2669
    %v2683 = vmul.f32 %v2619, %v2679
    %v2685 = vperm.slane %v2601, 0
    %v2687 = vmul.f32 %v2680, %v2685
    %v2688 = vmul.f32 %v2681, %v2685
    %v2689 = vmul.f32 %v2682, %v2685
    %v2690 = vmul.f32 %v2683, %v2685
    %v2692 = vperm.slane %v2603, 0
    %v2694 = vadd.f32 %v2687, %v2692
    %v2695 = vadd.f32 %v2688, %v2692
    %v2696 = vadd.f32 %v2689, %v2692
    %v2697 = vadd.f32 %v2690, %v2692
    %v2698 = vpack.c.bf16 %v2695, %v2694
    %v2699 = vpack.c.bf16 %v2697, %v2696
    %s2700 = scalar_lea.vmem [#allocation7], 256
    %v2701 = vld [vmem:[%s2700] sm:$0xff]
    %v2702 = vld [vmem:[%s2700 + $0x8] sm:$0xff]
    %v2703 = vld [vmem:[%s2700 + $0x10] sm:$0xff]
    %v2704 = vld [vmem:[%s2700 + $0x18] sm:$0xff]
    %v2705 = vld [vmem:[%s2700 + $0x20] sm:$0xff]
    %v2706 = vld [vmem:[%s2700 + $0x28] sm:$0xff]
    %v2707 = vld [vmem:[%s2700 + $0x30] sm:$0xff]
    %v2708 = vld [vmem:[%s2700 + $0x38] sm:$0xff]
    %v2709 = vld [vmem:[%s2700 + $0x40] sm:$0xff]
    %v2710 = vld [vmem:[%s2700 + $0x48] sm:$0xff]
    %v2711 = vld [vmem:[%s2700 + $0x50] sm:$0xff]
    %v2712 = vld [vmem:[%s2700 + $0x58] sm:$0xff]
    %v2713 = vld [vmem:[%s2700 + $0x60] sm:$0xff]
    %v2714 = vld [vmem:[%s2700 + $0x68] sm:$0xff]
    %v2715 = vld [vmem:[%s2700 + $0x70] sm:$0xff]
    %v2716 = vld [vmem:[%s2700 + $0x78] sm:$0xff]
    %v2717 = vld [vmem:[%s2700 + $0x80] sm:$0xff]
    %v2718 = vld [vmem:[%s2700 + $0x88] sm:$0xff]
    %v2719 = vld [vmem:[%s2700 + $0x90] sm:$0xff]
    %v2720 = vld [vmem:[%s2700 + $0x98] sm:$0xff]
    %v2721 = vld [vmem:[%s2700 + $0xa0] sm:$0xff]
    %v2722 = vld [vmem:[%s2700 + $0xa8] sm:$0xff]
    %v2723 = vld [vmem:[%s2700 + $0xb0] sm:$0xff]
    %v2724 = vld [vmem:[%s2700 + $0xb8] sm:$0xff]
    %v2725 = vld [vmem:[%s2700 + $0xc0] sm:$0xff]
    %v2726 = vld [vmem:[%s2700 + $0xc8] sm:$0xff]
    %v2727 = vld [vmem:[%s2700 + $0xd0] sm:$0xff]
    %v2728 = vld [vmem:[%s2700 + $0xd8] sm:$0xff]
    %v2729 = vld [vmem:[%s2700 + $0xe0] sm:$0xff]
    %v2730 = vld [vmem:[%s2700 + $0xe8] sm:$0xff]
    %v2731 = vld [vmem:[%s2700 + $0xf0] sm:$0xff]
    %v2732 = vld [vmem:[%s2700 + $0xf8] sm:$0xff]
    %s2733 = scalar_lea.vmem %s11, 4
    %v2734 = vld [vmem:[%s2733] sm:$0xf]
    %v2736 = vperm.slane %v2734, 0
    %v2737 = vperm.slane %v2734, 1
    %v2738 = vperm.slane %v2734, 2
    %v2739 = vperm.slane %v2734, 3
    %v2776 = vunpack.c.l.b16 %v2701
    %v2777 = vunpack.c.h.b16 %v2701
    %v2778 = vunpack.c.l.b16 %v2702
    %v2779 = vunpack.c.h.b16 %v2702
    %v2780 = vunpack.c.l.b16 %v2703
    %v2781 = vunpack.c.h.b16 %v2703
    %v2782 = vunpack.c.l.b16 %v2704
    %v2783 = vunpack.c.h.b16 %v2704
    %v2784 = vunpack.c.l.b16 %v2705
    %v2785 = vunpack.c.h.b16 %v2705
    %v2786 = vunpack.c.l.b16 %v2706
    %v2787 = vunpack.c.h.b16 %v2706
    %v2788 = vunpack.c.l.b16 %v2707
    %v2789 = vunpack.c.h.b16 %v2707
    %v2790 = vunpack.c.l.b16 %v2708
    %v2791 = vunpack.c.h.b16 %v2708
    %v2792 = vunpack.c.l.b16 %v2709
    %v2793 = vunpack.c.h.b16 %v2709
    %v2794 = vunpack.c.l.b16 %v2710
    %v2795 = vunpack.c.h.b16 %v2710
    %v2796 = vunpack.c.l.b16 %v2711
    %v2797 = vunpack.c.h.b16 %v2711
    %v2798 = vunpack.c.l.b16 %v2712
    %v2799 = vunpack.c.h.b16 %v2712
    %v2800 = vunpack.c.l.b16 %v2713
    %v2801 = vunpack.c.h.b16 %v2713
    %v2802 = vunpack.c.l.b16 %v2714
    %v2803 = vunpack.c.h.b16 %v2714
    %v2804 = vunpack.c.l.b16 %v2715
    %v2805 = vunpack.c.h.b16 %v2715
    %v2806 = vunpack.c.l.b16 %v2716
    %v2807 = vunpack.c.h.b16 %v2716
    %v2808 = vunpack.c.l.b16 %v2717
    %v2809 = vunpack.c.h.b16 %v2717
    %v2810 = vunpack.c.l.b16 %v2718
    %v2811 = vunpack.c.h.b16 %v2718
    %v2812 = vunpack.c.l.b16 %v2719
    %v2813 = vunpack.c.h.b16 %v2719
    %v2814 = vunpack.c.l.b16 %v2720
    %v2815 = vunpack.c.h.b16 %v2720
    %v2816 = vunpack.c.l.b16 %v2721
    %v2817 = vunpack.c.h.b16 %v2721
    %v2818 = vunpack.c.l.b16 %v2722
    %v2819 = vunpack.c.h.b16 %v2722
    %v2820 = vunpack.c.l.b16 %v2723
    %v2821 = vunpack.c.h.b16 %v2723
    %v2822 = vunpack.c.l.b16 %v2724
    %v2823 = vunpack.c.h.b16 %v2724
    %v2824 = vunpack.c.l.b16 %v2725
    %v2825 = vunpack.c.h.b16 %v2725
    %v2826 = vunpack.c.l.b16 %v2726
    %v2827 = vunpack.c.h.b16 %v2726
    %v2828 = vunpack.c.l.b16 %v2727
    %v2829 = vunpack.c.h.b16 %v2727
    %v2830 = vunpack.c.l.b16 %v2728
    %v2831 = vunpack.c.h.b16 %v2728
    %v2832 = vunpack.c.l.b16 %v2729
    %v2833 = vunpack.c.h.b16 %v2729
    %v2834 = vunpack.c.l.b16 %v2730
    %v2835 = vunpack.c.h.b16 %v2730
    %v2836 = vunpack.c.l.b16 %v2731
    %v2837 = vunpack.c.h.b16 %v2731
    %v2838 = vunpack.c.l.b16 %v2732
    %v2839 = vunpack.c.h.b16 %v2732
    %v2840 = vpack.c.b16 %v2780, %v2776
    %v2841 = vpack.c.b16 %v2781, %v2777
    %v2842 = vpack.c.b16 %v2782, %v2778
    %v2843 = vpack.c.b16 %v2783, %v2779
    %v2844 = vpack.c.b16 %v2788, %v2784
    %v2845 = vpack.c.b16 %v2789, %v2785
    %v2846 = vpack.c.b16 %v2790, %v2786
    %v2847 = vpack.c.b16 %v2791, %v2787
    %v2848 = vpack.c.b16 %v2796, %v2792
    %v2849 = vpack.c.b16 %v2797, %v2793
    %v2850 = vpack.c.b16 %v2798, %v2794
    %v2851 = vpack.c.b16 %v2799, %v2795
    %v2852 = vpack.c.b16 %v2804, %v2800
    %v2853 = vpack.c.b16 %v2805, %v2801
    %v2854 = vpack.c.b16 %v2806, %v2802
    %v2855 = vpack.c.b16 %v2807, %v2803
    %v2856 = vpack.c.b16 %v2812, %v2808
    %v2857 = vpack.c.b16 %v2813, %v2809
    %v2858 = vpack.c.b16 %v2814, %v2810
    %v2859 = vpack.c.b16 %v2815, %v2811
    %v2860 = vpack.c.b16 %v2820, %v2816
    %v2861 = vpack.c.b16 %v2821, %v2817
    %v2862 = vpack.c.b16 %v2822, %v2818
    %v2863 = vpack.c.b16 %v2823, %v2819
    %v2864 = vpack.c.b16 %v2828, %v2824
    %v2865 = vpack.c.b16 %v2829, %v2825
    %v2866 = vpack.c.b16 %v2830, %v2826
    %v2867 = vpack.c.b16 %v2831, %v2827
    %v2868 = vpack.c.b16 %v2836, %v2832
    %v2869 = vpack.c.b16 %v2837, %v2833
    %v2870 = vpack.c.b16 %v2838, %v2834
    %v2871 = vpack.c.b16 %v2839, %v2835
    %2904 = vmatpush.bf16.msra.mxu0 %v2868
    %2905 = vmatpush.bf16.msra.mxu0 %v2864
    %2906 = vmatpush.bf16.msra.mxu0 %v2860
    %2907 = vmatpush.bf16.msra.mxu0 %v2856
    %2908 = vmatpush.bf16.msra.mxu0 %v2852
    %2909 = vmatpush.bf16.msra.mxu0 %v2848
    %2910 = vmatpush.bf16.msra.mxu0 %v2844
    %2911 = vmatpush.bf16.msra.mxu0 %v2840
    %2912 = vmatmul.bf16.gmra.mxu0 %v2698
    %v2913 = vpop.f32.mrf.mxu0
    %v2914 = vadd.f32 %v2736, %v2913
    %v2915 = vpop.f32.mrf.mxu0
    %v2916 = vadd.f32 %v2736, %v2915
    %2917 = vmatmul.bf16.gmra.mxu0 %v2699
    %v2918 = vpop.f32.mrf.mxu0
    %v2919 = vadd.f32 %v2736, %v2918
    %v2920 = vpop.f32.mrf.mxu0
    %v2921 = vadd.f32 %v2736, %v2920
    %2922 = vdwg.mxu0
    %2923 = vmatpush.bf16.msra.mxu0 %v2869
    %2924 = vmatpush.bf16.msra.mxu0 %v2865
    %2925 = vmatpush.bf16.msra.mxu0 %v2861
    %2926 = vmatpush.bf16.msra.mxu0 %v2857
    %2927 = vmatpush.bf16.msra.mxu0 %v2853
    %2928 = vmatpush.bf16.msra.mxu0 %v2849
    %2929 = vmatpush.bf16.msra.mxu0 %v2845
    %2930 = vmatpush.bf16.msra.mxu0 %v2841
    %2931 = vmatmul.bf16.gmra.mxu0 %v2698
    %v2932 = vpop.f32.mrf.mxu0
    %v2933 = vadd.f32 %v2737, %v2932
    %v2934 = vpop.f32.mrf.mxu0
    %v2935 = vadd.f32 %v2737, %v2934
    %2936 = vmatmul.bf16.gmra.mxu0 %v2699
    %v2937 = vpop.f32.mrf.mxu0
    %v2938 = vadd.f32 %v2737, %v2937
    %v2939 = vpop.f32.mrf.mxu0
    %v2940 = vadd.f32 %v2737, %v2939
    %2941 = vdwg.mxu0
    %2942 = vmatpush.bf16.msra.mxu0 %v2870
    %2943 = vmatpush.bf16.msra.mxu0 %v2866
    %2944 = vmatpush.bf16.msra.mxu0 %v2862
    %2945 = vmatpush.bf16.msra.mxu0 %v2858
    %2946 = vmatpush.bf16.msra.mxu0 %v2854
    %2947 = vmatpush.bf16.msra.mxu0 %v2850
    %2948 = vmatpush.bf16.msra.mxu0 %v2846
    %2949 = vmatpush.bf16.msra.mxu0 %v2842
    %2950 = vmatmul.bf16.gmra.mxu0 %v2698
    %v2951 = vpop.f32.mrf.mxu0
    %v2952 = vadd.f32 %v2738, %v2951
    %v2953 = vpop.f32.mrf.mxu0
    %v2954 = vadd.f32 %v2738, %v2953
    %2955 = vmatmul.bf16.gmra.mxu0 %v2699
    %v2956 = vpop.f32.mrf.mxu0
    %v2957 = vadd.f32 %v2738, %v2956
    %v2958 = vpop.f32.mrf.mxu0
    %v2959 = vadd.f32 %v2738, %v2958
    %2960 = vdwg.mxu0
    %2961 = vmatpush.bf16.msra.mxu0 %v2871
    %2962 = vmatpush.bf16.msra.mxu0 %v2867
    %2963 = vmatpush.bf16.msra.mxu0 %v2863
    %2964 = vmatpush.bf16.msra.mxu0 %v2859
    %2965 = vmatpush.bf16.msra.mxu0 %v2855
    %2966 = vmatpush.bf16.msra.mxu0 %v2851
    %2967 = vmatpush.bf16.msra.mxu0 %v2847
    %2968 = vmatpush.bf16.msra.mxu0 %v2843
    %2969 = vmatmul.bf16.gmra.mxu0 %v2698
    %v2970 = vpop.f32.mrf.mxu0
    %v2971 = vadd.f32 %v2739, %v2970
    %v2972 = vpop.f32.mrf.mxu0
    %v2973 = vadd.f32 %v2739, %v2972
    %2974 = vmatmul.bf16.gmra.mxu0 %v2699
    %v2975 = vpop.f32.mrf.mxu0
    %v2976 = vadd.f32 %v2739, %v2975
    %v2977 = vpop.f32.mrf.mxu0
    %v2978 = vadd.f32 %v2739, %v2977
    %2979 = vdwg.mxu0
    %v2980 = vmax.f32 %v2914, 0.0
    %v2981 = vmax.f32 %v2933, 0.0
    %v2982 = vmax.f32 %v2952, 0.0
    %v2983 = vmax.f32 %v2971, 0.0
    %v2984 = vmax.f32 %v2916, 0.0
    %v2985 = vmax.f32 %v2935, 0.0
    %v2986 = vmax.f32 %v2954, 0.0
    %v2987 = vmax.f32 %v2973, 0.0
    %v2988 = vmax.f32 %v2919, 0.0
    %v2989 = vmax.f32 %v2938, 0.0
    %v2990 = vmax.f32 %v2957, 0.0
    %v2991 = vmax.f32 %v2976, 0.0
    %v2992 = vmax.f32 %v2921, 0.0
    %v2993 = vmax.f32 %v2940, 0.0
    %v2994 = vmax.f32 %v2959, 0.0
    %v2995 = vmax.f32 %v2978, 0.0
    %v2996 = vpack.c.bf16 %v2984, %v2980
    %v2997 = vpack.c.bf16 %v2985, %v2981
    %v2998 = vpack.c.bf16 %v2986, %v2982
    %v2999 = vpack.c.bf16 %v2987, %v2983
    %v3000 = vpack.c.bf16 %v2992, %v2988
    %v3001 = vpack.c.bf16 %v2993, %v2989
    %v3002 = vpack.c.bf16 %v2994, %v2990
    %v3003 = vpack.c.bf16 %v2995, %v2991
    %s3004 = scalar_lea.vmem [#allocation9], 256
    %v3005 = vld [vmem:[%s3004] sm:$0xf]
    %v3006 = vld [vmem:[%s3004 + $0x4] sm:$0xf]
    %v3007 = vld [vmem:[%s3004 + $0x8] sm:$0xf]
    %v3008 = vld [vmem:[%s3004 + $0xc] sm:$0xf]
    %v3009 = vld [vmem:[%s3004 + $0x10] sm:$0xf]
    %v3010 = vld [vmem:[%s3004 + $0x14] sm:$0xf]
    %v3011 = vld [vmem:[%s3004 + $0x18] sm:$0xf]
    %v3012 = vld [vmem:[%s3004 + $0x1c] sm:$0xf]
    %v3013 = vld [vmem:[%s3004 + $0x20] sm:$0xf]
    %v3014 = vld [vmem:[%s3004 + $0x24] sm:$0xf]
    %v3015 = vld [vmem:[%s3004 + $0x28] sm:$0xf]
    %v3016 = vld [vmem:[%s3004 + $0x2c] sm:$0xf]
    %v3017 = vld [vmem:[%s3004 + $0x30] sm:$0xf]
    %v3018 = vld [vmem:[%s3004 + $0x34] sm:$0xf]
    %v3019 = vld [vmem:[%s3004 + $0x38] sm:$0xf]
    %v3020 = vld [vmem:[%s3004 + $0x3c] sm:$0xf]
    %v3021 = vld [vmem:[%s3004 + $0x40] sm:$0xf]
    %v3022 = vld [vmem:[%s3004 + $0x44] sm:$0xf]
    %v3023 = vld [vmem:[%s3004 + $0x48] sm:$0xf]
    %v3024 = vld [vmem:[%s3004 + $0x4c] sm:$0xf]
    %v3025 = vld [vmem:[%s3004 + $0x50] sm:$0xf]
    %v3026 = vld [vmem:[%s3004 + $0x54] sm:$0xf]
    %v3027 = vld [vmem:[%s3004 + $0x58] sm:$0xf]
    %v3028 = vld [vmem:[%s3004 + $0x5c] sm:$0xf]
    %v3029 = vld [vmem:[%s3004 + $0x60] sm:$0xf]
    %v3030 = vld [vmem:[%s3004 + $0x64] sm:$0xf]
    %v3031 = vld [vmem:[%s3004 + $0x68] sm:$0xf]
    %v3032 = vld [vmem:[%s3004 + $0x6c] sm:$0xf]
    %v3033 = vld [vmem:[%s3004 + $0x70] sm:$0xf]
    %v3034 = vld [vmem:[%s3004 + $0x74] sm:$0xf]
    %v3035 = vld [vmem:[%s3004 + $0x78] sm:$0xf]
    %v3036 = vld [vmem:[%s3004 + $0x7c] sm:$0xf]
    %v3037 = vld [vmem:[%s3004 + $0x80] sm:$0xf]
    %v3038 = vld [vmem:[%s3004 + $0x84] sm:$0xf]
    %v3039 = vld [vmem:[%s3004 + $0x88] sm:$0xf]
    %v3040 = vld [vmem:[%s3004 + $0x8c] sm:$0xf]
    %v3041 = vld [vmem:[%s3004 + $0x90] sm:$0xf]
    %v3042 = vld [vmem:[%s3004 + $0x94] sm:$0xf]
    %v3043 = vld [vmem:[%s3004 + $0x98] sm:$0xf]
    %v3044 = vld [vmem:[%s3004 + $0x9c] sm:$0xf]
    %v3045 = vld [vmem:[%s3004 + $0xa0] sm:$0xf]
    %v3046 = vld [vmem:[%s3004 + $0xa4] sm:$0xf]
    %v3047 = vld [vmem:[%s3004 + $0xa8] sm:$0xf]
    %v3048 = vld [vmem:[%s3004 + $0xac] sm:$0xf]
    %v3049 = vld [vmem:[%s3004 + $0xb0] sm:$0xf]
    %v3050 = vld [vmem:[%s3004 + $0xb4] sm:$0xf]
    %v3051 = vld [vmem:[%s3004 + $0xb8] sm:$0xf]
    %v3052 = vld [vmem:[%s3004 + $0xbc] sm:$0xf]
    %v3053 = vld [vmem:[%s3004 + $0xc0] sm:$0xf]
    %v3054 = vld [vmem:[%s3004 + $0xc4] sm:$0xf]
    %v3055 = vld [vmem:[%s3004 + $0xc8] sm:$0xf]
    %v3056 = vld [vmem:[%s3004 + $0xcc] sm:$0xf]
    %v3057 = vld [vmem:[%s3004 + $0xd0] sm:$0xf]
    %v3058 = vld [vmem:[%s3004 + $0xd4] sm:$0xf]
    %v3059 = vld [vmem:[%s3004 + $0xd8] sm:$0xf]
    %v3060 = vld [vmem:[%s3004 + $0xdc] sm:$0xf]
    %v3061 = vld [vmem:[%s3004 + $0xe0] sm:$0xf]
    %v3062 = vld [vmem:[%s3004 + $0xe4] sm:$0xf]
    %v3063 = vld [vmem:[%s3004 + $0xe8] sm:$0xf]
    %v3064 = vld [vmem:[%s3004 + $0xec] sm:$0xf]
    %v3065 = vld [vmem:[%s3004 + $0xf0] sm:$0xf]
    %v3066 = vld [vmem:[%s3004 + $0xf4] sm:$0xf]
    %v3067 = vld [vmem:[%s3004 + $0xf8] sm:$0xf]
    %v3068 = vld [vmem:[%s3004 + $0xfc] sm:$0xf]
    %s3069 = scalar_lea.vmem %s13, 1
    %v3070 = vld [vmem:[%s3069] sm:$0x1]
    %v3072 = vperm.slane %v3070, 0
    %v3138 = vunpack.c.l.b16 %v3005
    %v3139 = vunpack.c.l.b16 %v3006
    %v3140 = vunpack.c.l.b16 %v3007
    %v3141 = vunpack.c.l.b16 %v3008
    %v3142 = vunpack.c.l.b16 %v3009
    %v3143 = vunpack.c.l.b16 %v3010
    %v3144 = vunpack.c.l.b16 %v3011
    %v3145 = vunpack.c.l.b16 %v3012
    %v3146 = vunpack.c.l.b16 %v3013
    %v3147 = vunpack.c.l.b16 %v3014
    %v3148 = vunpack.c.l.b16 %v3015
    %v3149 = vunpack.c.l.b16 %v3016
    %v3150 = vunpack.c.l.b16 %v3017
    %v3151 = vunpack.c.l.b16 %v3018
    %v3152 = vunpack.c.l.b16 %v3019
    %v3153 = vunpack.c.l.b16 %v3020
    %v3154 = vunpack.c.l.b16 %v3021
    %v3155 = vunpack.c.l.b16 %v3022
    %v3156 = vunpack.c.l.b16 %v3023
    %v3157 = vunpack.c.l.b16 %v3024
    %v3158 = vunpack.c.l.b16 %v3025
    %v3159 = vunpack.c.l.b16 %v3026
    %v3160 = vunpack.c.l.b16 %v3027
    %v3161 = vunpack.c.l.b16 %v3028
    %v3162 = vunpack.c.l.b16 %v3029
    %v3163 = vunpack.c.l.b16 %v3030
    %v3164 = vunpack.c.l.b16 %v3031
    %v3165 = vunpack.c.l.b16 %v3032
    %v3166 = vunpack.c.l.b16 %v3033
    %v3167 = vunpack.c.l.b16 %v3034
    %v3168 = vunpack.c.l.b16 %v3035
    %v3169 = vunpack.c.l.b16 %v3036
    %v3170 = vunpack.c.l.b16 %v3037
    %v3171 = vunpack.c.l.b16 %v3038
    %v3172 = vunpack.c.l.b16 %v3039
    %v3173 = vunpack.c.l.b16 %v3040
    %v3174 = vunpack.c.l.b16 %v3041
    %v3175 = vunpack.c.l.b16 %v3042
    %v3176 = vunpack.c.l.b16 %v3043
    %v3177 = vunpack.c.l.b16 %v3044
    %v3178 = vunpack.c.l.b16 %v3045
    %v3179 = vunpack.c.l.b16 %v3046
    %v3180 = vunpack.c.l.b16 %v3047
    %v3181 = vunpack.c.l.b16 %v3048
    %v3182 = vunpack.c.l.b16 %v3049
    %v3183 = vunpack.c.l.b16 %v3050
    %v3184 = vunpack.c.l.b16 %v3051
    %v3185 = vunpack.c.l.b16 %v3052
    %v3186 = vunpack.c.l.b16 %v3053
    %v3187 = vunpack.c.l.b16 %v3054
    %v3188 = vunpack.c.l.b16 %v3055
    %v3189 = vunpack.c.l.b16 %v3056
    %v3190 = vunpack.c.l.b16 %v3057
    %v3191 = vunpack.c.l.b16 %v3058
    %v3192 = vunpack.c.l.b16 %v3059
    %v3193 = vunpack.c.l.b16 %v3060
    %v3194 = vunpack.c.l.b16 %v3061
    %v3195 = vunpack.c.l.b16 %v3062
    %v3196 = vunpack.c.l.b16 %v3063
    %v3197 = vunpack.c.l.b16 %v3064
    %v3198 = vunpack.c.l.b16 %v3065
    %v3199 = vunpack.c.l.b16 %v3066
    %v3200 = vunpack.c.l.b16 %v3067
    %v3201 = vunpack.c.l.b16 %v3068
    %v3202 = vpack.c.b16 %v3139, %v3138
    %v3203 = vpack.c.b16 %v3141, %v3140
    %v3204 = vpack.c.b16 %v3143, %v3142
    %v3205 = vpack.c.b16 %v3145, %v3144
    %v3206 = vpack.c.b16 %v3147, %v3146
    %v3207 = vpack.c.b16 %v3149, %v3148
    %v3208 = vpack.c.b16 %v3151, %v3150
    %v3209 = vpack.c.b16 %v3153, %v3152
    %v3210 = vpack.c.b16 %v3155, %v3154
    %v3211 = vpack.c.b16 %v3157, %v3156
    %v3212 = vpack.c.b16 %v3159, %v3158
    %v3213 = vpack.c.b16 %v3161, %v3160
    %v3214 = vpack.c.b16 %v3163, %v3162
    %v3215 = vpack.c.b16 %v3165, %v3164
    %v3216 = vpack.c.b16 %v3167, %v3166
    %v3217 = vpack.c.b16 %v3169, %v3168
    %v3218 = vpack.c.b16 %v3171, %v3170
    %v3219 = vpack.c.b16 %v3173, %v3172
    %v3220 = vpack.c.b16 %v3175, %v3174
    %v3221 = vpack.c.b16 %v3177, %v3176
    %v3222 = vpack.c.b16 %v3179, %v3178
    %v3223 = vpack.c.b16 %v3181, %v3180
    %v3224 = vpack.c.b16 %v3183, %v3182
    %v3225 = vpack.c.b16 %v3185, %v3184
    %v3226 = vpack.c.b16 %v3187, %v3186
    %v3227 = vpack.c.b16 %v3189, %v3188
    %v3228 = vpack.c.b16 %v3191, %v3190
    %v3229 = vpack.c.b16 %v3193, %v3192
    %v3230 = vpack.c.b16 %v3195, %v3194
    %v3231 = vpack.c.b16 %v3197, %v3196
    %v3232 = vpack.c.b16 %v3199, %v3198
    %v3233 = vpack.c.b16 %v3201, %v3200
    %3266 = vmatpush.bf16.msra.mxu0 %v3209
    %3267 = vmatpush.bf16.msra.mxu0 %v3208
    %3268 = vmatpush.bf16.msra.mxu0 %v3207
    %3269 = vmatpush.bf16.msra.mxu0 %v3206
    %3270 = vmatpush.bf16.msra.mxu0 %v3205
    %3271 = vmatpush.bf16.msra.mxu0 %v3204
    %3272 = vmatpush.bf16.msra.mxu0 %v3203
    %3273 = vmatpush.bf16.msra.mxu0 %v3202
    %3274 = vmatmul.bf16.gmra.mxu0 %v2996
    %v3275 = vpop.f32.mrf.mxu0
    %v3276 = vadd.f32 %v3072, %v3275
    %v3277 = vpop.f32.mrf.mxu0
    %v3278 = vadd.f32 %v3072, %v3277
    %3279 = vmatmul.bf16.gmra.mxu0 %v3000
    %v3280 = vpop.f32.mrf.mxu0
    %v3281 = vadd.f32 %v3072, %v3280
    %v3282 = vpop.f32.mrf.mxu0
    %v3283 = vadd.f32 %v3072, %v3282
    %3284 = vdwg.mxu0
    %3285 = vmatpush.bf16.msra.mxu0 %v3217
    %3286 = vmatpush.bf16.msra.mxu0 %v3216
    %3287 = vmatpush.bf16.msra.mxu0 %v3215
    %3288 = vmatpush.bf16.msra.mxu0 %v3214
    %3289 = vmatpush.bf16.msra.mxu0 %v3213
    %3290 = vmatpush.bf16.msra.mxu0 %v3212
    %3291 = vmatpush.bf16.msra.mxu0 %v3211
    %3292 = vmatpush.bf16.msra.mxu0 %v3210
    %3293 = vmatmul.bf16.gmra.mxu0 %v2997
    %v3294 = vpop.f32.mrf.mxu0
    %v3295 = vadd.f32 %v3276, %v3294
    %v3296 = vpop.f32.mrf.mxu0
    %v3297 = vadd.f32 %v3278, %v3296
    %3298 = vmatmul.bf16.gmra.mxu0 %v3001
    %v3299 = vpop.f32.mrf.mxu0
    %v3300 = vadd.f32 %v3281, %v3299
    %v3301 = vpop.f32.mrf.mxu0
    %v3302 = vadd.f32 %v3283, %v3301
    %3303 = vdwg.mxu0
    %3304 = vmatpush.bf16.msra.mxu0 %v3225
    %3305 = vmatpush.bf16.msra.mxu0 %v3224
    %3306 = vmatpush.bf16.msra.mxu0 %v3223
    %3307 = vmatpush.bf16.msra.mxu0 %v3222
    %3308 = vmatpush.bf16.msra.mxu0 %v3221
    %3309 = vmatpush.bf16.msra.mxu0 %v3220
    %3310 = vmatpush.bf16.msra.mxu0 %v3219
    %3311 = vmatpush.bf16.msra.mxu0 %v3218
    %3312 = vmatmul.bf16.gmra.mxu0 %v2998
    %v3313 = vpop.f32.mrf.mxu0
    %v3314 = vadd.f32 %v3295, %v3313
    %v3315 = vpop.f32.mrf.mxu0
    %v3316 = vadd.f32 %v3297, %v3315
    %3317 = vmatmul.bf16.gmra.mxu0 %v3002
    %v3318 = vpop.f32.mrf.mxu0
    %v3319 = vadd.f32 %v3300, %v3318
    %v3320 = vpop.f32.mrf.mxu0
    %v3321 = vadd.f32 %v3302, %v3320
    %3322 = vdwg.mxu0
    %3323 = vmatpush.bf16.msra.mxu0 %v3233
    %3324 = vmatpush.bf16.msra.mxu0 %v3232
    %3325 = vmatpush.bf16.msra.mxu0 %v3231
    %3326 = vmatpush.bf16.msra.mxu0 %v3230
    %3327 = vmatpush.bf16.msra.mxu0 %v3229
    %3328 = vmatpush.bf16.msra.mxu0 %v3228
    %3329 = vmatpush.bf16.msra.mxu0 %v3227
    %3330 = vmatpush.bf16.msra.mxu0 %v3226
    %3331 = vmatmul.bf16.gmra.mxu0 %v2999
    %v3332 = vpop.f32.mrf.mxu0
    %v3333 = vadd.f32 %v3314, %v3332
    %v3334 = vpop.f32.mrf.mxu0
    %v3335 = vadd.f32 %v3316, %v3334
    %3336 = vmatmul.bf16.gmra.mxu0 %v3003
    %v3337 = vpop.f32.mrf.mxu0
    %v3338 = vadd.f32 %v3319, %v3337
    %v3339 = vpop.f32.mrf.mxu0
    %v3340 = vadd.f32 %v3321, %v3339
    %3341 = vdwg.mxu0
    %v3342 = vadd.f32 %v2596, %v3333
    %v3343 = vadd.f32 %v2597, %v3335
    %v3344 = vadd.f32 %v2598, %v3338
    %v3345 = vadd.f32 %v2599, %v3340
    %v3346 = vpack.c.bf16 %v3343, %v3342
    %v3347 = vpack.c.bf16 %v3345, %v3344
    %v3348 = vld [vmem:[%s14] sm:$0xf]
    %v3349 = vld [vmem:[%s14 + $0x4] sm:$0xf]
    %v3350 = vld [vmem:[%s14 + $0x8] sm:$0xf]
    %v3351 = vld [vmem:[%s14 + $0xc] sm:$0xf]
    %v3352 = vld [vmem:[%s14 + $0x10] sm:$0xf]
    %v3353 = vld [vmem:[%s14 + $0x14] sm:$0xf]
    %v3354 = vld [vmem:[%s14 + $0x18] sm:$0xf]
    %v3355 = vld [vmem:[%s14 + $0x1c] sm:$0xf]
    %v3356 = vld [vmem:[%s14 + $0x20] sm:$0xf]
    %v3357 = vld [vmem:[%s14 + $0x24] sm:$0xf]
    %v3358 = vld [vmem:[%s14 + $0x28] sm:$0xf]
    %v3359 = vld [vmem:[%s14 + $0x2c] sm:$0xf]
    %v3360 = vld [vmem:[%s14 + $0x30] sm:$0xf]
    %v3361 = vld [vmem:[%s14 + $0x34] sm:$0xf]
    %v3362 = vld [vmem:[%s14 + $0x38] sm:$0xf]
    %v3363 = vld [vmem:[%s14 + $0x3c] sm:$0xf]
    %v3364 = vld [vmem:[%s15] sm:$0x1]
    %v3366 = vperm.slane %v3364, 0
    %v3384 = vunpack.c.l.b16 %v3348
    %v3385 = vunpack.c.l.b16 %v3349
    %v3386 = vunpack.c.l.b16 %v3350
    %v3387 = vunpack.c.l.b16 %v3351
    %v3388 = vunpack.c.l.b16 %v3352
    %v3389 = vunpack.c.l.b16 %v3353
    %v3390 = vunpack.c.l.b16 %v3354
    %v3391 = vunpack.c.l.b16 %v3355
    %v3392 = vunpack.c.l.b16 %v3356
    %v3393 = vunpack.c.l.b16 %v3357
    %v3394 = vunpack.c.l.b16 %v3358
    %v3395 = vunpack.c.l.b16 %v3359
    %v3396 = vunpack.c.l.b16 %v3360
    %v3397 = vunpack.c.l.b16 %v3361
    %v3398 = vunpack.c.l.b16 %v3362
    %v3399 = vunpack.c.l.b16 %v3363
    %v3400 = vpack.c.b16 %v3385, %v3384
    %v3401 = vpack.c.b16 %v3387, %v3386
    %v3402 = vpack.c.b16 %v3389, %v3388
    %v3403 = vpack.c.b16 %v3391, %v3390
    %v3404 = vpack.c.b16 %v3393, %v3392
    %v3405 = vpack.c.b16 %v3395, %v3394
    %v3406 = vpack.c.b16 %v3397, %v3396
    %v3407 = vpack.c.b16 %v3399, %v3398
    %3416 = vmatpush.bf16.msra.mxu0 %v3407
    %3417 = vmatpush.bf16.msra.mxu0 %v3406
    %3418 = vmatpush.bf16.msra.mxu0 %v3405
    %3419 = vmatpush.bf16.msra.mxu0 %v3404
    %3420 = vmatpush.bf16.msra.mxu0 %v3403
    %3421 = vmatpush.bf16.msra.mxu0 %v3402
    %3422 = vmatpush.bf16.msra.mxu0 %v3401
    %3423 = vmatpush.bf16.msra.mxu0 %v3400
    %3424 = vmatmul.bf16.gmra.mxu0 %v3346
    %v3425 = vpop.f32.mrf.mxu0
    %v3426 = vadd.f32 %v3366, %v3425
    %v3427 = vpop.f32.mrf.mxu0
    %v3428 = vadd.f32 %v3366, %v3427
    %3429 = vmatmul.bf16.gmra.mxu0 %v3347
    %v3430 = vpop.f32.mrf.mxu0
    %v3431 = vadd.f32 %v3366, %v3430
    %v3432 = vpop.f32.mrf.mxu0
    %v3433 = vadd.f32 %v3366, %v3432
    %3434 = vdwg.mxu0
    %3435 = vst [vmem:[%s16] sm:$0xff] %v3426
    %3436 = vst [vmem:[%s16 + $0x8] sm:$0xff] %v3428
    %3437 = vst [vmem:[%s16 + $0x10] sm:$0xff] %v3431
    %3438 = vst [vmem:[%s16 + $0x18] sm:$0xff] %v3433
    // Predicated region
    $region86: #{model_forward.1} parent=1 // pred_check
      _
    $region87: #{model_forward.1} parent=1 // pred_check_branch
      %3440 = sbr.rel (0) target = $region89
    $region88: #{model_forward.1} parent=1 // pred_region
      _
    $region89: #{model_forward.1} parent=1 // pred_fallthru
      _
    // Predicated region
    $region90: #{model_forward.1} parent=1 // pred_check
      _
    $region91: #{model_forward.1} parent=1 // pred_check_branch
      %3442 = sbr.rel (0) target = $region93
    $region92: #{model_forward.1} parent=1 // pred_region
      _
    $region93: #{model_forward.1} parent=1 // pred_fallthru
      _
    %3443 = vsyncpa [#allocation3], 1
    %3444 = vsyncpa [#allocation5], 1
    %3445 = vsyncpa [#allocation8], 1

</llo_original>
